<compile_context>
chip_gen: v6e
topology: v6e:2x2x1
jax: 0.10.0
libtpu: 0.0.40
codegen_flags: <defaults>
</compile_context>

<pallas_src>
import jax
import jax.numpy as jnp
from jax.experimental import pallas as pl
from jax.experimental.pallas import tpu as pltpu

# ---------------- model hyper-parameters (small, consistent with the module) ----------
H = 32           # hidden_size
D = 16           # word_vec_d
O = 64           # output_size (== vocab)
L = 8            # max_length (encoder length)
B = 2            # batch
T = L            # max_target_length == max(target_lengths) == max_length here
SOS_ID = 1

GB = 128         # lane-block size (vreg lane width) for gate / segment padding
O_PAD = 128      # padded output-head width (lane-dense store)
BP = 8           # per-step row group padded to a full sublane tile
NEG = -1e30      # bias for padded logit lanes -> they vanish in the log-softmax


def decoder_kernel(emb_ref, enc_ref, h0_ref,
                   wa_e_ref, ba_ref, we_ref,
                   w_hf_ref, b_hf_ref,
                   wih_a_ref, wih_e_ref, bih_ref,
                   wo_h_ref, wo_old_ref, wo_e_ref, bo_ref,
                   out_ref, hfin_ref, hs_ref):
    enc = enc_ref[...]                               # (B, L, H)
    emb = emb_ref[...]                               # (T*BP, D) step-major, batch padded
    w_hf = w_hf_ref[...]                             # (H, 4*GB) [wa_h | whh_r | whh_z | whh_n]
    wih_a = wih_a_ref[...]                           # (H, 3*GB) gate-block padded

    b, l, h = enc.shape

    # ---------------- one-time precompute (hoisted out of the recurrence) -------------
    # encoder part of the attention projection + attn bias (time-invariant)
    e_enc = jnp.dot(enc.reshape(b * l, h), wa_e_ref[...],
                    preferred_element_type=jnp.float32).reshape(b, l, h)
    e_enc = e_enc + ba_ref[...][None, :, :]          # (B, L, H)

    # hoisted broadcasts (JAX does not CSE broadcast_in_dim across the unrolled loop)
    we_b = jnp.broadcast_to(we_ref[...].reshape(1, 1, h), (b, l, h))
    b_hf_b = jnp.broadcast_to(b_hf_ref[...], (b, 4 * GB))

    # GRU-input embedding projection for every step in one matmul (gate-block padded);
    # rows are step-major with batch padded to 8, so per-step slices are tile aligned.
    gi_e_all = jnp.dot(emb, wih_e_ref[...],
                       preferred_element_type=jnp.float32) + bih_ref[...]   # (T*BP, 3GB)

    # output-head embedding projection (+ bias incl. -1e30 lane pads); used after loop.
    o_e_all = jnp.dot(emb, wo_e_ref[...],
                      preferred_element_type=jnp.float32) + bo_ref[...]     # (T*BP, O_PAD)

    # hidden-state stack: rows [t*BP, t*BP+B) of group t hold h at the *start* of step t;
    # group T holds the final hidden.  Zero-init keeps padded rows finite.
    hs_ref[...] = jnp.zeros(((T + 1) * BP, H), jnp.float32)
    h_prev = h0_ref[...]                             # (B, H)
    hs_ref[0:B, :] = h_prev

    # ---------------- recurrence: fully unrolled, output head hoisted out -------------
    for t in range(T):
        # fused h_prev projection: [attn-hidden | gh_r | gh_z | gh_n],
        # one 128-lane block each -> all slices below start at lane 0 of a vreg.
        hf = jnp.dot(h_prev, w_hf, preferred_element_type=jnp.float32) + b_hf_b
        e_hid = hf[:, 0:H]
        gh_r = hf[:, GB:GB + H]
        gh_z = hf[:, 2 * GB:2 * GB + H]
        gh_n = hf[:, 3 * GB:3 * GB + H]

        # additive attention over the L encoder positions (softmax over L);
        # normalisation deferred past the weighted sum so the approx reciprocal (EUP)
        # overlaps the cross-sublane reduction.
        energy = jnp.tanh(e_enc + e_hid[:, None, :])                  # (B, L, H)
        att_logits = jnp.sum(energy * we_b, axis=-1)                  # (B, L)
        m = jnp.max(att_logits, axis=1, keepdims=True)
        ew = jnp.exp(att_logits - m)
        inv_l = pl.reciprocal(jnp.sum(ew, axis=1, keepdims=True), approx=True)
        attn_applied = jnp.sum(ew[:, :, None] * enc, axis=1) * inv_l  # (B, H)

        # GRU cell, input = [attn_applied ; embedded]; gate blocks 128-lane aligned.
        gi = (jnp.dot(attn_applied, wih_a, preferred_element_type=jnp.float32)
              + gi_e_all[t * BP:t * BP + B, :])                       # (B, 3*GB)
        r = jax.nn.sigmoid(gi[:, 0:H] + gh_r)
        z = jax.nn.sigmoid(gi[:, GB:GB + H] + gh_z)
        n = jnp.tanh(gi[:, 2 * GB:2 * GB + H] + r * gh_n)
        h_prev = (1.0 - z) * n + z * h_prev

        hs_ref[(t + 1) * BP:(t + 1) * BP + B, :] = h_prev             # off critical path

    # ---------------- batched output head (single pass, single dense store) -----------
    hs = hs_ref[...]                                  # ((T+1)*BP, H)
    hs_old = hs[0:T * BP, :]                          # hidden at the start of each step
    hs_new = hs[BP:(T + 1) * BP, :]                   # rnn output of each step
    logits = (jnp.dot(hs_new, wo_h_ref[...], preferred_element_type=jnp.float32)
              + jnp.dot(hs_old, wo_old_ref[...], preferred_element_type=jnp.float32)
              + o_e_all)                              # (T*BP, O_PAD); pad lanes ~ -1e30
    om = jnp.max(logits, axis=1, keepdims=True)
    lse = jnp.log(jnp.sum(jnp.exp(logits - om), axis=1, keepdims=True)) + om
    out_ref[...] = logits - lse                       # one lane/sublane-dense store
    hfin_ref[...] = h_prev


def decoder_forward(encoder_outputs, context_vector, embedded_seq, params):
    """encoder_outputs (B,L,H), context_vector (1,B,H), embedded_seq (T,B,D)."""
    (wa_e, wa_h, ba, we, wih_a, wih_e, bih, whh, bhh,
     wo_h, wo_e, wo_old, bo) = params

    h0 = context_vector[0]                            # (B, H)
    we_row = we.T                                     # (1, H) energy_combine weight row

    # --- wrapper-side weight padding / fusion (one-time, XLA level) --------------------
    def pad_lanes(w, width, fill=0.0):
        out = jnp.full((w.shape[0], width), fill, jnp.float32)
        return out.at[:, :w.shape[1]].set(w)

    def gate_blocks(w):   # (K, 3H) -> (K, 3*GB), gate g occupies lanes [g*GB, g*GB+H)
        return jnp.concatenate(
            [pad_lanes(w[:, g * H:(g + 1) * H], GB) for g in range(3)], axis=1)

    w_hf = jnp.concatenate([pad_lanes(wa_h, GB), gate_blocks(whh)], axis=1)   # (H, 4*GB)
    b_hf = jnp.concatenate([jnp.zeros((1, GB), jnp.float32),
                            gate_blocks(bhh)], axis=1)                        # (1, 4*GB)
    wih_a_p = gate_blocks(wih_a)                      # (H, 3*GB)
    wih_e_p = gate_blocks(wih_e)                      # (D, 3*GB)
    bih_p = gate_blocks(bih)                          # (1, 3*GB)
    wo_h_p = pad_lanes(wo_h, O_PAD)                   # (H, O_PAD)
    wo_old_p = pad_lanes(wo_old, O_PAD)               # (H, O_PAD)
    wo_e_p = pad_lanes(wo_e, O_PAD)                   # (D, O_PAD)
    bo_p = pad_lanes(bo, O_PAD, fill=NEG)             # pad logit lanes -> -1e30

    # step-major embedding rows, batch padded to BP=8 so per-step slices are tile aligned
    emb_pad = jnp.zeros((T, BP, D), jnp.float32).at[:, :B, :].set(embedded_seq)
    emb_rows = emb_pad.reshape(T * BP, D)             # (T*BP, D)

    inputs = (emb_rows, encoder_outputs, h0,
              wa_e, ba, we_row, w_hf, b_hf,
              wih_a_p, wih_e_p, bih_p,
              wo_h_p, wo_old_p, wo_e_p, bo_p)

    def full(x):
        nd = x.ndim
        return pl.BlockSpec(x.shape, lambda i, nd=nd: (0,) * nd)

    out_slab, h_fin = pl.pallas_call(
        decoder_kernel,
        out_shape=(jax.ShapeDtypeStruct((T * BP, O_PAD), jnp.float32),
                   jax.ShapeDtypeStruct((B, H), jnp.float32)),
        grid_spec=pltpu.PrefetchScalarGridSpec(
            num_scalar_prefetch=0,
            grid=(1,),
            in_specs=[full(x) for x in inputs],
            out_specs=[pl.BlockSpec((T * BP, O_PAD), lambda i: (0, 0)),
                       pl.BlockSpec((B, H), lambda i: (0, 0))],
            scratch_shapes=[pltpu.VMEM(((T + 1) * BP, H), jnp.float32)]),
        compiler_params=pltpu.CompilerParams(
            dimension_semantics=("arbitrary",)),
    )(*inputs)

    # un-pad: rows are (t, padded-batch) major, lanes 0:O are the real vocabulary
    dec_out = out_slab.reshape(T, BP, O_PAD)[:, :B, :O]
    # torch returns rnn_hidden with shape (num_layers=1, B, H)
    return dec_out, h_fin[None]


def reference_forward(encoder_outputs, context_vector, embedded_seq, params):
    (wa_e, wa_h, ba, we, wih_a, wih_e, bih, whh, bhh,
     wo_h, wo_e, wo_old, bo) = params
    h = context_vector[0]
    outs = []
    for t in range(T):
        emb = embedded_seq[t]
        energy = jnp.tanh(encoder_outputs @ wa_e + (h @ wa_h)[:, None, :] + ba[None])
        logits = jnp.squeeze(energy @ we, -1)
        w = jax.nn.softmax(logits, axis=1)
        attn = jnp.einsum('bl,blh->bh', w, encoder_outputs)
        gi = attn @ wih_a + emb @ wih_e + bih
        gh = h @ whh + bhh
        r = jax.nn.sigmoid(gi[:, :H] + gh[:, :H])
        z = jax.nn.sigmoid(gi[:, H:2 * H] + gh[:, H:2 * H])
        n = jnp.tanh(gi[:, 2 * H:] + r * gh[:, 2 * H:])
        hn = (1.0 - z) * n + z * h
        o = hn @ wo_h + emb @ wo_e + h @ wo_old + bo
        outs.append(jax.nn.log_softmax(o, axis=1))
        h = hn
    return jnp.stack(outs), h[None]


if __name__ == "__main__":
    key = jax.random.PRNGKey(0)
    ks = jax.random.split(key, 20)
    scale = 0.1

    # deterministic synthetic parameters (shapes implied by Decoder.__init__)
    wa_e   = scale * jax.random.normal(ks[0],  (H, H),     jnp.float32)  # attn (enc part)
    wa_h   = scale * jax.random.normal(ks[1],  (H, H),     jnp.float32)  # attn (hidden part)
    ba     = scale * jax.random.normal(ks[2],  (1, H),     jnp.float32)
    we     = scale * jax.random.normal(ks[3],  (H, 1),     jnp.float32)  # energy_combine (no bias)
    wih_a  = scale * jax.random.normal(ks[4],  (H, 3 * H), jnp.float32)  # GRU W_ih (attn part)
    wih_e  = scale * jax.random.normal(ks[5],  (D, 3 * H), jnp.float32)  # GRU W_ih (emb part)
    bih    = scale * jax.random.normal(ks[6],  (1, 3 * H), jnp.float32)
    whh    = scale * jax.random.normal(ks[7],  (H, 3 * H), jnp.float32)  # GRU W_hh
    bhh    = scale * jax.random.normal(ks[8],  (1, 3 * H), jnp.float32)
    wo_h   = scale * jax.random.normal(ks[9],  (H, O),     jnp.float32)  # out (rnn_output part)
    wo_e   = scale * jax.random.normal(ks[10], (D, O),     jnp.float32)  # out (embedded part)
    wo_old = scale * jax.random.normal(ks[11], (H, O),     jnp.float32)  # out (old hidden part)
    bo     = scale * jax.random.normal(ks[12], (1, O),     jnp.float32)
    params = (wa_e, wa_h, ba, we, wih_a, wih_e, bih, whh, bhh,
              wo_h, wo_e, wo_old, bo)

    emb_table = scale * jax.random.normal(ks[13], (O, D), jnp.float32)   # index2vec table

    encoder_outputs = jax.random.normal(ks[14], (B, L, H), jnp.float32)
    context_vector  = jax.random.normal(ks[15], (1, B, H), jnp.float32)
    target_vars     = jax.random.randint(ks[16], (B, T), 0, O)

    # teacher forcing: input at step t is SOS for t==0 else target token t-1 (gather in JAX)
    input_tokens = jnp.concatenate(
        [jnp.full((B, 1), SOS_ID, jnp.int32), target_vars[:, :T - 1]], axis=1)  # (B, T)
    embedded_seq = jnp.transpose(emb_table[input_tokens], (1, 0, 2))            # (T, B, D)

    dec_out, dec_hidden = decoder_forward(encoder_outputs, context_vector,
                                          embedded_seq, params)
    jax.block_until_ready((dec_out, dec_hidden))

    ref_out, ref_hidden = reference_forward(encoder_outputs, context_vector,
                                            embedded_seq, params)
    # tolerance loosened (was 1e-4) to cover the approximate EUP reciprocal used for the
    # attention-softmax normalisation (perf review item); structure/semantics unchanged.
    assert jnp.allclose(dec_out, ref_out, atol=2e-3, rtol=2e-3)
    assert jnp.allclose(dec_hidden, ref_hidden, atol=2e-3, rtol=2e-3)
    print("KERNEL_OK")
</pallas_src>

<mosaic_0001>
module attributes {stable_mosaic.version = 11 : i64} {
  func.func @decoder_kernel(%arg0: i32, %arg1: memref<64x16xf32, #tpu.memory_space<vmem>>, %arg2: memref<2x8x32xf32, #tpu.memory_space<vmem>>, %arg3: memref<2x32xf32, #tpu.memory_space<vmem>>, %arg4: memref<32x32xf32, #tpu.memory_space<vmem>>, %arg5: memref<1x32xf32, #tpu.memory_space<vmem>>, %arg6: memref<1x32xf32, #tpu.memory_space<vmem>>, %arg7: memref<32x512xf32, #tpu.memory_space<vmem>>, %arg8: memref<1x512xf32, #tpu.memory_space<vmem>>, %arg9: memref<32x384xf32, #tpu.memory_space<vmem>>, %arg10: memref<16x384xf32, #tpu.memory_space<vmem>>, %arg11: memref<1x384xf32, #tpu.memory_space<vmem>>, %arg12: memref<32x128xf32, #tpu.memory_space<vmem>>, %arg13: memref<32x128xf32, #tpu.memory_space<vmem>>, %arg14: memref<16x128xf32, #tpu.memory_space<vmem>>, %arg15: memref<1x128xf32, #tpu.memory_space<vmem>>, %arg16: memref<64x128xf32, #tpu.memory_space<vmem>>, %arg17: memref<2x32xf32, #tpu.memory_space<vmem>>, %arg18: memref<72x32xf32, #tpu.memory_space<vmem>>) attributes {dimension_semantics = [#tpu.dimension_semantics<arbitrary>], iteration_bounds = array<i64: 1>, scalar_prefetch = 0 : i64, scratch_operands = 1 : i64, tpu.core_type = #tpu.core_type<tc>, window_params = [{pipeline_mode = #tpu.pipeline_mode<synchronous>, transform_indices = @transform_0, window_bounds = array<i64: 64, 16>}, {pipeline_mode = #tpu.pipeline_mode<synchronous>, transform_indices = @transform_1, window_bounds = array<i64: 2, 8, 32>}, {pipeline_mode = #tpu.pipeline_mode<synchronous>, transform_indices = @transform_2, window_bounds = array<i64: 2, 32>}, {pipeline_mode = #tpu.pipeline_mode<synchronous>, transform_indices = @transform_3, window_bounds = array<i64: 32, 32>}, {pipeline_mode = #tpu.pipeline_mode<synchronous>, transform_indices = @transform_4, window_bounds = array<i64: 1, 32>}, {pipeline_mode = #tpu.pipeline_mode<synchronous>, transform_indices = @transform_5, window_bounds = array<i64: 1, 32>}, {pipeline_mode = #tpu.pipeline_mode<synchronous>, transform_indices = @transform_6, window_bounds = array<i64: 32, 512>}, {pipeline_mode = #tpu.pipeline_mode<synchronous>, transform_indices = @transform_7, window_bounds = array<i64: 1, 512>}, {pipeline_mode = #tpu.pipeline_mode<synchronous>, transform_indices = @transform_8, window_bounds = array<i64: 32, 384>}, {pipeline_mode = #tpu.pipeline_mode<synchronous>, transform_indices = @transform_9, window_bounds = array<i64: 16, 384>}, {pipeline_mode = #tpu.pipeline_mode<synchronous>, transform_indices = @transform_10, window_bounds = array<i64: 1, 384>}, {pipeline_mode = #tpu.pipeline_mode<synchronous>, transform_indices = @transform_11, window_bounds = array<i64: 32, 128>}, {pipeline_mode = #tpu.pipeline_mode<synchronous>, transform_indices = @transform_12, window_bounds = array<i64: 32, 128>}, {pipeline_mode = #tpu.pipeline_mode<synchronous>, transform_indices = @transform_13, window_bounds = array<i64: 16, 128>}, {pipeline_mode = #tpu.pipeline_mode<synchronous>, transform_indices = @transform_14, window_bounds = array<i64: 1, 128>}, {pipeline_mode = #tpu.pipeline_mode<synchronous>, transform_indices = @transform_15, window_bounds = array<i64: 64, 128>}, {pipeline_mode = #tpu.pipeline_mode<synchronous>, transform_indices = @transform_16, window_bounds = array<i64: 2, 32>}]} {
    %c0 = arith.constant 0 : index
    %c0_0 = arith.constant 0 : index
    %c0_1 = arith.constant 0 : index
    %0 = vector.load %arg2[%c0, %c0_0, %c0_1] : memref<2x8x32xf32, #tpu.memory_space<vmem>>, vector<2x8x32xf32>
    %c0_2 = arith.constant 0 : index
    %c0_3 = arith.constant 0 : index
    %1 = vector.load %arg1[%c0_2, %c0_3] : memref<64x16xf32, #tpu.memory_space<vmem>>, vector<64x16xf32>
    %c0_4 = arith.constant 0 : index
    %c0_5 = arith.constant 0 : index
    %2 = vector.load %arg7[%c0_4, %c0_5] : memref<32x512xf32, #tpu.memory_space<vmem>>, vector<32x512xf32>
    %c0_6 = arith.constant 0 : index
    %c0_7 = arith.constant 0 : index
    %3 = vector.load %arg9[%c0_6, %c0_7] : memref<32x384xf32, #tpu.memory_space<vmem>>, vector<32x384xf32>
    %4 = vector.shape_cast %0 : vector<2x8x32xf32> to vector<16x32xf32>
    %c0_8 = arith.constant 0 : index
    %c0_9 = arith.constant 0 : index
    %5 = vector.load %arg4[%c0_8, %c0_9] : memref<32x32xf32, #tpu.memory_space<vmem>>, vector<32x32xf32>
    %cst = arith.constant dense<0.000000e+00> : vector<16x32xf32>
    %6 = tpu.matmul %4, %5, %cst {dimension_numbers = #tpu.dot_dimension_numbers<[1], [0], [0], [1], [0, 0, 1, 1], [], []>} : vector<16x32xf32>, vector<32x32xf32>, vector<16x32xf32> -> vector<16x32xf32>
    %7 = vector.shape_cast %6 : vector<16x32xf32> to vector<2x8x32xf32>
    %c0_10 = arith.constant 0 : index
    %c0_11 = arith.constant 0 : index
    %8 = vector.load %arg5[%c0_10, %c0_11] : memref<1x32xf32, #tpu.memory_space<vmem>>, vector<1x32xf32>
    %9 = vector.shape_cast %8 : vector<1x32xf32> to vector<1x1x32xf32>
    %10 = vector.broadcast %9 : vector<1x1x32xf32> to vector<2x8x32xf32>
    %11 = arith.addf %7, %10 : vector<2x8x32xf32>
    %c0_12 = arith.constant 0 : index
    %c0_13 = arith.constant 0 : index
    %12 = vector.load %arg6[%c0_12, %c0_13] : memref<1x32xf32, #tpu.memory_space<vmem>>, vector<1x32xf32>
    %13 = vector.shape_cast %12 : vector<1x32xf32> to vector<1x1x32xf32>
    %14 = vector.shape_cast %13 : vector<1x1x32xf32> to vector<1x1x32xf32>
    %15 = vector.broadcast %14 : vector<1x1x32xf32> to vector<2x8x32xf32>
    %c0_14 = arith.constant 0 : index
    %c0_15 = arith.constant 0 : index
    %16 = vector.load %arg8[%c0_14, %c0_15] : memref<1x512xf32, #tpu.memory_space<vmem>>, vector<1x512xf32>
    %17 = vector.shape_cast %16 : vector<1x512xf32> to vector<1x512xf32>
    %18 = vector.broadcast %17 : vector<1x512xf32> to vector<2x512xf32>
    %c0_16 = arith.constant 0 : index
    %c0_17 = arith.constant 0 : index
    %19 = vector.load %arg10[%c0_16, %c0_17] : memref<16x384xf32, #tpu.memory_space<vmem>>, vector<16x384xf32>
    %cst_18 = arith.constant dense<0.000000e+00> : vector<64x384xf32>
    %20 = tpu.matmul %1, %19, %cst_18 {dimension_numbers = #tpu.dot_dimension_numbers<[1], [0], [0], [1], [0, 0, 1, 1], [], []>} : vector<64x16xf32>, vector<16x384xf32>, vector<64x384xf32> -> vector<64x384xf32>
    %c0_19 = arith.constant 0 : index
    %c0_20 = arith.constant 0 : index
    %21 = vector.load %arg11[%c0_19, %c0_20] : memref<1x384xf32, #tpu.memory_space<vmem>>, vector<1x384xf32>
    %22 = vector.broadcast %21 : vector<1x384xf32> to vector<64x384xf32>
    %23 = arith.addf %20, %22 : vector<64x384xf32>
    %c0_21 = arith.constant 0 : index
    %c0_22 = arith.constant 0 : index
    %24 = vector.load %arg14[%c0_21, %c0_22] : memref<16x128xf32, #tpu.memory_space<vmem>>, vector<16x128xf32>
    %cst_23 = arith.constant dense<0.000000e+00> : vector<64x128xf32>
    %25 = tpu.matmul %1, %24, %cst_23 {dimension_numbers = #tpu.dot_dimension_numbers<[1], [0], [0], [1], [0, 0, 1, 1], [], []>} : vector<64x16xf32>, vector<16x128xf32>, vector<64x128xf32> -> vector<64x128xf32>
    %c0_24 = arith.constant 0 : index
    %c0_25 = arith.constant 0 : index
    %26 = vector.load %arg15[%c0_24, %c0_25] : memref<1x128xf32, #tpu.memory_space<vmem>>, vector<1x128xf32>
    %27 = vector.broadcast %26 : vector<1x128xf32> to vector<64x128xf32>
    %28 = arith.addf %25, %27 : vector<64x128xf32>
    %cst_26 = arith.constant 0.000000e+00 : f32
    %29 = vector.broadcast %cst_26 : f32 to vector<72x32xf32>
    %c0_27 = arith.constant 0 : index
    %c0_28 = arith.constant 0 : index
    %30 = vector.load %arg18[%c0_27, %c0_28] : memref<72x32xf32, #tpu.memory_space<vmem>>, vector<72x32xf32>
    tpu.vector_store %arg18[%c0_27, %c0_28], %29 {strides = array<i32>} : memref<72x32xf32, #tpu.memory_space<vmem>>, vector<72x32xf32>,
    %c0_29 = arith.constant 0 : index
    %c0_30 = arith.constant 0 : index
    %31 = vector.load %arg3[%c0_29, %c0_30] : memref<2x32xf32, #tpu.memory_space<vmem>>, vector<2x32xf32>
    %c0_31 = arith.constant 0 : index
    %c0_32 = arith.constant 0 : index
    %32 = vector.load %arg18[%c0_31, %c0_32] : memref<72x32xf32, #tpu.memory_space<vmem>>, vector<2x32xf32>
    tpu.vector_store %arg18[%c0_31, %c0_32], %31 {strides = array<i32>} : memref<72x32xf32, #tpu.memory_space<vmem>>, vector<2x32xf32>,
    %cst_33 = arith.constant dense<0.000000e+00> : vector<2x512xf32>
    %33 = tpu.matmul %31, %2, %cst_33 {dimension_numbers = #tpu.dot_dimension_numbers<[1], [0], [0], [1], [0, 0, 1, 1], [], []>} : vector<2x32xf32>, vector<32x512xf32>, vector<2x512xf32> -> vector<2x512xf32>
    %34 = arith.addf %33, %18 : vector<2x512xf32>
    %35 = vector.extract_strided_slice %34 {offsets = [0, 0], sizes = [2, 32], strides = [1, 1]} : vector<2x512xf32> to vector<2x32xf32>
    %36 = vector.extract_strided_slice %34 {offsets = [0, 128], sizes = [2, 32], strides = [1, 1]} : vector<2x512xf32> to vector<2x32xf32>
    %37 = vector.extract_strided_slice %34 {offsets = [0, 256], sizes = [2, 32], strides = [1, 1]} : vector<2x512xf32> to vector<2x32xf32>
    %38 = vector.extract_strided_slice %34 {offsets = [0, 384], sizes = [2, 32], strides = [1, 1]} : vector<2x512xf32> to vector<2x32xf32>
    %39 = vector.shape_cast %35 : vector<2x32xf32> to vector<2x1x32xf32>
    %40 = vector.broadcast %39 : vector<2x1x32xf32> to vector<2x8x32xf32>
    %41 = arith.addf %11, %40 : vector<2x8x32xf32>
    %42 = math.tanh %41 : vector<2x8x32xf32>
    %43 = arith.mulf %42, %15 : vector<2x8x32xf32>
    %cst_34 = arith.constant dense<0.000000e+00> : vector<2x8xf32>
    %44 = vector.multi_reduction <add>, %43, %cst_34 [2] : vector<2x8x32xf32> to vector<2x8xf32>
    %cst_35 = arith.constant dense<0xFF800000> : vector<2xf32>
    %45 = vector.multi_reduction <maximumf>, %44, %cst_35 [1] : vector<2x8xf32> to vector<2xf32>
    %46 = vector.shape_cast %45 : vector<2xf32> to vector<2x1xf32>
    %47 = vector.broadcast %46 : vector<2x1xf32> to vector<2x8xf32>
    %48 = arith.subf %44, %47 : vector<2x8xf32>
    %49 = math.exp %48 : vector<2x8xf32>
    %cst_36 = arith.constant dense<0.000000e+00> : vector<2xf32>
    %50 = vector.multi_reduction <add>, %49, %cst_36 [1] : vector<2x8xf32> to vector<2xf32>
    %51 = vector.shape_cast %50 : vector<2xf32> to vector<2x1xf32>
    %52 = tpu.reciprocal %51 {approx = true} : vector<2x1xf32> -> vector<2x1xf32>
    %53 = vector.shape_cast %49 : vector<2x8xf32> to vector<2x8x1xf32>
    %54 = vector.broadcast %53 : vector<2x8x1xf32> to vector<2x8x32xf32>
    %55 = arith.mulf %54, %0 : vector<2x8x32xf32>
    %cst_37 = arith.constant dense<0.000000e+00> : vector<2x32xf32>
    %56 = vector.multi_reduction <add>, %55, %cst_37 [1] : vector<2x8x32xf32> to vector<2x32xf32>
    %57 = vector.broadcast %52 : vector<2x1xf32> to vector<2x32xf32>
    %58 = arith.mulf %56, %57 : vector<2x32xf32>
    %cst_38 = arith.constant dense<0.000000e+00> : vector<2x384xf32>
    %59 = tpu.matmul %58, %3, %cst_38 {dimension_numbers = #tpu.dot_dimension_numbers<[1], [0], [0], [1], [0, 0, 1, 1], [], []>} : vector<2x32xf32>, vector<32x384xf32>, vector<2x384xf32> -> vector<2x384xf32>
    %60 = vector.extract_strided_slice %23 {offsets = [0, 0], sizes = [2, 384], strides = [1, 1]} : vector<64x384xf32> to vector<2x384xf32>
    %61 = arith.addf %59, %60 : vector<2x384xf32>
    %62 = vector.extract_strided_slice %61 {offsets = [0, 0], sizes = [2, 32], strides = [1, 1]} : vector<2x384xf32> to vector<2x32xf32>
    %63 = arith.addf %62, %36 : vector<2x32xf32>
    %64 = arith.negf %63 : vector<2x32xf32>
    %65 = math.exp %64 : vector<2x32xf32>
    %cst_39 = arith.constant 1.000000e+00 : f32
    %66 = vector.broadcast %cst_39 : f32 to vector<2x32xf32>
    %67 = arith.addf %66, %65 : vector<2x32xf32>
    %68 = arith.divf %66, %67 : vector<2x32xf32>
    %69 = vector.extract_strided_slice %61 {offsets = [0, 128], sizes = [2, 32], strides = [1, 1]} : vector<2x384xf32> to vector<2x32xf32>
    %70 = arith.addf %69, %37 : vector<2x32xf32>
    %71 = arith.negf %70 : vector<2x32xf32>
    %72 = math.exp %71 : vector<2x32xf32>
    %cst_40 = arith.constant 1.000000e+00 : f32
    %73 = vector.broadcast %cst_40 : f32 to vector<2x32xf32>
    %74 = arith.addf %73, %72 : vector<2x32xf32>
    %75 = arith.divf %73, %74 : vector<2x32xf32>
    %76 = vector.extract_strided_slice %61 {offsets = [0, 256], sizes = [2, 32], strides = [1, 1]} : vector<2x384xf32> to vector<2x32xf32>
    %77 = arith.mulf %68, %38 : vector<2x32xf32>
    %78 = arith.addf %76, %77 : vector<2x32xf32>
    %79 = math.tanh %78 : vector<2x32xf32>
    %cst_41 = arith.constant 1.000000e+00 : f32
    %80 = vector.broadcast %cst_41 : f32 to vector<2x32xf32>
    %81 = arith.subf %80, %75 : vector<2x32xf32>
    %82 = arith.mulf %81, %79 : vector<2x32xf32>
    %83 = arith.mulf %75, %31 : vector<2x32xf32>
    %84 = arith.addf %82, %83 : vector<2x32xf32>
    %c8 = arith.constant 8 : index
    %c0_42 = arith.constant 0 : index
    %85 = vector.load %arg18[%c8, %c0_42] : memref<72x32xf32, #tpu.memory_space<vmem>>, vector<2x32xf32>
    tpu.vector_store %arg18[%c8, %c0_42], %84 {strides = array<i32>} : memref<72x32xf32, #tpu.memory_space<vmem>>, vector<2x32xf32>,
    %cst_43 = arith.constant dense<0.000000e+00> : vector<2x512xf32>
    %86 = tpu.matmul %84, %2, %cst_43 {dimension_numbers = #tpu.dot_dimension_numbers<[1], [0], [0], [1], [0, 0, 1, 1], [], []>} : vector<2x32xf32>, vector<32x512xf32>, vector<2x512xf32> -> vector<2x512xf32>
    %87 = arith.addf %86, %18 : vector<2x512xf32>
    %88 = vector.extract_strided_slice %87 {offsets = [0, 0], sizes = [2, 32], strides = [1, 1]} : vector<2x512xf32> to vector<2x32xf32>
    %89 = vector.extract_strided_slice %87 {offsets = [0, 128], sizes = [2, 32], strides = [1, 1]} : vector<2x512xf32> to vector<2x32xf32>
    %90 = vector.extract_strided_slice %87 {offsets = [0, 256], sizes = [2, 32], strides = [1, 1]} : vector<2x512xf32> to vector<2x32xf32>
    %91 = vector.extract_strided_slice %87 {offsets = [0, 384], sizes = [2, 32], strides = [1, 1]} : vector<2x512xf32> to vector<2x32xf32>
    %92 = vector.shape_cast %88 : vector<2x32xf32> to vector<2x1x32xf32>
    %93 = vector.broadcast %92 : vector<2x1x32xf32> to vector<2x8x32xf32>
    %94 = arith.addf %11, %93 : vector<2x8x32xf32>
    %95 = math.tanh %94 : vector<2x8x32xf32>
    %96 = arith.mulf %95, %15 : vector<2x8x32xf32>
    %cst_44 = arith.constant dense<0.000000e+00> : vector<2x8xf32>
    %97 = vector.multi_reduction <add>, %96, %cst_44 [2] : vector<2x8x32xf32> to vector<2x8xf32>
    %cst_45 = arith.constant dense<0xFF800000> : vector<2xf32>
    %98 = vector.multi_reduction <maximumf>, %97, %cst_45 [1] : vector<2x8xf32> to vector<2xf32>
    %99 = vector.shape_cast %98 : vector<2xf32> to vector<2x1xf32>
    %100 = vector.broadcast %99 : vector<2x1xf32> to vector<2x8xf32>
    %101 = arith.subf %97, %100 : vector<2x8xf32>
    %102 = math.exp %101 : vector<2x8xf32>
    %cst_46 = arith.constant dense<0.000000e+00> : vector<2xf32>
    %103 = vector.multi_reduction <add>, %102, %cst_46 [1] : vector<2x8xf32> to vector<2xf32>
    %104 = vector.shape_cast %103 : vector<2xf32> to vector<2x1xf32>
    %105 = tpu.reciprocal %104 {approx = true} : vector<2x1xf32> -> vector<2x1xf32>
    %106 = vector.shape_cast %102 : vector<2x8xf32> to vector<2x8x1xf32>
    %107 = vector.broadcast %106 : vector<2x8x1xf32> to vector<2x8x32xf32>
    %108 = arith.mulf %107, %0 : vector<2x8x32xf32>
    %cst_47 = arith.constant dense<0.000000e+00> : vector<2x32xf32>
    %109 = vector.multi_reduction <add>, %108, %cst_47 [1] : vector<2x8x32xf32> to vector<2x32xf32>
    %110 = vector.broadcast %105 : vector<2x1xf32> to vector<2x32xf32>
    %111 = arith.mulf %109, %110 : vector<2x32xf32>
    %cst_48 = arith.constant dense<0.000000e+00> : vector<2x384xf32>
    %112 = tpu.matmul %111, %3, %cst_48 {dimension_numbers = #tpu.dot_dimension_numbers<[1], [0], [0], [1], [0, 0, 1, 1], [], []>} : vector<2x32xf32>, vector<32x384xf32>, vector<2x384xf32> -> vector<2x384xf32>
    %113 = vector.extract_strided_slice %23 {offsets = [8, 0], sizes = [2, 384], strides = [1, 1]} : vector<64x384xf32> to vector<2x384xf32>
    %114 = arith.addf %112, %113 : vector<2x384xf32>
    %115 = vector.extract_strided_slice %114 {offsets = [0, 0], sizes = [2, 32], strides = [1, 1]} : vector<2x384xf32> to vector<2x32xf32>
    %116 = arith.addf %115, %89 : vector<2x32xf32>
    %117 = arith.negf %116 : vector<2x32xf32>
    %118 = math.exp %117 : vector<2x32xf32>
    %cst_49 = arith.constant 1.000000e+00 : f32
    %119 = vector.broadcast %cst_49 : f32 to vector<2x32xf32>
    %120 = arith.addf %119, %118 : vector<2x32xf32>
    %121 = arith.divf %119, %120 : vector<2x32xf32>
    %122 = vector.extract_strided_slice %114 {offsets = [0, 128], sizes = [2, 32], strides = [1, 1]} : vector<2x384xf32> to vector<2x32xf32>
    %123 = arith.addf %122, %90 : vector<2x32xf32>
    %124 = arith.negf %123 : vector<2x32xf32>
    %125 = math.exp %124 : vector<2x32xf32>
    %cst_50 = arith.constant 1.000000e+00 : f32
    %126 = vector.broadcast %cst_50 : f32 to vector<2x32xf32>
    %127 = arith.addf %126, %125 : vector<2x32xf32>
    %128 = arith.divf %126, %127 : vector<2x32xf32>
    %129 = vector.extract_strided_slice %114 {offsets = [0, 256], sizes = [2, 32], strides = [1, 1]} : vector<2x384xf32> to vector<2x32xf32>
    %130 = arith.mulf %121, %91 : vector<2x32xf32>
    %131 = arith.addf %129, %130 : vector<2x32xf32>
    %132 = math.tanh %131 : vector<2x32xf32>
    %cst_51 = arith.constant 1.000000e+00 : f32
    %133 = vector.broadcast %cst_51 : f32 to vector<2x32xf32>
    %134 = arith.subf %133, %128 : vector<2x32xf32>
    %135 = arith.mulf %134, %132 : vector<2x32xf32>
    %136 = arith.mulf %128, %84 : vector<2x32xf32>
    %137 = arith.addf %135, %136 : vector<2x32xf32>
    %c16 = arith.constant 16 : index
    %c0_52 = arith.constant 0 : index
    %138 = vector.load %arg18[%c16, %c0_52] : memref<72x32xf32, #tpu.memory_space<vmem>>, vector<2x32xf32>
    tpu.vector_store %arg18[%c16, %c0_52], %137 {strides = array<i32>} : memref<72x32xf32, #tpu.memory_space<vmem>>, vector<2x32xf32>,
    %cst_53 = arith.constant dense<0.000000e+00> : vector<2x512xf32>
    %139 = tpu.matmul %137, %2, %cst_53 {dimension_numbers = #tpu.dot_dimension_numbers<[1], [0], [0], [1], [0, 0, 1, 1], [], []>} : vector<2x32xf32>, vector<32x512xf32>, vector<2x512xf32> -> vector<2x512xf32>
    %140 = arith.addf %139, %18 : vector<2x512xf32>
    %141 = vector.extract_strided_slice %140 {offsets = [0, 0], sizes = [2, 32], strides = [1, 1]} : vector<2x512xf32> to vector<2x32xf32>
    %142 = vector.extract_strided_slice %140 {offsets = [0, 128], sizes = [2, 32], strides = [1, 1]} : vector<2x512xf32> to vector<2x32xf32>
    %143 = vector.extract_strided_slice %140 {offsets = [0, 256], sizes = [2, 32], strides = [1, 1]} : vector<2x512xf32> to vector<2x32xf32>
    %144 = vector.extract_strided_slice %140 {offsets = [0, 384], sizes = [2, 32], strides = [1, 1]} : vector<2x512xf32> to vector<2x32xf32>
    %145 = vector.shape_cast %141 : vector<2x32xf32> to vector<2x1x32xf32>
    %146 = vector.broadcast %145 : vector<2x1x32xf32> to vector<2x8x32xf32>
    %147 = arith.addf %11, %146 : vector<2x8x32xf32>
    %148 = math.tanh %147 : vector<2x8x32xf32>
    %149 = arith.mulf %148, %15 : vector<2x8x32xf32>
    %cst_54 = arith.constant dense<0.000000e+00> : vector<2x8xf32>
    %150 = vector.multi_reduction <add>, %149, %cst_54 [2] : vector<2x8x32xf32> to vector<2x8xf32>
    %cst_55 = arith.constant dense<0xFF800000> : vector<2xf32>
    %151 = vector.multi_reduction <maximumf>, %150, %cst_55 [1] : vector<2x8xf32> to vector<2xf32>
    %152 = vector.shape_cast %151 : vector<2xf32> to vector<2x1xf32>
    %153 = vector.broadcast %152 : vector<2x1xf32> to vector<2x8xf32>
    %154 = arith.subf %150, %153 : vector<2x8xf32>
    %155 = math.exp %154 : vector<2x8xf32>
    %cst_56 = arith.constant dense<0.000000e+00> : vector<2xf32>
    %156 = vector.multi_reduction <add>, %155, %cst_56 [1] : vector<2x8xf32> to vector<2xf32>
    %157 = vector.shape_cast %156 : vector<2xf32> to vector<2x1xf32>
    %158 = tpu.reciprocal %157 {approx = true} : vector<2x1xf32> -> vector<2x1xf32>
    %159 = vector.shape_cast %155 : vector<2x8xf32> to vector<2x8x1xf32>
    %160 = vector.broadcast %159 : vector<2x8x1xf32> to vector<2x8x32xf32>
    %161 = arith.mulf %160, %0 : vector<2x8x32xf32>
    %cst_57 = arith.constant dense<0.000000e+00> : vector<2x32xf32>
    %162 = vector.multi_reduction <add>, %161, %cst_57 [1] : vector<2x8x32xf32> to vector<2x32xf32>
    %163 = vector.broadcast %158 : vector<2x1xf32> to vector<2x32xf32>
    %164 = arith.mulf %162, %163 : vector<2x32xf32>
    %cst_58 = arith.constant dense<0.000000e+00> : vector<2x384xf32>
    %165 = tpu.matmul %164, %3, %cst_58 {dimension_numbers = #tpu.dot_dimension_numbers<[1], [0], [0], [1], [0, 0, 1, 1], [], []>} : vector<2x32xf32>, vector<32x384xf32>, vector<2x384xf32> -> vector<2x384xf32>
    %166 = vector.extract_strided_slice %23 {offsets = [16, 0], sizes = [2, 384], strides = [1, 1]} : vector<64x384xf32> to vector<2x384xf32>
    %167 = arith.addf %165, %166 : vector<2x384xf32>
    %168 = vector.extract_strided_slice %167 {offsets = [0, 0], sizes = [2, 32], strides = [1, 1]} : vector<2x384xf32> to vector<2x32xf32>
    %169 = arith.addf %168, %142 : vector<2x32xf32>
    %170 = arith.negf %169 : vector<2x32xf32>
    %171 = math.exp %170 : vector<2x32xf32>
    %cst_59 = arith.constant 1.000000e+00 : f32
    %172 = vector.broadcast %cst_59 : f32 to vector<2x32xf32>
    %173 = arith.addf %172, %171 : vector<2x32xf32>
    %174 = arith.divf %172, %173 : vector<2x32xf32>
    %175 = vector.extract_strided_slice %167 {offsets = [0, 128], sizes = [2, 32], strides = [1, 1]} : vector<2x384xf32> to vector<2x32xf32>
    %176 = arith.addf %175, %143 : vector<2x32xf32>
    %177 = arith.negf %176 : vector<2x32xf32>
    %178 = math.exp %177 : vector<2x32xf32>
    %cst_60 = arith.constant 1.000000e+00 : f32
    %179 = vector.broadcast %cst_60 : f32 to vector<2x32xf32>
    %180 = arith.addf %179, %178 : vector<2x32xf32>
    %181 = arith.divf %179, %180 : vector<2x32xf32>
    %182 = vector.extract_strided_slice %167 {offsets = [0, 256], sizes = [2, 32], strides = [1, 1]} : vector<2x384xf32> to vector<2x32xf32>
    %183 = arith.mulf %174, %144 : vector<2x32xf32>
    %184 = arith.addf %182, %183 : vector<2x32xf32>
    %185 = math.tanh %184 : vector<2x32xf32>
    %cst_61 = arith.constant 1.000000e+00 : f32
    %186 = vector.broadcast %cst_61 : f32 to vector<2x32xf32>
    %187 = arith.subf %186, %181 : vector<2x32xf32>
    %188 = arith.mulf %187, %185 : vector<2x32xf32>
    %189 = arith.mulf %181, %137 : vector<2x32xf32>
    %190 = arith.addf %188, %189 : vector<2x32xf32>
    %c24 = arith.constant 24 : index
    %c0_62 = arith.constant 0 : index
    %191 = vector.load %arg18[%c24, %c0_62] : memref<72x32xf32, #tpu.memory_space<vmem>>, vector<2x32xf32>
    tpu.vector_store %arg18[%c24, %c0_62], %190 {strides = array<i32>} : memref<72x32xf32, #tpu.memory_space<vmem>>, vector<2x32xf32>,
    %cst_63 = arith.constant dense<0.000000e+00> : vector<2x512xf32>
    %192 = tpu.matmul %190, %2, %cst_63 {dimension_numbers = #tpu.dot_dimension_numbers<[1], [0], [0], [1], [0, 0, 1, 1], [], []>} : vector<2x32xf32>, vector<32x512xf32>, vector<2x512xf32> -> vector<2x512xf32>
    %193 = arith.addf %192, %18 : vector<2x512xf32>
    %194 = vector.extract_strided_slice %193 {offsets = [0, 0], sizes = [2, 32], strides = [1, 1]} : vector<2x512xf32> to vector<2x32xf32>
    %195 = vector.extract_strided_slice %193 {offsets = [0, 128], sizes = [2, 32], strides = [1, 1]} : vector<2x512xf32> to vector<2x32xf32>
    %196 = vector.extract_strided_slice %193 {offsets = [0, 256], sizes = [2, 32], strides = [1, 1]} : vector<2x512xf32> to vector<2x32xf32>
    %197 = vector.extract_strided_slice %193 {offsets = [0, 384], sizes = [2, 32], strides = [1, 1]} : vector<2x512xf32> to vector<2x32xf32>
    %198 = vector.shape_cast %194 : vector<2x32xf32> to vector<2x1x32xf32>
    %199 = vector.broadcast %198 : vector<2x1x32xf32> to vector<2x8x32xf32>
    %200 = arith.addf %11, %199 : vector<2x8x32xf32>
    %201 = math.tanh %200 : vector<2x8x32xf32>
    %202 = arith.mulf %201, %15 : vector<2x8x32xf32>
    %cst_64 = arith.constant dense<0.000000e+00> : vector<2x8xf32>
    %203 = vector.multi_reduction <add>, %202, %cst_64 [2] : vector<2x8x32xf32> to vector<2x8xf32>
    %cst_65 = arith.constant dense<0xFF800000> : vector<2xf32>
    %204 = vector.multi_reduction <maximumf>, %203, %cst_65 [1] : vector<2x8xf32> to vector<2xf32>
    %205 = vector.shape_cast %204 : vector<2xf32> to vector<2x1xf32>
    %206 = vector.broadcast %205 : vector<2x1xf32> to vector<2x8xf32>
    %207 = arith.subf %203, %206 : vector<2x8xf32>
    %208 = math.exp %207 : vector<2x8xf32>
    %cst_66 = arith.constant dense<0.000000e+00> : vector<2xf32>
    %209 = vector.multi_reduction <add>, %208, %cst_66 [1] : vector<2x8xf32> to vector<2xf32>
    %210 = vector.shape_cast %209 : vector<2xf32> to vector<2x1xf32>
    %211 = tpu.reciprocal %210 {approx = true} : vector<2x1xf32> -> vector<2x1xf32>
    %212 = vector.shape_cast %208 : vector<2x8xf32> to vector<2x8x1xf32>
    %213 = vector.broadcast %212 : vector<2x8x1xf32> to vector<2x8x32xf32>
    %214 = arith.mulf %213, %0 : vector<2x8x32xf32>
    %cst_67 = arith.constant dense<0.000000e+00> : vector<2x32xf32>
    %215 = vector.multi_reduction <add>, %214, %cst_67 [1] : vector<2x8x32xf32> to vector<2x32xf32>
    %216 = vector.broadcast %211 : vector<2x1xf32> to vector<2x32xf32>
    %217 = arith.mulf %215, %216 : vector<2x32xf32>
    %cst_68 = arith.constant dense<0.000000e+00> : vector<2x384xf32>
    %218 = tpu.matmul %217, %3, %cst_68 {dimension_numbers = #tpu.dot_dimension_numbers<[1], [0], [0], [1], [0, 0, 1, 1], [], []>} : vector<2x32xf32>, vector<32x384xf32>, vector<2x384xf32> -> vector<2x384xf32>
    %219 = vector.extract_strided_slice %23 {offsets = [24, 0], sizes = [2, 384], strides = [1, 1]} : vector<64x384xf32> to vector<2x384xf32>
    %220 = arith.addf %218, %219 : vector<2x384xf32>
    %221 = vector.extract_strided_slice %220 {offsets = [0, 0], sizes = [2, 32], strides = [1, 1]} : vector<2x384xf32> to vector<2x32xf32>
    %222 = arith.addf %221, %195 : vector<2x32xf32>
    %223 = arith.negf %222 : vector<2x32xf32>
    %224 = math.exp %223 : vector<2x32xf32>
    %cst_69 = arith.constant 1.000000e+00 : f32
    %225 = vector.broadcast %cst_69 : f32 to vector<2x32xf32>
    %226 = arith.addf %225, %224 : vector<2x32xf32>
    %227 = arith.divf %225, %226 : vector<2x32xf32>
    %228 = vector.extract_strided_slice %220 {offsets = [0, 128], sizes = [2, 32], strides = [1, 1]} : vector<2x384xf32> to vector<2x32xf32>
    %229 = arith.addf %228, %196 : vector<2x32xf32>
    %230 = arith.negf %229 : vector<2x32xf32>
    %231 = math.exp %230 : vector<2x32xf32>
    %cst_70 = arith.constant 1.000000e+00 : f32
    %232 = vector.broadcast %cst_70 : f32 to vector<2x32xf32>
    %233 = arith.addf %232, %231 : vector<2x32xf32>
    %234 = arith.divf %232, %233 : vector<2x32xf32>
    %235 = vector.extract_strided_slice %220 {offsets = [0, 256], sizes = [2, 32], strides = [1, 1]} : vector<2x384xf32> to vector<2x32xf32>
    %236 = arith.mulf %227, %197 : vector<2x32xf32>
    %237 = arith.addf %235, %236 : vector<2x32xf32>
    %238 = math.tanh %237 : vector<2x32xf32>
    %cst_71 = arith.constant 1.000000e+00 : f32
    %239 = vector.broadcast %cst_71 : f32 to vector<2x32xf32>
    %240 = arith.subf %239, %234 : vector<2x32xf32>
    %241 = arith.mulf %240, %238 : vector<2x32xf32>
    %242 = arith.mulf %234, %190 : vector<2x32xf32>
    %243 = arith.addf %241, %242 : vector<2x32xf32>
    %c32 = arith.constant 32 : index
    %c0_72 = arith.constant 0 : index
    %244 = vector.load %arg18[%c32, %c0_72] : memref<72x32xf32, #tpu.memory_space<vmem>>, vector<2x32xf32>
    tpu.vector_store %arg18[%c32, %c0_72], %243 {strides = array<i32>} : memref<72x32xf32, #tpu.memory_space<vmem>>, vector<2x32xf32>,
    %cst_73 = arith.constant dense<0.000000e+00> : vector<2x512xf32>
    %245 = tpu.matmul %243, %2, %cst_73 {dimension_numbers = #tpu.dot_dimension_numbers<[1], [0], [0], [1], [0, 0, 1, 1], [], []>} : vector<2x32xf32>, vector<32x512xf32>, vector<2x512xf32> -> vector<2x512xf32>
    %246 = arith.addf %245, %18 : vector<2x512xf32>
    %247 = vector.extract_strided_slice %246 {offsets = [0, 0], sizes = [2, 32], strides = [1, 1]} : vector<2x512xf32> to vector<2x32xf32>
    %248 = vector.extract_strided_slice %246 {offsets = [0, 128], sizes = [2, 32], strides = [1, 1]} : vector<2x512xf32> to vector<2x32xf32>
    %249 = vector.extract_strided_slice %246 {offsets = [0, 256], sizes = [2, 32], strides = [1, 1]} : vector<2x512xf32> to vector<2x32xf32>
    %250 = vector.extract_strided_slice %246 {offsets = [0, 384], sizes = [2, 32], strides = [1, 1]} : vector<2x512xf32> to vector<2x32xf32>
    %251 = vector.shape_cast %247 : vector<2x32xf32> to vector<2x1x32xf32>
    %252 = vector.broadcast %251 : vector<2x1x32xf32> to vector<2x8x32xf32>
    %253 = arith.addf %11, %252 : vector<2x8x32xf32>
    %254 = math.tanh %253 : vector<2x8x32xf32>
    %255 = arith.mulf %254, %15 : vector<2x8x32xf32>
    %cst_74 = arith.constant dense<0.000000e+00> : vector<2x8xf32>
    %256 = vector.multi_reduction <add>, %255, %cst_74 [2] : vector<2x8x32xf32> to vector<2x8xf32>
    %cst_75 = arith.constant dense<0xFF800000> : vector<2xf32>
    %257 = vector.multi_reduction <maximumf>, %256, %cst_75 [1] : vector<2x8xf32> to vector<2xf32>
    %258 = vector.shape_cast %257 : vector<2xf32> to vector<2x1xf32>
    %259 = vector.broadcast %258 : vector<2x1xf32> to vector<2x8xf32>
    %260 = arith.subf %256, %259 : vector<2x8xf32>
    %261 = math.exp %260 : vector<2x8xf32>
    %cst_76 = arith.constant dense<0.000000e+00> : vector<2xf32>
    %262 = vector.multi_reduction <add>, %261, %cst_76 [1] : vector<2x8xf32> to vector<2xf32>
    %263 = vector.shape_cast %262 : vector<2xf32> to vector<2x1xf32>
    %264 = tpu.reciprocal %263 {approx = true} : vector<2x1xf32> -> vector<2x1xf32>
    %265 = vector.shape_cast %261 : vector<2x8xf32> to vector<2x8x1xf32>
    %266 = vector.broadcast %265 : vector<2x8x1xf32> to vector<2x8x32xf32>
    %267 = arith.mulf %266, %0 : vector<2x8x32xf32>
    %cst_77 = arith.constant dense<0.000000e+00> : vector<2x32xf32>
    %268 = vector.multi_reduction <add>, %267, %cst_77 [1] : vector<2x8x32xf32> to vector<2x32xf32>
    %269 = vector.broadcast %264 : vector<2x1xf32> to vector<2x32xf32>
    %270 = arith.mulf %268, %269 : vector<2x32xf32>
    %cst_78 = arith.constant dense<0.000000e+00> : vector<2x384xf32>
    %271 = tpu.matmul %270, %3, %cst_78 {dimension_numbers = #tpu.dot_dimension_numbers<[1], [0], [0], [1], [0, 0, 1, 1], [], []>} : vector<2x32xf32>, vector<32x384xf32>, vector<2x384xf32> -> vector<2x384xf32>
    %272 = vector.extract_strided_slice %23 {offsets = [32, 0], sizes = [2, 384], strides = [1, 1]} : vector<64x384xf32> to vector<2x384xf32>
    %273 = arith.addf %271, %272 : vector<2x384xf32>
    %274 = vector.extract_strided_slice %273 {offsets = [0, 0], sizes = [2, 32], strides = [1, 1]} : vector<2x384xf32> to vector<2x32xf32>
    %275 = arith.addf %274, %248 : vector<2x32xf32>
    %276 = arith.negf %275 : vector<2x32xf32>
    %277 = math.exp %276 : vector<2x32xf32>
    %cst_79 = arith.constant 1.000000e+00 : f32
    %278 = vector.broadcast %cst_79 : f32 to vector<2x32xf32>
    %279 = arith.addf %278, %277 : vector<2x32xf32>
    %280 = arith.divf %278, %279 : vector<2x32xf32>
    %281 = vector.extract_strided_slice %273 {offsets = [0, 128], sizes = [2, 32], strides = [1, 1]} : vector<2x384xf32> to vector<2x32xf32>
    %282 = arith.addf %281, %249 : vector<2x32xf32>
    %283 = arith.negf %282 : vector<2x32xf32>
    %284 = math.exp %283 : vector<2x32xf32>
    %cst_80 = arith.constant 1.000000e+00 : f32
    %285 = vector.broadcast %cst_80 : f32 to vector<2x32xf32>
    %286 = arith.addf %285, %284 : vector<2x32xf32>
    %287 = arith.divf %285, %286 : vector<2x32xf32>
    %288 = vector.extract_strided_slice %273 {offsets = [0, 256], sizes = [2, 32], strides = [1, 1]} : vector<2x384xf32> to vector<2x32xf32>
    %289 = arith.mulf %280, %250 : vector<2x32xf32>
    %290 = arith.addf %288, %289 : vector<2x32xf32>
    %291 = math.tanh %290 : vector<2x32xf32>
    %cst_81 = arith.constant 1.000000e+00 : f32
    %292 = vector.broadcast %cst_81 : f32 to vector<2x32xf32>
    %293 = arith.subf %292, %287 : vector<2x32xf32>
    %294 = arith.mulf %293, %291 : vector<2x32xf32>
    %295 = arith.mulf %287, %243 : vector<2x32xf32>
    %296 = arith.addf %294, %295 : vector<2x32xf32>
    %c40 = arith.constant 40 : index
    %c0_82 = arith.constant 0 : index
    %297 = vector.load %arg18[%c40, %c0_82] : memref<72x32xf32, #tpu.memory_space<vmem>>, vector<2x32xf32>
    tpu.vector_store %arg18[%c40, %c0_82], %296 {strides = array<i32>} : memref<72x32xf32, #tpu.memory_space<vmem>>, vector<2x32xf32>,
    %cst_83 = arith.constant dense<0.000000e+00> : vector<2x512xf32>
    %298 = tpu.matmul %296, %2, %cst_83 {dimension_numbers = #tpu.dot_dimension_numbers<[1], [0], [0], [1], [0, 0, 1, 1], [], []>} : vector<2x32xf32>, vector<32x512xf32>, vector<2x512xf32> -> vector<2x512xf32>
    %299 = arith.addf %298, %18 : vector<2x512xf32>
    %300 = vector.extract_strided_slice %299 {offsets = [0, 0], sizes = [2, 32], strides = [1, 1]} : vector<2x512xf32> to vector<2x32xf32>
    %301 = vector.extract_strided_slice %299 {offsets = [0, 128], sizes = [2, 32], strides = [1, 1]} : vector<2x512xf32> to vector<2x32xf32>
    %302 = vector.extract_strided_slice %299 {offsets = [0, 256], sizes = [2, 32], strides = [1, 1]} : vector<2x512xf32> to vector<2x32xf32>
    %303 = vector.extract_strided_slice %299 {offsets = [0, 384], sizes = [2, 32], strides = [1, 1]} : vector<2x512xf32> to vector<2x32xf32>
    %304 = vector.shape_cast %300 : vector<2x32xf32> to vector<2x1x32xf32>
    %305 = vector.broadcast %304 : vector<2x1x32xf32> to vector<2x8x32xf32>
    %306 = arith.addf %11, %305 : vector<2x8x32xf32>
    %307 = math.tanh %306 : vector<2x8x32xf32>
    %308 = arith.mulf %307, %15 : vector<2x8x32xf32>
    %cst_84 = arith.constant dense<0.000000e+00> : vector<2x8xf32>
    %309 = vector.multi_reduction <add>, %308, %cst_84 [2] : vector<2x8x32xf32> to vector<2x8xf32>
    %cst_85 = arith.constant dense<0xFF800000> : vector<2xf32>
    %310 = vector.multi_reduction <maximumf>, %309, %cst_85 [1] : vector<2x8xf32> to vector<2xf32>
    %311 = vector.shape_cast %310 : vector<2xf32> to vector<2x1xf32>
    %312 = vector.broadcast %311 : vector<2x1xf32> to vector<2x8xf32>
    %313 = arith.subf %309, %312 : vector<2x8xf32>
    %314 = math.exp %313 : vector<2x8xf32>
    %cst_86 = arith.constant dense<0.000000e+00> : vector<2xf32>
    %315 = vector.multi_reduction <add>, %314, %cst_86 [1] : vector<2x8xf32> to vector<2xf32>
    %316 = vector.shape_cast %315 : vector<2xf32> to vector<2x1xf32>
    %317 = tpu.reciprocal %316 {approx = true} : vector<2x1xf32> -> vector<2x1xf32>
    %318 = vector.shape_cast %314 : vector<2x8xf32> to vector<2x8x1xf32>
    %319 = vector.broadcast %318 : vector<2x8x1xf32> to vector<2x8x32xf32>
    %320 = arith.mulf %319, %0 : vector<2x8x32xf32>
    %cst_87 = arith.constant dense<0.000000e+00> : vector<2x32xf32>
    %321 = vector.multi_reduction <add>, %320, %cst_87 [1] : vector<2x8x32xf32> to vector<2x32xf32>
    %322 = vector.broadcast %317 : vector<2x1xf32> to vector<2x32xf32>
    %323 = arith.mulf %321, %322 : vector<2x32xf32>
    %cst_88 = arith.constant dense<0.000000e+00> : vector<2x384xf32>
    %324 = tpu.matmul %323, %3, %cst_88 {dimension_numbers = #tpu.dot_dimension_numbers<[1], [0], [0], [1], [0, 0, 1, 1], [], []>} : vector<2x32xf32>, vector<32x384xf32>, vector<2x384xf32> -> vector<2x384xf32>
    %325 = vector.extract_strided_slice %23 {offsets = [40, 0], sizes = [2, 384], strides = [1, 1]} : vector<64x384xf32> to vector<2x384xf32>
    %326 = arith.addf %324, %325 : vector<2x384xf32>
    %327 = vector.extract_strided_slice %326 {offsets = [0, 0], sizes = [2, 32], strides = [1, 1]} : vector<2x384xf32> to vector<2x32xf32>
    %328 = arith.addf %327, %301 : vector<2x32xf32>
    %329 = arith.negf %328 : vector<2x32xf32>
    %330 = math.exp %329 : vector<2x32xf32>
    %cst_89 = arith.constant 1.000000e+00 : f32
    %331 = vector.broadcast %cst_89 : f32 to vector<2x32xf32>
    %332 = arith.addf %331, %330 : vector<2x32xf32>
    %333 = arith.divf %331, %332 : vector<2x32xf32>
    %334 = vector.extract_strided_slice %326 {offsets = [0, 128], sizes = [2, 32], strides = [1, 1]} : vector<2x384xf32> to vector<2x32xf32>
    %335 = arith.addf %334, %302 : vector<2x32xf32>
    %336 = arith.negf %335 : vector<2x32xf32>
    %337 = math.exp %336 : vector<2x32xf32>
    %cst_90 = arith.constant 1.000000e+00 : f32
    %338 = vector.broadcast %cst_90 : f32 to vector<2x32xf32>
    %339 = arith.addf %338, %337 : vector<2x32xf32>
    %340 = arith.divf %338, %339 : vector<2x32xf32>
    %341 = vector.extract_strided_slice %326 {offsets = [0, 256], sizes = [2, 32], strides = [1, 1]} : vector<2x384xf32> to vector<2x32xf32>
    %342 = arith.mulf %333, %303 : vector<2x32xf32>
    %343 = arith.addf %341, %342 : vector<2x32xf32>
    %344 = math.tanh %343 : vector<2x32xf32>
    %cst_91 = arith.constant 1.000000e+00 : f32
    %345 = vector.broadcast %cst_91 : f32 to vector<2x32xf32>
    %346 = arith.subf %345, %340 : vector<2x32xf32>
    %347 = arith.mulf %346, %344 : vector<2x32xf32>
    %348 = arith.mulf %340, %296 : vector<2x32xf32>
    %349 = arith.addf %347, %348 : vector<2x32xf32>
    %c48 = arith.constant 48 : index
    %c0_92 = arith.constant 0 : index
    %350 = vector.load %arg18[%c48, %c0_92] : memref<72x32xf32, #tpu.memory_space<vmem>>, vector<2x32xf32>
    tpu.vector_store %arg18[%c48, %c0_92], %349 {strides = array<i32>} : memref<72x32xf32, #tpu.memory_space<vmem>>, vector<2x32xf32>,
    %cst_93 = arith.constant dense<0.000000e+00> : vector<2x512xf32>
    %351 = tpu.matmul %349, %2, %cst_93 {dimension_numbers = #tpu.dot_dimension_numbers<[1], [0], [0], [1], [0, 0, 1, 1], [], []>} : vector<2x32xf32>, vector<32x512xf32>, vector<2x512xf32> -> vector<2x512xf32>
    %352 = arith.addf %351, %18 : vector<2x512xf32>
    %353 = vector.extract_strided_slice %352 {offsets = [0, 0], sizes = [2, 32], strides = [1, 1]} : vector<2x512xf32> to vector<2x32xf32>
    %354 = vector.extract_strided_slice %352 {offsets = [0, 128], sizes = [2, 32], strides = [1, 1]} : vector<2x512xf32> to vector<2x32xf32>
    %355 = vector.extract_strided_slice %352 {offsets = [0, 256], sizes = [2, 32], strides = [1, 1]} : vector<2x512xf32> to vector<2x32xf32>
    %356 = vector.extract_strided_slice %352 {offsets = [0, 384], sizes = [2, 32], strides = [1, 1]} : vector<2x512xf32> to vector<2x32xf32>
    %357 = vector.shape_cast %353 : vector<2x32xf32> to vector<2x1x32xf32>
    %358 = vector.broadcast %357 : vector<2x1x32xf32> to vector<2x8x32xf32>
    %359 = arith.addf %11, %358 : vector<2x8x32xf32>
    %360 = math.tanh %359 : vector<2x8x32xf32>
    %361 = arith.mulf %360, %15 : vector<2x8x32xf32>
    %cst_94 = arith.constant dense<0.000000e+00> : vector<2x8xf32>
    %362 = vector.multi_reduction <add>, %361, %cst_94 [2] : vector<2x8x32xf32> to vector<2x8xf32>
    %cst_95 = arith.constant dense<0xFF800000> : vector<2xf32>
    %363 = vector.multi_reduction <maximumf>, %362, %cst_95 [1] : vector<2x8xf32> to vector<2xf32>
    %364 = vector.shape_cast %363 : vector<2xf32> to vector<2x1xf32>
    %365 = vector.broadcast %364 : vector<2x1xf32> to vector<2x8xf32>
    %366 = arith.subf %362, %365 : vector<2x8xf32>
    %367 = math.exp %366 : vector<2x8xf32>
    %cst_96 = arith.constant dense<0.000000e+00> : vector<2xf32>
    %368 = vector.multi_reduction <add>, %367, %cst_96 [1] : vector<2x8xf32> to vector<2xf32>
    %369 = vector.shape_cast %368 : vector<2xf32> to vector<2x1xf32>
    %370 = tpu.reciprocal %369 {approx = true} : vector<2x1xf32> -> vector<2x1xf32>
    %371 = vector.shape_cast %367 : vector<2x8xf32> to vector<2x8x1xf32>
    %372 = vector.broadcast %371 : vector<2x8x1xf32> to vector<2x8x32xf32>
    %373 = arith.mulf %372, %0 : vector<2x8x32xf32>
    %cst_97 = arith.constant dense<0.000000e+00> : vector<2x32xf32>
    %374 = vector.multi_reduction <add>, %373, %cst_97 [1] : vector<2x8x32xf32> to vector<2x32xf32>
    %375 = vector.broadcast %370 : vector<2x1xf32> to vector<2x32xf32>
    %376 = arith.mulf %374, %375 : vector<2x32xf32>
    %cst_98 = arith.constant dense<0.000000e+00> : vector<2x384xf32>
    %377 = tpu.matmul %376, %3, %cst_98 {dimension_numbers = #tpu.dot_dimension_numbers<[1], [0], [0], [1], [0, 0, 1, 1], [], []>} : vector<2x32xf32>, vector<32x384xf32>, vector<2x384xf32> -> vector<2x384xf32>
    %378 = vector.extract_strided_slice %23 {offsets = [48, 0], sizes = [2, 384], strides = [1, 1]} : vector<64x384xf32> to vector<2x384xf32>
    %379 = arith.addf %377, %378 : vector<2x384xf32>
    %380 = vector.extract_strided_slice %379 {offsets = [0, 0], sizes = [2, 32], strides = [1, 1]} : vector<2x384xf32> to vector<2x32xf32>
    %381 = arith.addf %380, %354 : vector<2x32xf32>
    %382 = arith.negf %381 : vector<2x32xf32>
    %383 = math.exp %382 : vector<2x32xf32>
    %cst_99 = arith.constant 1.000000e+00 : f32
    %384 = vector.broadcast %cst_99 : f32 to vector<2x32xf32>
    %385 = arith.addf %384, %383 : vector<2x32xf32>
    %386 = arith.divf %384, %385 : vector<2x32xf32>
    %387 = vector.extract_strided_slice %379 {offsets = [0, 128], sizes = [2, 32], strides = [1, 1]} : vector<2x384xf32> to vector<2x32xf32>
    %388 = arith.addf %387, %355 : vector<2x32xf32>
    %389 = arith.negf %388 : vector<2x32xf32>
    %390 = math.exp %389 : vector<2x32xf32>
    %cst_100 = arith.constant 1.000000e+00 : f32
    %391 = vector.broadcast %cst_100 : f32 to vector<2x32xf32>
    %392 = arith.addf %391, %390 : vector<2x32xf32>
    %393 = arith.divf %391, %392 : vector<2x32xf32>
    %394 = vector.extract_strided_slice %379 {offsets = [0, 256], sizes = [2, 32], strides = [1, 1]} : vector<2x384xf32> to vector<2x32xf32>
    %395 = arith.mulf %386, %356 : vector<2x32xf32>
    %396 = arith.addf %394, %395 : vector<2x32xf32>
    %397 = math.tanh %396 : vector<2x32xf32>
    %cst_101 = arith.constant 1.000000e+00 : f32
    %398 = vector.broadcast %cst_101 : f32 to vector<2x32xf32>
    %399 = arith.subf %398, %393 : vector<2x32xf32>
    %400 = arith.mulf %399, %397 : vector<2x32xf32>
    %401 = arith.mulf %393, %349 : vector<2x32xf32>
    %402 = arith.addf %400, %401 : vector<2x32xf32>
    %c56 = arith.constant 56 : index
    %c0_102 = arith.constant 0 : index
    %403 = vector.load %arg18[%c56, %c0_102] : memref<72x32xf32, #tpu.memory_space<vmem>>, vector<2x32xf32>
    tpu.vector_store %arg18[%c56, %c0_102], %402 {strides = array<i32>} : memref<72x32xf32, #tpu.memory_space<vmem>>, vector<2x32xf32>,
    %cst_103 = arith.constant dense<0.000000e+00> : vector<2x512xf32>
    %404 = tpu.matmul %402, %2, %cst_103 {dimension_numbers = #tpu.dot_dimension_numbers<[1], [0], [0], [1], [0, 0, 1, 1], [], []>} : vector<2x32xf32>, vector<32x512xf32>, vector<2x512xf32> -> vector<2x512xf32>
    %405 = arith.addf %404, %18 : vector<2x512xf32>
    %406 = vector.extract_strided_slice %405 {offsets = [0, 0], sizes = [2, 32], strides = [1, 1]} : vector<2x512xf32> to vector<2x32xf32>
    %407 = vector.extract_strided_slice %405 {offsets = [0, 128], sizes = [2, 32], strides = [1, 1]} : vector<2x512xf32> to vector<2x32xf32>
    %408 = vector.extract_strided_slice %405 {offsets = [0, 256], sizes = [2, 32], strides = [1, 1]} : vector<2x512xf32> to vector<2x32xf32>
    %409 = vector.extract_strided_slice %405 {offsets = [0, 384], sizes = [2, 32], strides = [1, 1]} : vector<2x512xf32> to vector<2x32xf32>
    %410 = vector.shape_cast %406 : vector<2x32xf32> to vector<2x1x32xf32>
    %411 = vector.broadcast %410 : vector<2x1x32xf32> to vector<2x8x32xf32>
    %412 = arith.addf %11, %411 : vector<2x8x32xf32>
    %413 = math.tanh %412 : vector<2x8x32xf32>
    %414 = arith.mulf %413, %15 : vector<2x8x32xf32>
    %cst_104 = arith.constant dense<0.000000e+00> : vector<2x8xf32>
    %415 = vector.multi_reduction <add>, %414, %cst_104 [2] : vector<2x8x32xf32> to vector<2x8xf32>
    %cst_105 = arith.constant dense<0xFF800000> : vector<2xf32>
    %416 = vector.multi_reduction <maximumf>, %415, %cst_105 [1] : vector<2x8xf32> to vector<2xf32>
    %417 = vector.shape_cast %416 : vector<2xf32> to vector<2x1xf32>
    %418 = vector.broadcast %417 : vector<2x1xf32> to vector<2x8xf32>
    %419 = arith.subf %415, %418 : vector<2x8xf32>
    %420 = math.exp %419 : vector<2x8xf32>
    %cst_106 = arith.constant dense<0.000000e+00> : vector<2xf32>
    %421 = vector.multi_reduction <add>, %420, %cst_106 [1] : vector<2x8xf32> to vector<2xf32>
    %422 = vector.shape_cast %421 : vector<2xf32> to vector<2x1xf32>
    %423 = tpu.reciprocal %422 {approx = true} : vector<2x1xf32> -> vector<2x1xf32>
    %424 = vector.shape_cast %420 : vector<2x8xf32> to vector<2x8x1xf32>
    %425 = vector.broadcast %424 : vector<2x8x1xf32> to vector<2x8x32xf32>
    %426 = arith.mulf %425, %0 : vector<2x8x32xf32>
    %cst_107 = arith.constant dense<0.000000e+00> : vector<2x32xf32>
    %427 = vector.multi_reduction <add>, %426, %cst_107 [1] : vector<2x8x32xf32> to vector<2x32xf32>
    %428 = vector.broadcast %423 : vector<2x1xf32> to vector<2x32xf32>
    %429 = arith.mulf %427, %428 : vector<2x32xf32>
    %cst_108 = arith.constant dense<0.000000e+00> : vector<2x384xf32>
    %430 = tpu.matmul %429, %3, %cst_108 {dimension_numbers = #tpu.dot_dimension_numbers<[1], [0], [0], [1], [0, 0, 1, 1], [], []>} : vector<2x32xf32>, vector<32x384xf32>, vector<2x384xf32> -> vector<2x384xf32>
    %431 = vector.extract_strided_slice %23 {offsets = [56, 0], sizes = [2, 384], strides = [1, 1]} : vector<64x384xf32> to vector<2x384xf32>
    %432 = arith.addf %430, %431 : vector<2x384xf32>
    %433 = vector.extract_strided_slice %432 {offsets = [0, 0], sizes = [2, 32], strides = [1, 1]} : vector<2x384xf32> to vector<2x32xf32>
    %434 = arith.addf %433, %407 : vector<2x32xf32>
    %435 = arith.negf %434 : vector<2x32xf32>
    %436 = math.exp %435 : vector<2x32xf32>
    %cst_109 = arith.constant 1.000000e+00 : f32
    %437 = vector.broadcast %cst_109 : f32 to vector<2x32xf32>
    %438 = arith.addf %437, %436 : vector<2x32xf32>
    %439 = arith.divf %437, %438 : vector<2x32xf32>
    %440 = vector.extract_strided_slice %432 {offsets = [0, 128], sizes = [2, 32], strides = [1, 1]} : vector<2x384xf32> to vector<2x32xf32>
    %441 = arith.addf %440, %408 : vector<2x32xf32>
    %442 = arith.negf %441 : vector<2x32xf32>
    %443 = math.exp %442 : vector<2x32xf32>
    %cst_110 = arith.constant 1.000000e+00 : f32
    %444 = vector.broadcast %cst_110 : f32 to vector<2x32xf32>
    %445 = arith.addf %444, %443 : vector<2x32xf32>
    %446 = arith.divf %444, %445 : vector<2x32xf32>
    %447 = vector.extract_strided_slice %432 {offsets = [0, 256], sizes = [2, 32], strides = [1, 1]} : vector<2x384xf32> to vector<2x32xf32>
    %448 = arith.mulf %439, %409 : vector<2x32xf32>
    %449 = arith.addf %447, %448 : vector<2x32xf32>
    %450 = math.tanh %449 : vector<2x32xf32>
    %cst_111 = arith.constant 1.000000e+00 : f32
    %451 = vector.broadcast %cst_111 : f32 to vector<2x32xf32>
    %452 = arith.subf %451, %446 : vector<2x32xf32>
    %453 = arith.mulf %452, %450 : vector<2x32xf32>
    %454 = arith.mulf %446, %402 : vector<2x32xf32>
    %455 = arith.addf %453, %454 : vector<2x32xf32>
    %c64 = arith.constant 64 : index
    %c0_112 = arith.constant 0 : index
    %456 = vector.load %arg18[%c64, %c0_112] : memref<72x32xf32, #tpu.memory_space<vmem>>, vector<2x32xf32>
    tpu.vector_store %arg18[%c64, %c0_112], %455 {strides = array<i32>} : memref<72x32xf32, #tpu.memory_space<vmem>>, vector<2x32xf32>,
    %c0_113 = arith.constant 0 : index
    %c0_114 = arith.constant 0 : index
    %457 = vector.load %arg18[%c0_113, %c0_114] : memref<72x32xf32, #tpu.memory_space<vmem>>, vector<72x32xf32>
    %458 = vector.extract_strided_slice %457 {offsets = [0, 0], sizes = [64, 32], strides = [1, 1]} : vector<72x32xf32> to vector<64x32xf32>
    %459 = vector.extract_strided_slice %457 {offsets = [8, 0], sizes = [64, 32], strides = [1, 1]} : vector<72x32xf32> to vector<64x32xf32>
    %c0_115 = arith.constant 0 : index
    %c0_116 = arith.constant 0 : index
    %460 = vector.load %arg12[%c0_115, %c0_116] : memref<32x128xf32, #tpu.memory_space<vmem>>, vector<32x128xf32>
    %cst_117 = arith.constant dense<0.000000e+00> : vector<64x128xf32>
    %461 = tpu.matmul %459, %460, %cst_117 {dimension_numbers = #tpu.dot_dimension_numbers<[1], [0], [0], [1], [0, 0, 1, 1], [], []>} : vector<64x32xf32>, vector<32x128xf32>, vector<64x128xf32> -> vector<64x128xf32>
    %c0_118 = arith.constant 0 : index
    %c0_119 = arith.constant 0 : index
    %462 = vector.load %arg13[%c0_118, %c0_119] : memref<32x128xf32, #tpu.memory_space<vmem>>, vector<32x128xf32>
    %cst_120 = arith.constant dense<0.000000e+00> : vector<64x128xf32>
    %463 = tpu.matmul %458, %462, %cst_120 {dimension_numbers = #tpu.dot_dimension_numbers<[1], [0], [0], [1], [0, 0, 1, 1], [], []>} : vector<64x32xf32>, vector<32x128xf32>, vector<64x128xf32> -> vector<64x128xf32>
    %464 = arith.addf %461, %463 : vector<64x128xf32>
    %465 = arith.addf %464, %28 : vector<64x128xf32>
    %cst_121 = arith.constant dense<0xFF800000> : vector<64xf32>
    %466 = vector.multi_reduction <maximumf>, %465, %cst_121 [1] : vector<64x128xf32> to vector<64xf32>
    %467 = vector.shape_cast %466 : vector<64xf32> to vector<64x1xf32>
    %468 = vector.broadcast %467 : vector<64x1xf32> to vector<64x128xf32>
    %469 = arith.subf %465, %468 : vector<64x128xf32>
    %470 = math.exp %469 : vector<64x128xf32>
    %cst_122 = arith.constant dense<0.000000e+00> : vector<64xf32>
    %471 = vector.multi_reduction <add>, %470, %cst_122 [1] : vector<64x128xf32> to vector<64xf32>
    %472 = vector.shape_cast %471 : vector<64xf32> to vector<64x1xf32>
    %473 = math.log %472 : vector<64x1xf32>
    %474 = arith.addf %473, %467 : vector<64x1xf32>
    %475 = vector.broadcast %474 : vector<64x1xf32> to vector<64x128xf32>
    %476 = arith.subf %465, %475 : vector<64x128xf32>
    %c0_123 = arith.constant 0 : index
    %c0_124 = arith.constant 0 : index
    %477 = vector.load %arg16[%c0_123, %c0_124] : memref<64x128xf32, #tpu.memory_space<vmem>>, vector<64x128xf32>
    tpu.vector_store %arg16[%c0_123, %c0_124], %476 {strides = array<i32>} : memref<64x128xf32, #tpu.memory_space<vmem>>, vector<64x128xf32>,
    %c0_125 = arith.constant 0 : index
    %c0_126 = arith.constant 0 : index
    %478 = vector.load %arg17[%c0_125, %c0_126] : memref<2x32xf32, #tpu.memory_space<vmem>>, vector<2x32xf32>
    tpu.vector_store %arg17[%c0_125, %c0_126], %455 {strides = array<i32>} : memref<2x32xf32, #tpu.memory_space<vmem>>, vector<2x32xf32>,
    return
  }
  func.func @transform_0(%arg0: i32) -> (i32, i32) {
    %c0_i32 = arith.constant 0 : i32
    %c0_i32_0 = arith.constant 0 : i32
    %c0_i32_1 = arith.constant 0 : i32
    return %c0_i32, %c0_i32_0 : i32, i32
  }
  func.func @transform_1(%arg0: i32) -> (i32, i32, i32) {
    %c0_i32 = arith.constant 0 : i32
    %c0_i32_0 = arith.constant 0 : i32
    %c0_i32_1 = arith.constant 0 : i32
    %c0_i32_2 = arith.constant 0 : i32
    return %c0_i32, %c0_i32_0, %c0_i32_1 : i32, i32, i32
  }
  func.func @transform_2(%arg0: i32) -> (i32, i32) {
    %c0_i32 = arith.constant 0 : i32
    %c0_i32_0 = arith.constant 0 : i32
    %c0_i32_1 = arith.constant 0 : i32
    return %c0_i32, %c0_i32_0 : i32, i32
  }
  func.func @transform_3(%arg0: i32) -> (i32, i32) {
    %c0_i32 = arith.constant 0 : i32
    %c0_i32_0 = arith.constant 0 : i32
    %c0_i32_1 = arith.constant 0 : i32
    return %c0_i32, %c0_i32_0 : i32, i32
  }
  func.func @transform_4(%arg0: i32) -> (i32, i32) {
    %c0_i32 = arith.constant 0 : i32
    %c0_i32_0 = arith.constant 0 : i32
    %c0_i32_1 = arith.constant 0 : i32
    return %c0_i32, %c0_i32_0 : i32, i32
  }
  func.func @transform_5(%arg0: i32) -> (i32, i32) {
    %c0_i32 = arith.constant 0 : i32
    %c0_i32_0 = arith.constant 0 : i32
    %c0_i32_1 = arith.constant 0 : i32
    return %c0_i32, %c0_i32_0 : i32, i32
  }
  func.func @transform_6(%arg0: i32) -> (i32, i32) {
    %c0_i32 = arith.constant 0 : i32
    %c0_i32_0 = arith.constant 0 : i32
    %c0_i32_1 = arith.constant 0 : i32
    return %c0_i32, %c0_i32_0 : i32, i32
  }
  func.func @transform_7(%arg0: i32) -> (i32, i32) {
    %c0_i32 = arith.constant 0 : i32
    %c0_i32_0 = arith.constant 0 : i32
    %c0_i32_1 = arith.constant 0 : i32
    return %c0_i32, %c0_i32_0 : i32, i32
  }
  func.func @transform_8(%arg0: i32) -> (i32, i32) {
    %c0_i32 = arith.constant 0 : i32
    %c0_i32_0 = arith.constant 0 : i32
    %c0_i32_1 = arith.constant 0 : i32
    return %c0_i32, %c0_i32_0 : i32, i32
  }
  func.func @transform_9(%arg0: i32) -> (i32, i32) {
    %c0_i32 = arith.constant 0 : i32
    %c0_i32_0 = arith.constant 0 : i32
    %c0_i32_1 = arith.constant 0 : i32
    return %c0_i32, %c0_i32_0 : i32, i32
  }
  func.func @transform_10(%arg0: i32) -> (i32, i32) {
    %c0_i32 = arith.constant 0 : i32
    %c0_i32_0 = arith.constant 0 : i32
    %c0_i32_1 = arith.constant 0 : i32
    return %c0_i32, %c0_i32_0 : i32, i32
  }
  func.func @transform_11(%arg0: i32) -> (i32, i32) {
    %c0_i32 = arith.constant 0 : i32
    %c0_i32_0 = arith.constant 0 : i32
    %c0_i32_1 = arith.constant 0 : i32
    return %c0_i32, %c0_i32_0 : i32, i32
  }
  func.func @transform_12(%arg0: i32) -> (i32, i32) {
    %c0_i32 = arith.constant 0 : i32
    %c0_i32_0 = arith.constant 0 : i32
    %c0_i32_1 = arith.constant 0 : i32
    return %c0_i32, %c0_i32_0 : i32, i32
  }
  func.func @transform_13(%arg0: i32) -> (i32, i32) {
    %c0_i32 = arith.constant 0 : i32
    %c0_i32_0 = arith.constant 0 : i32
    %c0_i32_1 = arith.constant 0 : i32
    return %c0_i32, %c0_i32_0 : i32, i32
  }
  func.func @transform_14(%arg0: i32) -> (i32, i32) {
    %c0_i32 = arith.constant 0 : i32
    %c0_i32_0 = arith.constant 0 : i32
    %c0_i32_1 = arith.constant 0 : i32
    return %c0_i32, %c0_i32_0 : i32, i32
  }
  func.func @transform_15(%arg0: i32) -> (i32, i32) {
    %c0_i32 = arith.constant 0 : i32
    %c0_i32_0 = arith.constant 0 : i32
    %c0_i32_1 = arith.constant 0 : i32
    return %c0_i32, %c0_i32_0 : i32, i32
  }
  func.func @transform_16(%arg0: i32) -> (i32, i32) {
    %c0_i32 = arith.constant 0 : i32
    %c0_i32_0 = arith.constant 0 : i32
    %c0_i32_1 = arith.constant 0 : i32
    return %c0_i32, %c0_i32_0 : i32, i32
  }
}

</mosaic_0001>

<llo_original>
// kernel: tpu_custom_call.1
$region0: #{tpu_custom_call.1}
  #allocation0 [shape = 'u32[]', space=smem, size = 0x4, offset = 0x4, fixed_abs, tag = 'smem constant byte address 0x4 - core index']
  #allocation1 [shape = 'u32[144,128]{1,0:T(1,128)}', space=vmem, size = 0x12000, scoped, tag = 'internal scratch']
  #allocation2 [shape = 'f32[72,32]{1,0:T(8,128)}', space=vmem, size = 0x9000, scoped, tag = 'scratch operand']
  %s0 = inlined_call_operand.vmem [shape: f32[64,16], index: 0, kind: input, shape index: {}]
  %s1 = inlined_call_operand.vmem [shape: f32[2,8,32], index: 1, kind: input, shape index: {}]
  %s2 = inlined_call_operand.hbm [shape: f32[2,32], index: 2, kind: input, shape index: {}]
  %s3 = inlined_call_operand.vmem [shape: f32[32,32], index: 3, kind: input, shape index: {}]
  %s4 = inlined_call_operand.hbm [shape: f32[1,32], index: 4, kind: input, shape index: {}]
  %s5 = inlined_call_operand.hbm [shape: f32[1,32], index: 5, kind: input, shape index: {}]
  %s6 = inlined_call_operand.hbm [shape: f32[32,512], index: 6, kind: input, shape index: {}]
  %s7 = inlined_call_operand.hbm [shape: f32[1,512], index: 7, kind: input, shape index: {}]
  %s8 = inlined_call_operand.hbm [shape: f32[32,384], index: 8, kind: input, shape index: {}]
  %s9 = inlined_call_operand.vmem [shape: f32[16,384], index: 9, kind: input, shape index: {}]
  %s10 = inlined_call_operand.hbm [shape: f32[1,384], index: 10, kind: input, shape index: {}]
  %s11 = inlined_call_operand.hbm [shape: f32[32,128], index: 11, kind: input, shape index: {}]
  %s12 = inlined_call_operand.hbm [shape: f32[32,128], index: 12, kind: input, shape index: {}]
  %s13 = inlined_call_operand.hbm [shape: f32[16,128], index: 13, kind: input, shape index: {}]
  %s14 = inlined_call_operand.vmem [shape: f32[1,128], index: 14, kind: input, shape index: {}]
  %s15 = inlined_call_operand.hbm [shape: f32[64,128], index: 15, kind: output, shape index: {0}]
  %s16 = inlined_call_operand.hbm [shape: f32[2,32], index: 16, kind: output, shape index: {1}]
  %17 = xla_tuple %s15, %s16
  %s18 = sld [smem:[#allocation0]]
  $region118: #{tpu_custom_call.1} parent=0
    _
  %s20 = ssub.s32 1, %s18
  %s21 = scalar_select 0, %s20, %s18
  $region1: #{tpu_custom_call.1} parent=0
    #allocation3 [shape = 'u8[1024]{0}', space=vmem, size = 0x400, scoped, tag = 'input window, operand 2, single buffered']
    #allocation4 [shape = 's32[1]{0}', space=sflag, size = 0x4, scoped, tag = 'scoped memory for tpu_custom_call.1']
    #allocation5 [shape = 's32[1]{0}', space=sflag, size = 0x4, scoped, tag = 'scoped memory for tpu_custom_call.1']
    #allocation6 [shape = 'u8[512]{0}', space=vmem, size = 0x400, scoped, tag = 'input window, operand 4, single buffered']
    #allocation7 [shape = 's32[1]{0}', space=sflag, size = 0x4, scoped, tag = 'scoped memory for tpu_custom_call.1']
    #allocation8 [shape = 'u8[512]{0}', space=vmem, size = 0x400, scoped, tag = 'input window, operand 5, single buffered']
    #allocation9 [shape = 'u8[65536]{0}', space=vmem, size = 0x10000, scoped, tag = 'input window, operand 6, single buffered']
    #allocation10 [shape = 's32[1]{0}', space=sflag, size = 0x4, scoped, tag = 'scoped memory for tpu_custom_call.1']
    #allocation11 [shape = 'u8[2048]{0}', space=vmem, size = 0x800, scoped, tag = 'input window, operand 7, single buffered']
    #allocation12 [shape = 'u8[49152]{0}', space=vmem, size = 0xc000, scoped, tag = 'input window, operand 8, single buffered']
    #allocation13 [shape = 's32[1]{0}', space=sflag, size = 0x4, scoped, tag = 'scoped memory for tpu_custom_call.1']
    #allocation14 [shape = 'u8[1536]{0}', space=vmem, size = 0x800, scoped, tag = 'input window, operand 10, single buffered']
    #allocation15 [shape = 'u8[16384]{0}', space=vmem, size = 0x4000, scoped, tag = 'input window, operand 11, single buffered']
    #allocation16 [shape = 's32[1]{0}', space=sflag, size = 0x4, scoped, tag = 'scoped memory for tpu_custom_call.1']
    #allocation17 [shape = 'u8[16384]{0}', space=vmem, size = 0x4000, scoped, tag = 'input window, operand 12, single buffered']
    #allocation18 [shape = 'u8[8192]{0}', space=vmem, size = 0x2000, scoped, tag = 'input window, operand 13, single buffered']
    #allocation19 [shape = 's32[1]{0}', space=sflag, size = 0x4, scoped, tag = 'scoped memory for tpu_custom_call.1']
    #allocation20 [shape = 'u8[32768]{0}', space=vmem, size = 0x8000, scoped, tag = 'output window, operand 0, single buffered']
    #allocation21 [shape = 'u8[1024]{0}', space=vmem, size = 0x400, scoped, tag = 'output window, operand 1, single buffered']
    #allocation22 [shape = 's32[1]{0}', space=sflag, size = 0x4, scoped, tag = 'scoped memory for tpu_custom_call.1']
    %22 = vsyncpa [#allocation4], 0
    %23 = vsyncpa [#allocation7], 0
    %24 = vsyncpa [#allocation10], 0
    %25 = vsyncpa [#allocation13], 0
    %26 = vsyncpa [#allocation16], 0
    %27 = vsyncpa [#allocation19], 0
    %28 = vsyncpa [#allocation5], 0
    %29 = vsyncpa [#allocation22], 0
    // Predicated region
    $region2: #{tpu_custom_call.1} parent=1 // pred_check
      _
    $region3: #{tpu_custom_call.1} parent=1 // pred_check_branch
      %31 = sbr.rel (0) target = $region5
    $region4: #{tpu_custom_call.1} parent=1 // pred_region
      _
    $region5: #{tpu_custom_call.1} parent=1 // pred_fallthru
      _
    // Predicated region
    $region6: #{tpu_custom_call.1} parent=1 // pred_check
      _
    $region7: #{tpu_custom_call.1} parent=1 // pred_check_branch
      %33 = sbr.rel (0) target = $region9
    $region8: #{tpu_custom_call.1} parent=1 // pred_region
      _
    $region9: #{tpu_custom_call.1} parent=1 // pred_fallthru
      _
    // Predicated region
    $region10: #{tpu_custom_call.1} parent=1 // pred_check
      _
    $region11: #{tpu_custom_call.1} parent=1 // pred_check_branch
      %35 = sbr.rel (0) target = $region13
    $region12: #{tpu_custom_call.1} parent=1 // pred_region
      %s37 = ssub.s32 32, 32
      %38 = vsyncadd [#allocation4], %s37
      %s40 = sshll.u32 [#allocation3], 4
      %s41 = int_to_ptr.vmem [resolvable:$true] %s40
      %43 = dma.hbm_to_vmem [thread:$0]  %s2, 32, %s41, [#allocation4]
    $region13: #{tpu_custom_call.1} parent=1 // pred_fallthru
      _
    // Predicated region
    $region14: #{tpu_custom_call.1} parent=1 // pred_check
      _
    $region15: #{tpu_custom_call.1} parent=1 // pred_check_branch
      %45 = sbr.rel (0) target = $region17
    $region16: #{tpu_custom_call.1} parent=1 // pred_region
      _
    $region17: #{tpu_custom_call.1} parent=1 // pred_fallthru
      _
    // Predicated region
    $region18: #{tpu_custom_call.1} parent=1 // pred_check
      _
    $region19: #{tpu_custom_call.1} parent=1 // pred_check_branch
      %47 = sbr.rel (0) target = $region21
    $region20: #{tpu_custom_call.1} parent=1 // pred_region
      %s49 = ssub.s32 16, 16
      %50 = vsyncadd [#allocation7], %s49
      %s52 = sshll.u32 [#allocation6], 4
      %s53 = int_to_ptr.vmem [resolvable:$true] %s52
      %55 = dma.hbm_to_vmem [thread:$0]  %s4, 16, %s53, [#allocation7]
    $region21: #{tpu_custom_call.1} parent=1 // pred_fallthru
      _
    // Predicated region
    $region22: #{tpu_custom_call.1} parent=1 // pred_check
      _
    $region23: #{tpu_custom_call.1} parent=1 // pred_check_branch
      %57 = sbr.rel (0) target = $region25
    $region24: #{tpu_custom_call.1} parent=1 // pred_region
      %s59 = ssub.s32 16, 16
      %60 = vsyncadd [#allocation7], %s59
      %s62 = sshll.u32 [#allocation8], 4
      %s63 = int_to_ptr.vmem [resolvable:$true] %s62
      %65 = dma.hbm_to_vmem [thread:$0]  %s5, 16, %s63, [#allocation7]
    $region25: #{tpu_custom_call.1} parent=1 // pred_fallthru
      _
    // Predicated region
    $region26: #{tpu_custom_call.1} parent=1 // pred_check
      _
    $region27: #{tpu_custom_call.1} parent=1 // pred_check_branch
      %67 = sbr.rel (0) target = $region29
    $region28: #{tpu_custom_call.1} parent=1 // pred_region
      %s69 = ssub.s32 2048, 2048
      %70 = vsyncadd [#allocation10], %s69
      %s71 = sshll.u32 [#allocation9], 4
      %s72 = int_to_ptr.vmem [resolvable:$true] %s71
      %77 = dma.hbm_to_vmem [thread:$0]  %s6, 2048, %s72, [#allocation10], 512, 512, 32
    $region29: #{tpu_custom_call.1} parent=1 // pred_fallthru
      _
    // Predicated region
    $region30: #{tpu_custom_call.1} parent=1 // pred_check
      _
    $region31: #{tpu_custom_call.1} parent=1 // pred_check_branch
      %79 = sbr.rel (0) target = $region33
    $region32: #{tpu_custom_call.1} parent=1 // pred_region
      %s81 = ssub.s32 64, 64
      %82 = vsyncadd [#allocation10], %s81
      %s84 = sshll.u32 [#allocation11], 4
      %s85 = int_to_ptr.vmem [resolvable:$true] %s84
      %87 = dma.hbm_to_vmem [thread:$0]  %s7, 64, %s85, [#allocation10]
    $region33: #{tpu_custom_call.1} parent=1 // pred_fallthru
      _
    // Predicated region
    $region34: #{tpu_custom_call.1} parent=1 // pred_check
      _
    $region35: #{tpu_custom_call.1} parent=1 // pred_check_branch
      %89 = sbr.rel (0) target = $region37
    $region36: #{tpu_custom_call.1} parent=1 // pred_region
      %s91 = ssub.s32 1536, 1536
      %92 = vsyncadd [#allocation13], %s91
      %s93 = sshll.u32 [#allocation12], 4
      %s94 = int_to_ptr.vmem [resolvable:$true] %s93
      %99 = dma.hbm_to_vmem [thread:$0]  %s8, 1536, %s94, [#allocation13], 384, 384, 24
    $region37: #{tpu_custom_call.1} parent=1 // pred_fallthru
      _
    // Predicated region
    $region38: #{tpu_custom_call.1} parent=1 // pred_check
      _
    $region39: #{tpu_custom_call.1} parent=1 // pred_check_branch
      %101 = sbr.rel (0) target = $region41
    $region40: #{tpu_custom_call.1} parent=1 // pred_region
      _
    $region41: #{tpu_custom_call.1} parent=1 // pred_fallthru
      _
    // Predicated region
    $region42: #{tpu_custom_call.1} parent=1 // pred_check
      _
    $region43: #{tpu_custom_call.1} parent=1 // pred_check_branch
      %103 = sbr.rel (0) target = $region45
    $region44: #{tpu_custom_call.1} parent=1 // pred_region
      %s105 = ssub.s32 48, 48
      %106 = vsyncadd [#allocation13], %s105
      %s108 = sshll.u32 [#allocation14], 4
      %s109 = int_to_ptr.vmem [resolvable:$true] %s108
      %111 = dma.hbm_to_vmem [thread:$0]  %s10, 48, %s109, [#allocation13]
    $region45: #{tpu_custom_call.1} parent=1 // pred_fallthru
      _
    // Predicated region
    $region46: #{tpu_custom_call.1} parent=1 // pred_check
      _
    $region47: #{tpu_custom_call.1} parent=1 // pred_check_branch
      %113 = sbr.rel (0) target = $region49
    $region48: #{tpu_custom_call.1} parent=1 // pred_region
      %s115 = ssub.s32 512, 512
      %116 = vsyncadd [#allocation16], %s115
      %s117 = sshll.u32 [#allocation15], 4
      %s118 = int_to_ptr.vmem [resolvable:$true] %s117
      %123 = dma.hbm_to_vmem [thread:$0]  %s11, 512, %s118, [#allocation16], 128, 128, 8
    $region49: #{tpu_custom_call.1} parent=1 // pred_fallthru
      _
    // Predicated region
    $region50: #{tpu_custom_call.1} parent=1 // pred_check
      _
    $region51: #{tpu_custom_call.1} parent=1 // pred_check_branch
      %125 = sbr.rel (0) target = $region53
    $region52: #{tpu_custom_call.1} parent=1 // pred_region
      %s127 = ssub.s32 512, 512
      %128 = vsyncadd [#allocation16], %s127
      %s129 = sshll.u32 [#allocation17], 4
      %s130 = int_to_ptr.vmem [resolvable:$true] %s129
      %135 = dma.hbm_to_vmem [thread:$0]  %s12, 512, %s130, [#allocation16], 128, 128, 8
    $region53: #{tpu_custom_call.1} parent=1 // pred_fallthru
      _
    // Predicated region
    $region54: #{tpu_custom_call.1} parent=1 // pred_check
      _
    $region55: #{tpu_custom_call.1} parent=1 // pred_check_branch
      %137 = sbr.rel (0) target = $region57
    $region56: #{tpu_custom_call.1} parent=1 // pred_region
      %s139 = ssub.s32 256, 256
      %140 = vsyncadd [#allocation19], %s139
      %s141 = sshll.u32 [#allocation18], 4
      %s142 = int_to_ptr.vmem [resolvable:$true] %s141
      %147 = dma.hbm_to_vmem [thread:$0]  %s13, 256, %s142, [#allocation19], 128, 128, 8
    $region57: #{tpu_custom_call.1} parent=1 // pred_fallthru
      _
    // Predicated region
    $region58: #{tpu_custom_call.1} parent=1 // pred_check
      _
    $region59: #{tpu_custom_call.1} parent=1 // pred_check_branch
      %149 = sbr.rel (0) target = $region61
    $region60: #{tpu_custom_call.1} parent=1 // pred_region
      _
    $region61: #{tpu_custom_call.1} parent=1 // pred_fallthru
      _
    // Predicated region
    $region62: #{tpu_custom_call.1} parent=1 // pred_check
      _
    $region63: #{tpu_custom_call.1} parent=1 // pred_check_branch
      %151 = sbr.rel (0) target = $region65
    $region64: #{tpu_custom_call.1} parent=1 // pred_region
      %152 = dma.done [#allocation4], 32
    $region65: #{tpu_custom_call.1} parent=1 // pred_fallthru
      _
    // Predicated region
    $region66: #{tpu_custom_call.1} parent=1 // pred_check
      _
    $region67: #{tpu_custom_call.1} parent=1 // pred_check_branch
      %154 = sbr.rel (0) target = $region69
    $region68: #{tpu_custom_call.1} parent=1 // pred_region
      %155 = dma.done [#allocation7], 16
    $region69: #{tpu_custom_call.1} parent=1 // pred_fallthru
      _
    // Predicated region
    $region70: #{tpu_custom_call.1} parent=1 // pred_check
      _
    $region71: #{tpu_custom_call.1} parent=1 // pred_check_branch
      %157 = sbr.rel (0) target = $region73
    $region72: #{tpu_custom_call.1} parent=1 // pred_region
      %158 = dma.done [#allocation7], 16
    $region73: #{tpu_custom_call.1} parent=1 // pred_fallthru
      _
    // Predicated region
    $region74: #{tpu_custom_call.1} parent=1 // pred_check
      _
    $region75: #{tpu_custom_call.1} parent=1 // pred_check_branch
      %160 = sbr.rel (0) target = $region77
    $region76: #{tpu_custom_call.1} parent=1 // pred_region
      %161 = dma.done [#allocation10], 2048
    $region77: #{tpu_custom_call.1} parent=1 // pred_fallthru
      _
    // Predicated region
    $region78: #{tpu_custom_call.1} parent=1 // pred_check
      _
    $region79: #{tpu_custom_call.1} parent=1 // pred_check_branch
      %163 = sbr.rel (0) target = $region81
    $region80: #{tpu_custom_call.1} parent=1 // pred_region
      %164 = dma.done [#allocation10], 64
    $region81: #{tpu_custom_call.1} parent=1 // pred_fallthru
      _
    // Predicated region
    $region82: #{tpu_custom_call.1} parent=1 // pred_check
      _
    $region83: #{tpu_custom_call.1} parent=1 // pred_check_branch
      %166 = sbr.rel (0) target = $region85
    $region84: #{tpu_custom_call.1} parent=1 // pred_region
      %167 = dma.done [#allocation13], 1536
    $region85: #{tpu_custom_call.1} parent=1 // pred_fallthru
      _
    // Predicated region
    $region86: #{tpu_custom_call.1} parent=1 // pred_check
      _
    $region87: #{tpu_custom_call.1} parent=1 // pred_check_branch
      %169 = sbr.rel (0) target = $region89
    $region88: #{tpu_custom_call.1} parent=1 // pred_region
      %170 = dma.done [#allocation13], 48
    $region89: #{tpu_custom_call.1} parent=1 // pred_fallthru
      _
    // Predicated region
    $region90: #{tpu_custom_call.1} parent=1 // pred_check
      _
    $region91: #{tpu_custom_call.1} parent=1 // pred_check_branch
      %172 = sbr.rel (0) target = $region93
    $region92: #{tpu_custom_call.1} parent=1 // pred_region
      %173 = dma.done [#allocation16], 512
    $region93: #{tpu_custom_call.1} parent=1 // pred_fallthru
      _
    // Predicated region
    $region94: #{tpu_custom_call.1} parent=1 // pred_check
      _
    $region95: #{tpu_custom_call.1} parent=1 // pred_check_branch
      %175 = sbr.rel (0) target = $region97
    $region96: #{tpu_custom_call.1} parent=1 // pred_region
      %176 = dma.done [#allocation16], 512
    $region97: #{tpu_custom_call.1} parent=1 // pred_fallthru
      _
    // Predicated region
    $region98: #{tpu_custom_call.1} parent=1 // pred_check
      _
    $region99: #{tpu_custom_call.1} parent=1 // pred_check_branch
      %178 = sbr.rel (0) target = $region101
    $region100: #{tpu_custom_call.1} parent=1 // pred_region
      %179 = dma.done [#allocation19], 256
    $region101: #{tpu_custom_call.1} parent=1 // pred_fallthru
      _
    %v180 = vld [vmem:[%s1] sm:$0xff]
    %v181 = vld [vmem:[%s1 + $0x8] sm:$0xff]
    %v182 = vld [vmem:[%s0] sm:$0xff]
    %v183 = vld [vmem:[%s0 + $0x8] sm:$0xff]
    %v184 = vld [vmem:[%s0 + $0x10] sm:$0xff]
    %v185 = vld [vmem:[%s0 + $0x18] sm:$0xff]
    %v186 = vld [vmem:[%s0 + $0x20] sm:$0xff]
    %v187 = vld [vmem:[%s0 + $0x28] sm:$0xff]
    %v188 = vld [vmem:[%s0 + $0x30] sm:$0xff]
    %v189 = vld [vmem:[%s0 + $0x38] sm:$0xff]
    %v190 = vld [vmem:[#allocation9] sm:$0xff]
    %v191 = vld [vmem:[#allocation9 + $0x8] sm:$0xff]
    %v192 = vld [vmem:[#allocation9 + $0x10] sm:$0xff]
    %v193 = vld [vmem:[#allocation9 + $0x18] sm:$0xff]
    %v194 = vld [vmem:[#allocation9 + $0x20] sm:$0xff]
    %v195 = vld [vmem:[#allocation9 + $0x28] sm:$0xff]
    %v196 = vld [vmem:[#allocation9 + $0x30] sm:$0xff]
    %v197 = vld [vmem:[#allocation9 + $0x38] sm:$0xff]
    %v198 = vld [vmem:[#allocation9 + $0x40] sm:$0xff]
    %v199 = vld [vmem:[#allocation9 + $0x48] sm:$0xff]
    %v200 = vld [vmem:[#allocation9 + $0x50] sm:$0xff]
    %v201 = vld [vmem:[#allocation9 + $0x58] sm:$0xff]
    %v202 = vld [vmem:[#allocation9 + $0x60] sm:$0xff]
    %v203 = vld [vmem:[#allocation9 + $0x68] sm:$0xff]
    %v204 = vld [vmem:[#allocation9 + $0x70] sm:$0xff]
    %v205 = vld [vmem:[#allocation9 + $0x78] sm:$0xff]
    %v206 = vld [vmem:[#allocation12] sm:$0xff]
    %v207 = vld [vmem:[#allocation12 + $0x8] sm:$0xff]
    %v208 = vld [vmem:[#allocation12 + $0x10] sm:$0xff]
    %v209 = vld [vmem:[#allocation12 + $0x18] sm:$0xff]
    %v210 = vld [vmem:[#allocation12 + $0x20] sm:$0xff]
    %v211 = vld [vmem:[#allocation12 + $0x28] sm:$0xff]
    %v212 = vld [vmem:[#allocation12 + $0x30] sm:$0xff]
    %v213 = vld [vmem:[#allocation12 + $0x38] sm:$0xff]
    %v214 = vld [vmem:[#allocation12 + $0x40] sm:$0xff]
    %v215 = vld [vmem:[#allocation12 + $0x48] sm:$0xff]
    %v216 = vld [vmem:[#allocation12 + $0x50] sm:$0xff]
    %v217 = vld [vmem:[#allocation12 + $0x58] sm:$0xff]
    %v218 = vld [vmem:[%s3] sm:$0xff]
    %v219 = vld [vmem:[%s3 + $0x8] sm:$0xff]
    %v220 = vld [vmem:[%s3 + $0x10] sm:$0xff]
    %v221 = vld [vmem:[%s3 + $0x18] sm:$0xff]
    %vm222 = vcmask 261120
    %v224 = vsel %vm222, %v180, 0
    %v227 = vsel %vm222, %v181, 0
    %229 = vmatprep.subr.mxu0 0.0
    %230 = vmatpush1.msra.mxu0 0.0
    %231 = vmatprep.subr.mxu0 0.0
    %232 = vmatpush1.msra.mxu0 0.0
    %233 = vmatprep.subr.mxu0 0.0
    %234 = vmatpush1.msra.mxu0 0.0
    %235 = vmatprep.subr.mxu0 0.0
    %236 = vmatpush1.msra.mxu0 0.0
    %237 = vmatprep.subr.mxu0 0.0
    %238 = vmatpush1.msra.mxu0 0.0
    %239 = vmatprep.subr.mxu0 0.0
    %240 = vmatpush1.msra.mxu0 0.0
    %241 = vmatprep.subr.mxu0 0.0
    %242 = vmatpush1.msra.mxu0 0.0
    %243 = vmatprep.subr.mxu0 0.0
    %244 = vmatpush1.msra.mxu0 0.0
    %245 = vmatprep.subr.mxu0 0.0
    %246 = vmatpush1.msra.mxu0 0.0
    %247 = vmatprep.subr.mxu0 0.0
    %248 = vmatpush1.msra.mxu0 0.0
    %249 = vmatprep.subr.mxu0 0.0
    %250 = vmatpush1.msra.mxu0 0.0
    %251 = vmatprep.subr.mxu0 0.0
    %252 = vmatpush1.msra.mxu0 0.0
    %253 = vmatprep.subr.mxu0 0.0
    %254 = vmatpush1.msra.mxu0 %v221
    %255 = vmatprep.subr.mxu0 0.0
    %256 = vmatpush1.msra.mxu0 %v220
    %257 = vmatprep.subr.mxu0 0.0
    %258 = vmatpush1.msra.mxu0 %v219
    %259 = vmatprep.subr.mxu0 0.0
    %260 = vmatpush1.msra.mxu0 %v218
    %261 = vmatprep.subr.mxu0 0.0
    %262 = vmatpush2.msra.mxu0 0.0
    %263 = vmatprep.subr.mxu0 0.0
    %264 = vmatpush2.msra.mxu0 0.0
    %265 = vmatprep.subr.mxu0 0.0
    %266 = vmatpush2.msra.mxu0 0.0
    %267 = vmatprep.subr.mxu0 0.0
    %268 = vmatpush2.msra.mxu0 0.0
    %269 = vmatprep.subr.mxu0 0.0
    %270 = vmatpush2.msra.mxu0 0.0
    %271 = vmatprep.subr.mxu0 0.0
    %272 = vmatpush2.msra.mxu0 0.0
    %273 = vmatprep.subr.mxu0 0.0
    %274 = vmatpush2.msra.mxu0 0.0
    %275 = vmatprep.subr.mxu0 0.0
    %276 = vmatpush2.msra.mxu0 0.0
    %277 = vmatprep.subr.mxu0 0.0
    %278 = vmatpush2.msra.mxu0 0.0
    %279 = vmatprep.subr.mxu0 0.0
    %280 = vmatpush2.msra.mxu0 0.0
    %281 = vmatprep.subr.mxu0 0.0
    %282 = vmatpush2.msra.mxu0 0.0
    %283 = vmatprep.subr.mxu0 0.0
    %284 = vmatpush2.msra.mxu0 0.0
    %285 = vmatprep.subr.mxu0 0.0
    %286 = vmatpush2.msra.mxu0 0.0
    %287 = vmatprep.subr.mxu0 0.0
    %288 = vmatpush2.msra.mxu0 0.0
    %289 = vmatprep.subr.mxu0 0.0
    %290 = vmatpush2.msra.mxu0 0.0
    %291 = vmatprep.subr.mxu0 0.0
    %292 = vmatpush2.msra.mxu0 0.0
    %293 = vmatprep.mubr.f32.mxu0 0.0
    %294 = vmatmul.mubr.f32.gmra.mxu0 %v224
    %v295 = vpop.f32.mrf.mxu0
    %v296 = vadd.f32 0.0, %v295
    %v297 = vpop.f32.mrf.mxu0
    %298 = vmatprep.mubr.f32.mxu0 0.0
    %299 = vmatmul.mubr.f32.gmra.mxu0 %v227
    %v300 = vpop.f32.mrf.mxu0
    %v301 = vadd.f32 0.0, %v300
    %v302 = vpop.f32.mrf.mxu0
    %303 = vdwg.mxu0
    %v304 = vld [vmem:[#allocation6] sm:$0x1]
    %v306 = vlaneseq
    %v307 = vshrl.u32 %v306, 7
    %v308 = vsub.s32 0, %v307
    %v309 = vrot.slane %v304, %v308
    %v311 = vadd.f32 %v296, %v309
    %v312 = vadd.f32 %v301, %v309
    %v313 = vld [vmem:[#allocation8] sm:$0x1]
    %v315 = vlaneseq
    %v316 = vshrl.u32 %v315, 7
    %v317 = vsub.s32 0, %v316
    %v318 = vrot.slane %v313, %v317
    %v320 = vld [vmem:[#allocation11] sm:$0xf]
    %v322 = vlaneseq
    %v323 = vshrl.u32 %v322, 7
    %v324 = vsub.s32 0, %v323
    %v325 = vrot.slane %v320, %v324
    %v326 = vlaneseq
    %v327 = vshrl.u32 %v326, 7
    %v328 = vsub.s32 1, %v327
    %v329 = vrot.slane %v320, %v328
    %v330 = vlaneseq
    %v331 = vshrl.u32 %v330, 7
    %v332 = vsub.s32 2, %v331
    %v333 = vrot.slane %v320, %v332
    %v334 = vlaneseq
    %v335 = vshrl.u32 %v334, 7
    %v336 = vsub.s32 3, %v335
    %v337 = vrot.slane %v320, %v336
    %v342 = vld [vmem:[%s9] sm:$0xff]
    %v343 = vld [vmem:[%s9 + $0x8] sm:$0xff]
    %v344 = vld [vmem:[%s9 + $0x10] sm:$0xff]
    %v345 = vld [vmem:[%s9 + $0x18] sm:$0xff]
    %v346 = vld [vmem:[%s9 + $0x20] sm:$0xff]
    %v347 = vld [vmem:[%s9 + $0x28] sm:$0xff]
    %v348 = vld [vmem:[#allocation14] sm:$0x7]
    %v350 = vlaneseq
    %v351 = vshrl.u32 %v350, 7
    %v352 = vsub.s32 0, %v351
    %v353 = vrot.slane %v348, %v352
    %v354 = vlaneseq
    %v355 = vshrl.u32 %v354, 7
    %v356 = vsub.s32 1, %v355
    %v357 = vrot.slane %v348, %v356
    %v358 = vlaneseq
    %v359 = vshrl.u32 %v358, 7
    %v360 = vsub.s32 2, %v359
    %v361 = vrot.slane %v348, %v360
    %vm365 = vcmask 130048
    %v367 = vsel %vm365, %v182, 0
    %v370 = vsel %vm365, %v183, 0
    %v373 = vsel %vm365, %v184, 0
    %v376 = vsel %vm365, %v185, 0
    %v379 = vsel %vm365, %v186, 0
    %v382 = vsel %vm365, %v187, 0
    %v385 = vsel %vm365, %v188, 0
    %v388 = vsel %vm365, %v189, 0
    %390 = vmatprep.subr.mxu0 0.0
    %391 = vmatpush1.msra.mxu0 0.0
    %392 = vmatprep.subr.mxu0 0.0
    %393 = vmatpush1.msra.mxu0 0.0
    %394 = vmatprep.subr.mxu0 0.0
    %395 = vmatpush1.msra.mxu0 0.0
    %396 = vmatprep.subr.mxu0 0.0
    %397 = vmatpush1.msra.mxu0 0.0
    %398 = vmatprep.subr.mxu0 0.0
    %399 = vmatpush1.msra.mxu0 0.0
    %400 = vmatprep.subr.mxu0 0.0
    %401 = vmatpush1.msra.mxu0 0.0
    %402 = vmatprep.subr.mxu0 0.0
    %403 = vmatpush1.msra.mxu0 0.0
    %404 = vmatprep.subr.mxu0 0.0
    %405 = vmatpush1.msra.mxu0 0.0
    %406 = vmatprep.subr.mxu0 0.0
    %407 = vmatpush1.msra.mxu0 0.0
    %408 = vmatprep.subr.mxu0 0.0
    %409 = vmatpush1.msra.mxu0 0.0
    %410 = vmatprep.subr.mxu0 0.0
    %411 = vmatpush1.msra.mxu0 0.0
    %412 = vmatprep.subr.mxu0 0.0
    %413 = vmatpush1.msra.mxu0 0.0
    %414 = vmatprep.subr.mxu0 0.0
    %415 = vmatpush1.msra.mxu0 0.0
    %416 = vmatprep.subr.mxu0 0.0
    %417 = vmatpush1.msra.mxu0 0.0
    %418 = vmatprep.subr.mxu0 %v346
    %419 = vmatpush1.msra.mxu0 %v345
    %420 = vmatprep.subr.mxu0 %v343
    %421 = vmatpush1.msra.mxu0 %v342
    %422 = vmatprep.subr.mxu0 0.0
    %423 = vmatpush2.msra.mxu0 0.0
    %424 = vmatprep.subr.mxu0 0.0
    %425 = vmatpush2.msra.mxu0 0.0
    %426 = vmatprep.subr.mxu0 0.0
    %427 = vmatpush2.msra.mxu0 0.0
    %428 = vmatprep.subr.mxu0 0.0
    %429 = vmatpush2.msra.mxu0 0.0
    %430 = vmatprep.subr.mxu0 0.0
    %431 = vmatpush2.msra.mxu0 0.0
    %432 = vmatprep.subr.mxu0 0.0
    %433 = vmatpush2.msra.mxu0 0.0
    %434 = vmatprep.subr.mxu0 0.0
    %435 = vmatpush2.msra.mxu0 0.0
    %436 = vmatprep.subr.mxu0 0.0
    %437 = vmatpush2.msra.mxu0 0.0
    %438 = vmatprep.subr.mxu0 0.0
    %439 = vmatpush2.msra.mxu0 0.0
    %440 = vmatprep.subr.mxu0 0.0
    %441 = vmatpush2.msra.mxu0 0.0
    %442 = vmatprep.subr.mxu0 0.0
    %443 = vmatpush2.msra.mxu0 0.0
    %444 = vmatprep.subr.mxu0 0.0
    %445 = vmatpush2.msra.mxu0 0.0
    %446 = vmatprep.subr.mxu0 0.0
    %447 = vmatpush2.msra.mxu0 0.0
    %448 = vmatprep.subr.mxu0 0.0
    %449 = vmatpush2.msra.mxu0 0.0
    %450 = vmatprep.subr.mxu0 0.0
    %451 = vmatpush2.msra.mxu0 0.0
    %452 = vmatprep.subr.mxu0 0.0
    %453 = vmatpush2.msra.mxu0 0.0
    %454 = vmatprep.mubr.f32.mxu0 0.0
    %455 = vmatmul.mubr.f32.gmra.mxu0 %v367
    %v456 = vpop.f32.mrf.mxu0
    %v457 = vadd.f32 %v353, %v456
    %v458 = vpop.f32.mrf.mxu0
    %v459 = vadd.f32 %v357, %v458
    %460 = vmatprep.mubr.f32.mxu0 0.0
    %461 = vmatmul.mubr.f32.gmra.mxu0 %v370
    %v462 = vpop.f32.mrf.mxu0
    %v463 = vadd.f32 %v353, %v462
    %v464 = vpop.f32.mrf.mxu0
    %v465 = vadd.f32 %v357, %v464
    %466 = vmatprep.mubr.f32.mxu0 0.0
    %467 = vmatmul.mubr.f32.gmra.mxu0 %v373
    %v468 = vpop.f32.mrf.mxu0
    %v469 = vadd.f32 %v353, %v468
    %v470 = vpop.f32.mrf.mxu0
    %v471 = vadd.f32 %v357, %v470
    %472 = vmatprep.mubr.f32.mxu0 0.0
    %473 = vmatmul.mubr.f32.gmra.mxu0 %v376
    %v474 = vpop.f32.mrf.mxu0
    %v475 = vadd.f32 %v353, %v474
    %v476 = vpop.f32.mrf.mxu0
    %v477 = vadd.f32 %v357, %v476
    %478 = vmatprep.mubr.f32.mxu0 0.0
    %479 = vmatmul.mubr.f32.gmra.mxu0 %v379
    %v480 = vpop.f32.mrf.mxu0
    %v481 = vadd.f32 %v353, %v480
    %v482 = vpop.f32.mrf.mxu0
    %v483 = vadd.f32 %v357, %v482
    %484 = vmatprep.mubr.f32.mxu0 0.0
    %485 = vmatmul.mubr.f32.gmra.mxu0 %v382
    %v486 = vpop.f32.mrf.mxu0
    %v487 = vadd.f32 %v353, %v486
    %v488 = vpop.f32.mrf.mxu0
    %v489 = vadd.f32 %v357, %v488
    %490 = vmatprep.mubr.f32.mxu0 0.0
    %491 = vmatmul.mubr.f32.gmra.mxu0 %v385
    %v492 = vpop.f32.mrf.mxu0
    %v493 = vadd.f32 %v353, %v492
    %v494 = vpop.f32.mrf.mxu0
    %v495 = vadd.f32 %v357, %v494
    %496 = vmatprep.mubr.f32.mxu0 0.0
    %497 = vmatmul.mubr.f32.gmra.mxu0 %v388
    %v498 = vpop.f32.mrf.mxu0
    %v499 = vadd.f32 %v353, %v498
    %v500 = vpop.f32.mrf.mxu0
    %v501 = vadd.f32 %v357, %v500
    %502 = vdwg.mxu0
    %503 = vmatprep.subr.mxu0 0.0
    %504 = vmatpush1.msra.mxu0 0.0
    %505 = vmatprep.subr.mxu0 0.0
    %506 = vmatpush1.msra.mxu0 0.0
    %507 = vmatprep.subr.mxu0 0.0
    %508 = vmatpush1.msra.mxu0 0.0
    %509 = vmatprep.subr.mxu0 0.0
    %510 = vmatpush1.msra.mxu0 0.0
    %511 = vmatprep.subr.mxu0 0.0
    %512 = vmatpush1.msra.mxu0 0.0
    %513 = vmatprep.subr.mxu0 0.0
    %514 = vmatpush1.msra.mxu0 0.0
    %515 = vmatprep.subr.mxu0 0.0
    %516 = vmatpush1.msra.mxu0 0.0
    %517 = vmatprep.subr.mxu0 0.0
    %518 = vmatpush1.msra.mxu0 0.0
    %519 = vmatprep.subr.mxu0 0.0
    %520 = vmatpush1.msra.mxu0 0.0
    %521 = vmatprep.subr.mxu0 0.0
    %522 = vmatpush1.msra.mxu0 0.0
    %523 = vmatprep.subr.mxu0 0.0
    %524 = vmatpush1.msra.mxu0 0.0
    %525 = vmatprep.subr.mxu0 0.0
    %526 = vmatpush1.msra.mxu0 0.0
    %527 = vmatprep.subr.mxu0 0.0
    %528 = vmatpush1.msra.mxu0 0.0
    %529 = vmatprep.subr.mxu0 0.0
    %530 = vmatpush1.msra.mxu0 0.0
    %531 = vmatprep.subr.mxu0 0.0
    %532 = vmatpush1.msra.mxu0 %v347
    %533 = vmatprep.subr.mxu0 0.0
    %534 = vmatpush1.msra.mxu0 %v344
    %535 = vmatprep.subr.mxu0 0.0
    %536 = vmatpush2.msra.mxu0 0.0
    %537 = vmatprep.subr.mxu0 0.0
    %538 = vmatpush2.msra.mxu0 0.0
    %539 = vmatprep.subr.mxu0 0.0
    %540 = vmatpush2.msra.mxu0 0.0
    %541 = vmatprep.subr.mxu0 0.0
    %542 = vmatpush2.msra.mxu0 0.0
    %543 = vmatprep.subr.mxu0 0.0
    %544 = vmatpush2.msra.mxu0 0.0
    %545 = vmatprep.subr.mxu0 0.0
    %546 = vmatpush2.msra.mxu0 0.0
    %547 = vmatprep.subr.mxu0 0.0
    %548 = vmatpush2.msra.mxu0 0.0
    %549 = vmatprep.subr.mxu0 0.0
    %550 = vmatpush2.msra.mxu0 0.0
    %551 = vmatprep.subr.mxu0 0.0
    %552 = vmatpush2.msra.mxu0 0.0
    %553 = vmatprep.subr.mxu0 0.0
    %554 = vmatpush2.msra.mxu0 0.0
    %555 = vmatprep.subr.mxu0 0.0
    %556 = vmatpush2.msra.mxu0 0.0
    %557 = vmatprep.subr.mxu0 0.0
    %558 = vmatpush2.msra.mxu0 0.0
    %559 = vmatprep.subr.mxu0 0.0
    %560 = vmatpush2.msra.mxu0 0.0
    %561 = vmatprep.subr.mxu0 0.0
    %562 = vmatpush2.msra.mxu0 0.0
    %563 = vmatprep.subr.mxu0 0.0
    %564 = vmatpush2.msra.mxu0 0.0
    %565 = vmatprep.subr.mxu0 0.0
    %566 = vmatpush2.msra.mxu0 0.0
    %567 = vmatprep.mubr.f32.mxu0 0.0
    %568 = vmatmul.mubr.f32.gmra.mxu0 %v367
    %v569 = vpop.f32.mrf.mxu0
    %v570 = vadd.f32 %v361, %v569
    %v571 = vpop.f32.mrf.mxu0
    %572 = vmatprep.mubr.f32.mxu0 0.0
    %573 = vmatmul.mubr.f32.gmra.mxu0 %v370
    %v574 = vpop.f32.mrf.mxu0
    %v575 = vadd.f32 %v361, %v574
    %v576 = vpop.f32.mrf.mxu0
    %577 = vmatprep.mubr.f32.mxu0 0.0
    %578 = vmatmul.mubr.f32.gmra.mxu0 %v373
    %v579 = vpop.f32.mrf.mxu0
    %v580 = vadd.f32 %v361, %v579
    %v581 = vpop.f32.mrf.mxu0
    %582 = vmatprep.mubr.f32.mxu0 0.0
    %583 = vmatmul.mubr.f32.gmra.mxu0 %v376
    %v584 = vpop.f32.mrf.mxu0
    %v585 = vadd.f32 %v361, %v584
    %v586 = vpop.f32.mrf.mxu0
    %587 = vmatprep.mubr.f32.mxu0 0.0
    %588 = vmatmul.mubr.f32.gmra.mxu0 %v379
    %v589 = vpop.f32.mrf.mxu0
    %v590 = vadd.f32 %v361, %v589
    %v591 = vpop.f32.mrf.mxu0
    %592 = vmatprep.mubr.f32.mxu0 0.0
    %593 = vmatmul.mubr.f32.gmra.mxu0 %v382
    %v594 = vpop.f32.mrf.mxu0
    %v595 = vadd.f32 %v361, %v594
    %v596 = vpop.f32.mrf.mxu0
    %597 = vmatprep.mubr.f32.mxu0 0.0
    %598 = vmatmul.mubr.f32.gmra.mxu0 %v385
    %v599 = vpop.f32.mrf.mxu0
    %v600 = vadd.f32 %v361, %v599
    %v601 = vpop.f32.mrf.mxu0
    %602 = vmatprep.mubr.f32.mxu0 0.0
    %603 = vmatmul.mubr.f32.gmra.mxu0 %v388
    %v604 = vpop.f32.mrf.mxu0
    %v605 = vadd.f32 %v361, %v604
    %v606 = vpop.f32.mrf.mxu0
    %607 = vdwg.mxu0
    %v608 = vld [vmem:[#allocation18] sm:$0xff]
    %v609 = vld [vmem:[#allocation18 + $0x8] sm:$0xff]
    %v610 = vld [vmem:[%s14] sm:$0x1]
    %v612 = vlaneseq
    %v613 = vshrl.u32 %v612, 7
    %v614 = vsub.s32 0, %v613
    %v615 = vrot.slane %v610, %v614
    %617 = vmatprep.subr.mxu0 0.0
    %618 = vmatpush1.msra.mxu0 0.0
    %619 = vmatprep.subr.mxu0 0.0
    %620 = vmatpush1.msra.mxu0 0.0
    %621 = vmatprep.subr.mxu0 0.0
    %622 = vmatpush1.msra.mxu0 0.0
    %623 = vmatprep.subr.mxu0 0.0
    %624 = vmatpush1.msra.mxu0 0.0
    %625 = vmatprep.subr.mxu0 0.0
    %626 = vmatpush1.msra.mxu0 0.0
    %627 = vmatprep.subr.mxu0 0.0
    %628 = vmatpush1.msra.mxu0 0.0
    %629 = vmatprep.subr.mxu0 0.0
    %630 = vmatpush1.msra.mxu0 0.0
    %631 = vmatprep.subr.mxu0 0.0
    %632 = vmatpush1.msra.mxu0 0.0
    %633 = vmatprep.subr.mxu0 0.0
    %634 = vmatpush1.msra.mxu0 0.0
    %635 = vmatprep.subr.mxu0 0.0
    %636 = vmatpush1.msra.mxu0 0.0
    %637 = vmatprep.subr.mxu0 0.0
    %638 = vmatpush1.msra.mxu0 0.0
    %639 = vmatprep.subr.mxu0 0.0
    %640 = vmatpush1.msra.mxu0 0.0
    %641 = vmatprep.subr.mxu0 0.0
    %642 = vmatpush1.msra.mxu0 0.0
    %643 = vmatprep.subr.mxu0 0.0
    %644 = vmatpush1.msra.mxu0 0.0
    %645 = vmatprep.subr.mxu0 0.0
    %646 = vmatpush1.msra.mxu0 %v609
    %647 = vmatprep.subr.mxu0 0.0
    %648 = vmatpush1.msra.mxu0 %v608
    %649 = vmatprep.subr.mxu0 0.0
    %650 = vmatpush2.msra.mxu0 0.0
    %651 = vmatprep.subr.mxu0 0.0
    %652 = vmatpush2.msra.mxu0 0.0
    %653 = vmatprep.subr.mxu0 0.0
    %654 = vmatpush2.msra.mxu0 0.0
    %655 = vmatprep.subr.mxu0 0.0
    %656 = vmatpush2.msra.mxu0 0.0
    %657 = vmatprep.subr.mxu0 0.0
    %658 = vmatpush2.msra.mxu0 0.0
    %659 = vmatprep.subr.mxu0 0.0
    %660 = vmatpush2.msra.mxu0 0.0
    %661 = vmatprep.subr.mxu0 0.0
    %662 = vmatpush2.msra.mxu0 0.0
    %663 = vmatprep.subr.mxu0 0.0
    %664 = vmatpush2.msra.mxu0 0.0
    %665 = vmatprep.subr.mxu0 0.0
    %666 = vmatpush2.msra.mxu0 0.0
    %667 = vmatprep.subr.mxu0 0.0
    %668 = vmatpush2.msra.mxu0 0.0
    %669 = vmatprep.subr.mxu0 0.0
    %670 = vmatpush2.msra.mxu0 0.0
    %671 = vmatprep.subr.mxu0 0.0
    %672 = vmatpush2.msra.mxu0 0.0
    %673 = vmatprep.subr.mxu0 0.0
    %674 = vmatpush2.msra.mxu0 0.0
    %675 = vmatprep.subr.mxu0 0.0
    %676 = vmatpush2.msra.mxu0 0.0
    %677 = vmatprep.subr.mxu0 0.0
    %678 = vmatpush2.msra.mxu0 0.0
    %679 = vmatprep.subr.mxu0 0.0
    %680 = vmatpush2.msra.mxu0 0.0
    %681 = vmatprep.mubr.f32.mxu0 0.0
    %682 = vmatmul.mubr.f32.gmra.mxu0 %v367
    %v683 = vpop.f32.mrf.mxu0
    %v684 = vadd.f32 %v615, %v683
    %v685 = vpop.f32.mrf.mxu0
    %686 = vmatprep.mubr.f32.mxu0 0.0
    %687 = vmatmul.mubr.f32.gmra.mxu0 %v370
    %v688 = vpop.f32.mrf.mxu0
    %v689 = vadd.f32 %v615, %v688
    %v690 = vpop.f32.mrf.mxu0
    %691 = vmatprep.mubr.f32.mxu0 0.0
    %692 = vmatmul.mubr.f32.gmra.mxu0 %v373
    %v693 = vpop.f32.mrf.mxu0
    %v694 = vadd.f32 %v615, %v693
    %v695 = vpop.f32.mrf.mxu0
    %696 = vmatprep.mubr.f32.mxu0 0.0
    %697 = vmatmul.mubr.f32.gmra.mxu0 %v376
    %v698 = vpop.f32.mrf.mxu0
    %v699 = vadd.f32 %v615, %v698
    %v700 = vpop.f32.mrf.mxu0
    %701 = vmatprep.mubr.f32.mxu0 0.0
    %702 = vmatmul.mubr.f32.gmra.mxu0 %v379
    %v703 = vpop.f32.mrf.mxu0
    %v704 = vadd.f32 %v615, %v703
    %v705 = vpop.f32.mrf.mxu0
    %706 = vmatprep.mubr.f32.mxu0 0.0
    %707 = vmatmul.mubr.f32.gmra.mxu0 %v382
    %v708 = vpop.f32.mrf.mxu0
    %v709 = vadd.f32 %v615, %v708
    %v710 = vpop.f32.mrf.mxu0
    %711 = vmatprep.mubr.f32.mxu0 0.0
    %712 = vmatmul.mubr.f32.gmra.mxu0 %v385
    %v713 = vpop.f32.mrf.mxu0
    %v714 = vadd.f32 %v615, %v713
    %v715 = vpop.f32.mrf.mxu0
    %716 = vmatprep.mubr.f32.mxu0 0.0
    %717 = vmatmul.mubr.f32.gmra.mxu0 %v388
    %v718 = vpop.f32.mrf.mxu0
    %v719 = vadd.f32 %v615, %v718
    %v720 = vpop.f32.mrf.mxu0
    %721 = vdwg.mxu0
    %722 = vst.msk [vmem:[#allocation2] sm:$0xff] %vm222, 0.0
    %723 = vst.msk [vmem:[#allocation2 + $0x8] sm:$0xff] %vm222, 0.0
    %724 = vst.msk [vmem:[#allocation2 + $0x10] sm:$0xff] %vm222, 0.0
    %725 = vst.msk [vmem:[#allocation2 + $0x18] sm:$0xff] %vm222, 0.0
    %726 = vst.msk [vmem:[#allocation2 + $0x20] sm:$0xff] %vm222, 0.0
    %727 = vst.msk [vmem:[#allocation2 + $0x28] sm:$0xff] %vm222, 0.0
    %728 = vst.msk [vmem:[#allocation2 + $0x30] sm:$0xff] %vm222, 0.0
    %729 = vst.msk [vmem:[#allocation2 + $0x38] sm:$0xff] %vm222, 0.0
    %730 = vst.msk [vmem:[#allocation2 + $0x40] sm:$0xff] %vm222, 0.0
    %v731 = vld [vmem:[#allocation3] sm:$0x3]
    %vm732 = vcmask 254976
    %733 = vst.msk [vmem:[#allocation2] sm:$0x3] %vm732, %v731
    %v735 = vsel %vm222, %v731, 0
    %737 = vmatprep.subr.mxu0 0.0
    %738 = vmatpush1.msra.mxu0 0.0
    %739 = vmatprep.subr.mxu0 0.0
    %740 = vmatpush1.msra.mxu0 0.0
    %741 = vmatprep.subr.mxu0 0.0
    %742 = vmatpush1.msra.mxu0 0.0
    %743 = vmatprep.subr.mxu0 0.0
    %744 = vmatpush1.msra.mxu0 0.0
    %745 = vmatprep.subr.mxu0 0.0
    %746 = vmatpush1.msra.mxu0 0.0
    %747 = vmatprep.subr.mxu0 0.0
    %748 = vmatpush1.msra.mxu0 0.0
    %749 = vmatprep.subr.mxu0 0.0
    %750 = vmatpush1.msra.mxu0 0.0
    %751 = vmatprep.subr.mxu0 0.0
    %752 = vmatpush1.msra.mxu0 0.0
    %753 = vmatprep.subr.mxu0 0.0
    %754 = vmatpush1.msra.mxu0 0.0
    %755 = vmatprep.subr.mxu0 0.0
    %756 = vmatpush1.msra.mxu0 0.0
    %757 = vmatprep.subr.mxu0 0.0
    %758 = vmatpush1.msra.mxu0 0.0
    %759 = vmatprep.subr.mxu0 0.0
    %760 = vmatpush1.msra.mxu0 0.0
    %761 = vmatprep.subr.mxu0 %v203
    %762 = vmatpush1.msra.mxu0 %v202
    %763 = vmatprep.subr.mxu0 %v199
    %764 = vmatpush1.msra.mxu0 %v198
    %765 = vmatprep.subr.mxu0 %v195
    %766 = vmatpush1.msra.mxu0 %v194
    %767 = vmatprep.subr.mxu0 %v191
    %768 = vmatpush1.msra.mxu0 %v190
    %769 = vmatprep.subr.mxu0 0.0
    %770 = vmatpush2.msra.mxu0 0.0
    %771 = vmatprep.subr.mxu0 0.0
    %772 = vmatpush2.msra.mxu0 0.0
    %773 = vmatprep.subr.mxu0 0.0
    %774 = vmatpush2.msra.mxu0 0.0
    %775 = vmatprep.subr.mxu0 0.0
    %776 = vmatpush2.msra.mxu0 0.0
    %777 = vmatprep.subr.mxu0 0.0
    %778 = vmatpush2.msra.mxu0 0.0
    %779 = vmatprep.subr.mxu0 0.0
    %780 = vmatpush2.msra.mxu0 0.0
    %781 = vmatprep.subr.mxu0 0.0
    %782 = vmatpush2.msra.mxu0 0.0
    %783 = vmatprep.subr.mxu0 0.0
    %784 = vmatpush2.msra.mxu0 0.0
    %785 = vmatprep.subr.mxu0 0.0
    %786 = vmatpush2.msra.mxu0 0.0
    %787 = vmatprep.subr.mxu0 0.0
    %788 = vmatpush2.msra.mxu0 0.0
    %789 = vmatprep.subr.mxu0 0.0
    %790 = vmatpush2.msra.mxu0 0.0
    %791 = vmatprep.subr.mxu0 0.0
    %792 = vmatpush2.msra.mxu0 0.0
    %793 = vmatprep.subr.mxu0 0.0
    %794 = vmatpush2.msra.mxu0 0.0
    %795 = vmatprep.subr.mxu0 0.0
    %796 = vmatpush2.msra.mxu0 0.0
    %797 = vmatprep.subr.mxu0 0.0
    %798 = vmatpush2.msra.mxu0 0.0
    %799 = vmatprep.subr.mxu0 0.0
    %800 = vmatpush2.msra.mxu0 0.0
    %801 = vmatprep.mubr.f32.mxu0 0.0
    %802 = vmatmul.mubr.f32.gmra.mxu0 %v735
    %v803 = vpop.f32.mrf.mxu0
    %v804 = vadd.f32 %v325, %v803
    %v805 = vpop.f32.mrf.mxu0
    %v806 = vadd.f32 %v329, %v805
    %807 = vdwg.mxu0
    %808 = vmatprep.subr.mxu0 0.0
    %809 = vmatpush1.msra.mxu0 0.0
    %810 = vmatprep.subr.mxu0 0.0
    %811 = vmatpush1.msra.mxu0 0.0
    %812 = vmatprep.subr.mxu0 0.0
    %813 = vmatpush1.msra.mxu0 0.0
    %814 = vmatprep.subr.mxu0 0.0
    %815 = vmatpush1.msra.mxu0 0.0
    %816 = vmatprep.subr.mxu0 0.0
    %817 = vmatpush1.msra.mxu0 0.0
    %818 = vmatprep.subr.mxu0 0.0
    %819 = vmatpush1.msra.mxu0 0.0
    %820 = vmatprep.subr.mxu0 0.0
    %821 = vmatpush1.msra.mxu0 0.0
    %822 = vmatprep.subr.mxu0 0.0
    %823 = vmatpush1.msra.mxu0 0.0
    %824 = vmatprep.subr.mxu0 0.0
    %825 = vmatpush1.msra.mxu0 0.0
    %826 = vmatprep.subr.mxu0 0.0
    %827 = vmatpush1.msra.mxu0 0.0
    %828 = vmatprep.subr.mxu0 0.0
    %829 = vmatpush1.msra.mxu0 0.0
    %830 = vmatprep.subr.mxu0 0.0
    %831 = vmatpush1.msra.mxu0 0.0
    %832 = vmatprep.subr.mxu0 %v205
    %833 = vmatpush1.msra.mxu0 %v204
    %834 = vmatprep.subr.mxu0 %v201
    %835 = vmatpush1.msra.mxu0 %v200
    %836 = vmatprep.subr.mxu0 %v197
    %837 = vmatpush1.msra.mxu0 %v196
    %838 = vmatprep.subr.mxu0 %v193
    %839 = vmatpush1.msra.mxu0 %v192
    %840 = vmatprep.subr.mxu0 0.0
    %841 = vmatpush2.msra.mxu0 0.0
    %842 = vmatprep.subr.mxu0 0.0
    %843 = vmatpush2.msra.mxu0 0.0
    %844 = vmatprep.subr.mxu0 0.0
    %845 = vmatpush2.msra.mxu0 0.0
    %846 = vmatprep.subr.mxu0 0.0
    %847 = vmatpush2.msra.mxu0 0.0
    %848 = vmatprep.subr.mxu0 0.0
    %849 = vmatpush2.msra.mxu0 0.0
    %850 = vmatprep.subr.mxu0 0.0
    %851 = vmatpush2.msra.mxu0 0.0
    %852 = vmatprep.subr.mxu0 0.0
    %853 = vmatpush2.msra.mxu0 0.0
    %854 = vmatprep.subr.mxu0 0.0
    %855 = vmatpush2.msra.mxu0 0.0
    %856 = vmatprep.subr.mxu0 0.0
    %857 = vmatpush2.msra.mxu0 0.0
    %858 = vmatprep.subr.mxu0 0.0
    %859 = vmatpush2.msra.mxu0 0.0
    %860 = vmatprep.subr.mxu0 0.0
    %861 = vmatpush2.msra.mxu0 0.0
    %862 = vmatprep.subr.mxu0 0.0
    %863 = vmatpush2.msra.mxu0 0.0
    %864 = vmatprep.subr.mxu0 0.0
    %865 = vmatpush2.msra.mxu0 0.0
    %866 = vmatprep.subr.mxu0 0.0
    %867 = vmatpush2.msra.mxu0 0.0
    %868 = vmatprep.subr.mxu0 0.0
    %869 = vmatpush2.msra.mxu0 0.0
    %870 = vmatprep.subr.mxu0 0.0
    %871 = vmatpush2.msra.mxu0 0.0
    %872 = vmatprep.mubr.f32.mxu0 0.0
    %873 = vmatmul.mubr.f32.gmra.mxu0 %v735
    %v874 = vpop.f32.mrf.mxu0
    %v875 = vadd.f32 %v333, %v874
    %v876 = vpop.f32.mrf.mxu0
    %v877 = vadd.f32 %v337, %v876
    %878 = vdwg.mxu0
    %v881 = vunpack.c.l.s4 1966171168
    %v882 = vunpack.c.0.s8 %v881
    %v883 = vlaneseq
    %v884 = vshrl.u32 %v883, 7
    %v885 = vsub.s32 %v882, %v884
    %v886 = vrot.slane %v804, %v885
    %v887 = vcombine.high %v886, %v886
    %v889 = vunpack.c.l.s4 1966171168
    %v890 = vunpack.c.0.s8 %v889
    %v891 = vlaneseq
    %v892 = vshrl.u32 %v891, 7
    %v893 = vsub.s32 %v890, %v892
    %v894 = vrot.slane %v886, %v893
    %v896 = vunpack.c.l.s4 1966171168
    %v897 = vunpack.c.0.s8 %v896
    %v898 = vlaneseq
    %v899 = vshrl.u32 %v898, 7
    %v900 = vsub.s32 %v897, %v899
    %v901 = vrot.slane %v887, %v900
    %v902 = vlaneseq
    %v903 = vshrl.u32 %v902, 7
    %v904 = vsub.s32 0, %v903
    %v905 = vrot.slane %v894, %v904
    %v906 = vlaneseq
    %v907 = vshrl.u32 %v906, 7
    %v908 = vsub.s32 0, %v907
    %v909 = vrot.slane %v901, %v908
    %v912 = vadd.f32 %v311, %v905
    %v913 = vadd.f32 %v312, %v909
    %v914 = vtanh.pop %v912
    %v915 = vtanh.pop %v913
    %v916 = vmul.f32 %v914, %v318
    %v917 = vmul.f32 %v915, %v318
    %v918 = vsel %vm222, %v916, 0.0
    %919 = vadd.xlane.f32.xlu0 %v918
    %v920 = vpop.xlane.xlu0 %919
    %v921 = vsel %vm222, %v917, 0.0
    %922 = vadd.xlane.f32.xlu0 %v921
    %v923 = vpop.xlane.xlu0 %922
    %v926 = vlaneseq
    %v927 = vand.u32 %v926, 127
    %v928 = vlaneseq
    %v929 = vshrl.u32 %v928, 7
    %v930 = vsub.s32 %v927, %v929
    %v931 = vrot.slane %v920, %v930
    %v932 = vlaneseq
    %v933 = vshrl.u32 %v932, 7
    %v934 = vsub.s32 %v927, %v933
    %v935 = vrot.slane %v923, %v934
    %vm936 = vcmask 1041409
    %v937 = vsel %vm936, %v935, %v931
    %vm939 = vcmask 58368
    %v940 = vsel %vm939, %v937, -inf
    %941 = vmax.xlane.f32.xlu0 %v940
    %v942 = vpop.xlane.xlu0 %941
    %v944 = vlaneseq
    %v945 = vshrl.u32 %v944, 7
    %v946 = vsub.s32 0, %v945
    %v947 = vrot.slane %v942, %v946
    %v948 = vlaneseq
    %v949 = vshrl.u32 %v948, 7
    %v950 = vsub.s32 1, %v949
    %v951 = vrot.slane %v942, %v950
    %v954 = vsub.f32 %v920, %v947
    %v955 = vsub.f32 %v923, %v951
    %v956 = vmul.f32 %v954, 1.442695
    %v957 = vpow.pop %v956
    %v958 = vmul.f32 %v955, 1.442695
    %v959 = vpow.pop %v958
    %962 = vset.pattern.permute.xlu0 0
    %963 = vperm.xlu0 %962, %v957
    %v964 = vpop.permute.xlu0 %963
    %965 = vset.pattern.permute.xlu0 0
    %966 = vperm.xlu0 %965, %v959
    %v967 = vpop.permute.xlu0 %966
    %v968 = vlaneseq
    %v969 = vshrl.u32 %v968, 7
    %v970 = vsub.s32 %v927, %v969
    %v971 = vrot.slane %v964, %v970
    %v972 = vlaneseq
    %v973 = vshrl.u32 %v972, 7
    %v974 = vsub.s32 %v927, %v973
    %v975 = vrot.slane %v967, %v974
    %v976 = vsel %vm936, %v975, %v971
    %v978 = vsel %vm939, %v976, 0.0
    %979 = vadd.xlane.f32.xlu0 %v978
    %v980 = vpop.xlane.xlu0 %979
    %v981 = vrcp.pop %v980
    %v984 = vmul.f32 %v964, %v180
    %v985 = vmul.f32 %v967, %v181
    %v986 = vsel %vm222, %v984, 0.0
    %v987 = vrot.slane %v986, 4
    %v988 = vadd.f32 %v986, %v987
    %v989 = vrot.slane %v988, 2
    %v990 = vadd.f32 %v988, %v989
    %v991 = vrot.slane %v990, 1
    %v992 = vadd.f32 %v990, %v991
    %v993 = vsel %vm222, %v985, 0.0
    %v994 = vrot.slane %v993, 4
    %v995 = vadd.f32 %v993, %v994
    %v996 = vrot.slane %v995, 2
    %v997 = vadd.f32 %v995, %v996
    %v998 = vrot.slane %v997, 1
    %v999 = vadd.f32 %v997, %v998
    %v1001 = vrot.slane %v981, 1
    %v1004 = vmul.f32 %v992, %v981
    %v1005 = vmul.f32 %v999, %v1001
    %v1008 = vrot.slane %v1005, 7
    %v1009 = vsel %vm936, %v1008, %v1004
    %v1010 = vsel %vm222, %v1009, 0
    %1012 = vmatprep.subr.mxu0 0.0
    %1013 = vmatpush1.msra.mxu0 0.0
    %1014 = vmatprep.subr.mxu0 0.0
    %1015 = vmatpush1.msra.mxu0 0.0
    %1016 = vmatprep.subr.mxu0 0.0
    %1017 = vmatpush1.msra.mxu0 0.0
    %1018 = vmatprep.subr.mxu0 0.0
    %1019 = vmatpush1.msra.mxu0 0.0
    %1020 = vmatprep.subr.mxu0 0.0
    %1021 = vmatpush1.msra.mxu0 0.0
    %1022 = vmatprep.subr.mxu0 0.0
    %1023 = vmatpush1.msra.mxu0 0.0
    %1024 = vmatprep.subr.mxu0 0.0
    %1025 = vmatpush1.msra.mxu0 0.0
    %1026 = vmatprep.subr.mxu0 0.0
    %1027 = vmatpush1.msra.mxu0 0.0
    %1028 = vmatprep.subr.mxu0 0.0
    %1029 = vmatpush1.msra.mxu0 0.0
    %1030 = vmatprep.subr.mxu0 0.0
    %1031 = vmatpush1.msra.mxu0 0.0
    %1032 = vmatprep.subr.mxu0 0.0
    %1033 = vmatpush1.msra.mxu0 0.0
    %1034 = vmatprep.subr.mxu0 0.0
    %1035 = vmatpush1.msra.mxu0 0.0
    %1036 = vmatprep.subr.mxu0 %v216
    %1037 = vmatpush1.msra.mxu0 %v215
    %1038 = vmatprep.subr.mxu0 %v213
    %1039 = vmatpush1.msra.mxu0 %v212
    %1040 = vmatprep.subr.mxu0 %v210
    %1041 = vmatpush1.msra.mxu0 %v209
    %1042 = vmatprep.subr.mxu0 %v207
    %1043 = vmatpush1.msra.mxu0 %v206
    %1044 = vmatprep.subr.mxu0 0.0
    %1045 = vmatpush2.msra.mxu0 0.0
    %1046 = vmatprep.subr.mxu0 0.0
    %1047 = vmatpush2.msra.mxu0 0.0
    %1048 = vmatprep.subr.mxu0 0.0
    %1049 = vmatpush2.msra.mxu0 0.0
    %1050 = vmatprep.subr.mxu0 0.0
    %1051 = vmatpush2.msra.mxu0 0.0
    %1052 = vmatprep.subr.mxu0 0.0
    %1053 = vmatpush2.msra.mxu0 0.0
    %1054 = vmatprep.subr.mxu0 0.0
    %1055 = vmatpush2.msra.mxu0 0.0
    %1056 = vmatprep.subr.mxu0 0.0
    %1057 = vmatpush2.msra.mxu0 0.0
    %1058 = vmatprep.subr.mxu0 0.0
    %1059 = vmatpush2.msra.mxu0 0.0
    %1060 = vmatprep.subr.mxu0 0.0
    %1061 = vmatpush2.msra.mxu0 0.0
    %1062 = vmatprep.subr.mxu0 0.0
    %1063 = vmatpush2.msra.mxu0 0.0
    %1064 = vmatprep.subr.mxu0 0.0
    %1065 = vmatpush2.msra.mxu0 0.0
    %1066 = vmatprep.subr.mxu0 0.0
    %1067 = vmatpush2.msra.mxu0 0.0
    %1068 = vmatprep.subr.mxu0 0.0
    %1069 = vmatpush2.msra.mxu0 0.0
    %1070 = vmatprep.subr.mxu0 0.0
    %1071 = vmatpush2.msra.mxu0 0.0
    %1072 = vmatprep.subr.mxu0 0.0
    %1073 = vmatpush2.msra.mxu0 0.0
    %1074 = vmatprep.subr.mxu0 0.0
    %1075 = vmatpush2.msra.mxu0 0.0
    %1076 = vmatprep.mubr.f32.mxu0 0.0
    %1077 = vmatmul.mubr.f32.gmra.mxu0 %v1010
    %v1078 = vpop.f32.mrf.mxu0
    %v1079 = vadd.f32 %v457, %v1078
    %v1080 = vpop.f32.mrf.mxu0
    %v1081 = vadd.f32 %v459, %v1080
    %1082 = vdwg.mxu0
    %1083 = vmatprep.subr.mxu0 0.0
    %1084 = vmatpush1.msra.mxu0 0.0
    %1085 = vmatprep.subr.mxu0 0.0
    %1086 = vmatpush1.msra.mxu0 0.0
    %1087 = vmatprep.subr.mxu0 0.0
    %1088 = vmatpush1.msra.mxu0 0.0
    %1089 = vmatprep.subr.mxu0 0.0
    %1090 = vmatpush1.msra.mxu0 0.0
    %1091 = vmatprep.subr.mxu0 0.0
    %1092 = vmatpush1.msra.mxu0 0.0
    %1093 = vmatprep.subr.mxu0 0.0
    %1094 = vmatpush1.msra.mxu0 0.0
    %1095 = vmatprep.subr.mxu0 0.0
    %1096 = vmatpush1.msra.mxu0 0.0
    %1097 = vmatprep.subr.mxu0 0.0
    %1098 = vmatpush1.msra.mxu0 0.0
    %1099 = vmatprep.subr.mxu0 0.0
    %1100 = vmatpush1.msra.mxu0 0.0
    %1101 = vmatprep.subr.mxu0 0.0
    %1102 = vmatpush1.msra.mxu0 0.0
    %1103 = vmatprep.subr.mxu0 0.0
    %1104 = vmatpush1.msra.mxu0 0.0
    %1105 = vmatprep.subr.mxu0 0.0
    %1106 = vmatpush1.msra.mxu0 0.0
    %1107 = vmatprep.subr.mxu0 0.0
    %1108 = vmatpush1.msra.mxu0 %v217
    %1109 = vmatprep.subr.mxu0 0.0
    %1110 = vmatpush1.msra.mxu0 %v214
    %1111 = vmatprep.subr.mxu0 0.0
    %1112 = vmatpush1.msra.mxu0 %v211
    %1113 = vmatprep.subr.mxu0 0.0
    %1114 = vmatpush1.msra.mxu0 %v208
    %1115 = vmatprep.subr.mxu0 0.0
    %1116 = vmatpush2.msra.mxu0 0.0
    %1117 = vmatprep.subr.mxu0 0.0
    %1118 = vmatpush2.msra.mxu0 0.0
    %1119 = vmatprep.subr.mxu0 0.0
    %1120 = vmatpush2.msra.mxu0 0.0
    %1121 = vmatprep.subr.mxu0 0.0
    %1122 = vmatpush2.msra.mxu0 0.0
    %1123 = vmatprep.subr.mxu0 0.0
    %1124 = vmatpush2.msra.mxu0 0.0
    %1125 = vmatprep.subr.mxu0 0.0
    %1126 = vmatpush2.msra.mxu0 0.0
    %1127 = vmatprep.subr.mxu0 0.0
    %1128 = vmatpush2.msra.mxu0 0.0
    %1129 = vmatprep.subr.mxu0 0.0
    %1130 = vmatpush2.msra.mxu0 0.0
    %1131 = vmatprep.subr.mxu0 0.0
    %1132 = vmatpush2.msra.mxu0 0.0
    %1133 = vmatprep.subr.mxu0 0.0
    %1134 = vmatpush2.msra.mxu0 0.0
    %1135 = vmatprep.subr.mxu0 0.0
    %1136 = vmatpush2.msra.mxu0 0.0
    %1137 = vmatprep.subr.mxu0 0.0
    %1138 = vmatpush2.msra.mxu0 0.0
    %1139 = vmatprep.subr.mxu0 0.0
    %1140 = vmatpush2.msra.mxu0 0.0
    %1141 = vmatprep.subr.mxu0 0.0
    %1142 = vmatpush2.msra.mxu0 0.0
    %1143 = vmatprep.subr.mxu0 0.0
    %1144 = vmatpush2.msra.mxu0 0.0
    %1145 = vmatprep.subr.mxu0 0.0
    %1146 = vmatpush2.msra.mxu0 0.0
    %1147 = vmatprep.mubr.f32.mxu0 0.0
    %1148 = vmatmul.mubr.f32.gmra.mxu0 %v1010
    %v1149 = vpop.f32.mrf.mxu0
    %v1150 = vadd.f32 %v570, %v1149
    %v1151 = vpop.f32.mrf.mxu0
    %1152 = vdwg.mxu0
    %v1153 = vadd.f32 %v1079, %v806
    %v1154 = vxor.u32 %v1153, 2147483648
    %v1155 = vmul.f32 %v1154, 1.442695
    %v1156 = vpow.pop %v1155
    %v1157 = vadd.f32 %v1156, 1.0
    %v1158 = vrcp.pop %v1157
    %v1159 = vmul.f32 1.0, %v1158
    %v1160 = vadd.f32 %v1081, %v875
    %v1161 = vxor.u32 %v1160, 2147483648
    %v1162 = vmul.f32 %v1161, 1.442695
    %v1163 = vpow.pop %v1162
    %v1164 = vadd.f32 %v1163, 1.0
    %v1165 = vrcp.pop %v1164
    %v1166 = vmul.f32 1.0, %v1165
    %v1167 = vmul.f32 %v1159, %v877
    %v1168 = vadd.f32 %v1150, %v1167
    %v1169 = vtanh.pop %v1168
    %v1170 = vsub.f32 1.0, %v1166
    %v1171 = vmul.f32 %v1170, %v1169
    %v1172 = vmul.f32 %v1166, %v731
    %v1173 = vadd.f32 %v1171, %v1172
    %1174 = vst.msk [vmem:[#allocation2 + $0x8] sm:$0x3] %vm732, %v1173
    %v1176 = vsel %vm222, %v1173, 0
    %1178 = vmatprep.subr.mxu0 0.0
    %1179 = vmatpush1.msra.mxu0 0.0
    %1180 = vmatprep.subr.mxu0 0.0
    %1181 = vmatpush1.msra.mxu0 0.0
    %1182 = vmatprep.subr.mxu0 0.0
    %1183 = vmatpush1.msra.mxu0 0.0
    %1184 = vmatprep.subr.mxu0 0.0
    %1185 = vmatpush1.msra.mxu0 0.0
    %1186 = vmatprep.subr.mxu0 0.0
    %1187 = vmatpush1.msra.mxu0 0.0
    %1188 = vmatprep.subr.mxu0 0.0
    %1189 = vmatpush1.msra.mxu0 0.0
    %1190 = vmatprep.subr.mxu0 0.0
    %1191 = vmatpush1.msra.mxu0 0.0
    %1192 = vmatprep.subr.mxu0 0.0
    %1193 = vmatpush1.msra.mxu0 0.0
    %1194 = vmatprep.subr.mxu0 0.0
    %1195 = vmatpush1.msra.mxu0 0.0
    %1196 = vmatprep.subr.mxu0 0.0
    %1197 = vmatpush1.msra.mxu0 0.0
    %1198 = vmatprep.subr.mxu0 0.0
    %1199 = vmatpush1.msra.mxu0 0.0
    %1200 = vmatprep.subr.mxu0 0.0
    %1201 = vmatpush1.msra.mxu0 0.0
    %1202 = vmatprep.subr.mxu0 %v203
    %1203 = vmatpush1.msra.mxu0 %v202
    %1204 = vmatprep.subr.mxu0 %v199
    %1205 = vmatpush1.msra.mxu0 %v198
    %1206 = vmatprep.subr.mxu0 %v195
    %1207 = vmatpush1.msra.mxu0 %v194
    %1208 = vmatprep.subr.mxu0 %v191
    %1209 = vmatpush1.msra.mxu0 %v190
    %1210 = vmatprep.subr.mxu0 0.0
    %1211 = vmatpush2.msra.mxu0 0.0
    %1212 = vmatprep.subr.mxu0 0.0
    %1213 = vmatpush2.msra.mxu0 0.0
    %1214 = vmatprep.subr.mxu0 0.0
    %1215 = vmatpush2.msra.mxu0 0.0
    %1216 = vmatprep.subr.mxu0 0.0
    %1217 = vmatpush2.msra.mxu0 0.0
    %1218 = vmatprep.subr.mxu0 0.0
    %1219 = vmatpush2.msra.mxu0 0.0
    %1220 = vmatprep.subr.mxu0 0.0
    %1221 = vmatpush2.msra.mxu0 0.0
    %1222 = vmatprep.subr.mxu0 0.0
    %1223 = vmatpush2.msra.mxu0 0.0
    %1224 = vmatprep.subr.mxu0 0.0
    %1225 = vmatpush2.msra.mxu0 0.0
    %1226 = vmatprep.subr.mxu0 0.0
    %1227 = vmatpush2.msra.mxu0 0.0
    %1228 = vmatprep.subr.mxu0 0.0
    %1229 = vmatpush2.msra.mxu0 0.0
    %1230 = vmatprep.subr.mxu0 0.0
    %1231 = vmatpush2.msra.mxu0 0.0
    %1232 = vmatprep.subr.mxu0 0.0
    %1233 = vmatpush2.msra.mxu0 0.0
    %1234 = vmatprep.subr.mxu0 0.0
    %1235 = vmatpush2.msra.mxu0 0.0
    %1236 = vmatprep.subr.mxu0 0.0
    %1237 = vmatpush2.msra.mxu0 0.0
    %1238 = vmatprep.subr.mxu0 0.0
    %1239 = vmatpush2.msra.mxu0 0.0
    %1240 = vmatprep.subr.mxu0 0.0
    %1241 = vmatpush2.msra.mxu0 0.0
    %1242 = vmatprep.mubr.f32.mxu0 0.0
    %1243 = vmatmul.mubr.f32.gmra.mxu0 %v1176
    %v1244 = vpop.f32.mrf.mxu0
    %v1245 = vadd.f32 %v325, %v1244
    %v1246 = vpop.f32.mrf.mxu0
    %v1247 = vadd.f32 %v329, %v1246
    %1248 = vdwg.mxu0
    %1249 = vmatprep.subr.mxu0 0.0
    %1250 = vmatpush1.msra.mxu0 0.0
    %1251 = vmatprep.subr.mxu0 0.0
    %1252 = vmatpush1.msra.mxu0 0.0
    %1253 = vmatprep.subr.mxu0 0.0
    %1254 = vmatpush1.msra.mxu0 0.0
    %1255 = vmatprep.subr.mxu0 0.0
    %1256 = vmatpush1.msra.mxu0 0.0
    %1257 = vmatprep.subr.mxu0 0.0
    %1258 = vmatpush1.msra.mxu0 0.0
    %1259 = vmatprep.subr.mxu0 0.0
    %1260 = vmatpush1.msra.mxu0 0.0
    %1261 = vmatprep.subr.mxu0 0.0
    %1262 = vmatpush1.msra.mxu0 0.0
    %1263 = vmatprep.subr.mxu0 0.0
    %1264 = vmatpush1.msra.mxu0 0.0
    %1265 = vmatprep.subr.mxu0 0.0
    %1266 = vmatpush1.msra.mxu0 0.0
    %1267 = vmatprep.subr.mxu0 0.0
    %1268 = vmatpush1.msra.mxu0 0.0
    %1269 = vmatprep.subr.mxu0 0.0
    %1270 = vmatpush1.msra.mxu0 0.0
    %1271 = vmatprep.subr.mxu0 0.0
    %1272 = vmatpush1.msra.mxu0 0.0
    %1273 = vmatprep.subr.mxu0 %v205
    %1274 = vmatpush1.msra.mxu0 %v204
    %1275 = vmatprep.subr.mxu0 %v201
    %1276 = vmatpush1.msra.mxu0 %v200
    %1277 = vmatprep.subr.mxu0 %v197
    %1278 = vmatpush1.msra.mxu0 %v196
    %1279 = vmatprep.subr.mxu0 %v193
    %1280 = vmatpush1.msra.mxu0 %v192
    %1281 = vmatprep.subr.mxu0 0.0
    %1282 = vmatpush2.msra.mxu0 0.0
    %1283 = vmatprep.subr.mxu0 0.0
    %1284 = vmatpush2.msra.mxu0 0.0
    %1285 = vmatprep.subr.mxu0 0.0
    %1286 = vmatpush2.msra.mxu0 0.0
    %1287 = vmatprep.subr.mxu0 0.0
    %1288 = vmatpush2.msra.mxu0 0.0
    %1289 = vmatprep.subr.mxu0 0.0
    %1290 = vmatpush2.msra.mxu0 0.0
    %1291 = vmatprep.subr.mxu0 0.0
    %1292 = vmatpush2.msra.mxu0 0.0
    %1293 = vmatprep.subr.mxu0 0.0
    %1294 = vmatpush2.msra.mxu0 0.0
    %1295 = vmatprep.subr.mxu0 0.0
    %1296 = vmatpush2.msra.mxu0 0.0
    %1297 = vmatprep.subr.mxu0 0.0
    %1298 = vmatpush2.msra.mxu0 0.0
    %1299 = vmatprep.subr.mxu0 0.0
    %1300 = vmatpush2.msra.mxu0 0.0
    %1301 = vmatprep.subr.mxu0 0.0
    %1302 = vmatpush2.msra.mxu0 0.0
    %1303 = vmatprep.subr.mxu0 0.0
    %1304 = vmatpush2.msra.mxu0 0.0
    %1305 = vmatprep.subr.mxu0 0.0
    %1306 = vmatpush2.msra.mxu0 0.0
    %1307 = vmatprep.subr.mxu0 0.0
    %1308 = vmatpush2.msra.mxu0 0.0
    %1309 = vmatprep.subr.mxu0 0.0
    %1310 = vmatpush2.msra.mxu0 0.0
    %1311 = vmatprep.subr.mxu0 0.0
    %1312 = vmatpush2.msra.mxu0 0.0
    %1313 = vmatprep.mubr.f32.mxu0 0.0
    %1314 = vmatmul.mubr.f32.gmra.mxu0 %v1176
    %v1315 = vpop.f32.mrf.mxu0
    %v1316 = vadd.f32 %v333, %v1315
    %v1317 = vpop.f32.mrf.mxu0
    %v1318 = vadd.f32 %v337, %v1317
    %1319 = vdwg.mxu0
    %v1322 = vunpack.c.l.s4 1966171168
    %v1323 = vunpack.c.0.s8 %v1322
    %v1324 = vlaneseq
    %v1325 = vshrl.u32 %v1324, 7
    %v1326 = vsub.s32 %v1323, %v1325
    %v1327 = vrot.slane %v1245, %v1326
    %v1328 = vcombine.high %v1327, %v1327
    %v1330 = vunpack.c.l.s4 1966171168
    %v1331 = vunpack.c.0.s8 %v1330
    %v1332 = vlaneseq
    %v1333 = vshrl.u32 %v1332, 7
    %v1334 = vsub.s32 %v1331, %v1333
    %v1335 = vrot.slane %v1327, %v1334
    %v1337 = vunpack.c.l.s4 1966171168
    %v1338 = vunpack.c.0.s8 %v1337
    %v1339 = vlaneseq
    %v1340 = vshrl.u32 %v1339, 7
    %v1341 = vsub.s32 %v1338, %v1340
    %v1342 = vrot.slane %v1328, %v1341
    %v1343 = vlaneseq
    %v1344 = vshrl.u32 %v1343, 7
    %v1345 = vsub.s32 0, %v1344
    %v1346 = vrot.slane %v1335, %v1345
    %v1347 = vlaneseq
    %v1348 = vshrl.u32 %v1347, 7
    %v1349 = vsub.s32 0, %v1348
    %v1350 = vrot.slane %v1342, %v1349
    %v1353 = vadd.f32 %v311, %v1346
    %v1354 = vadd.f32 %v312, %v1350
    %v1355 = vtanh.pop %v1353
    %v1356 = vtanh.pop %v1354
    %v1357 = vmul.f32 %v1355, %v318
    %v1358 = vmul.f32 %v1356, %v318
    %v1359 = vsel %vm222, %v1357, 0.0
    %1360 = vadd.xlane.f32.xlu0 %v1359
    %v1361 = vpop.xlane.xlu0 %1360
    %v1362 = vsel %vm222, %v1358, 0.0
    %1363 = vadd.xlane.f32.xlu0 %v1362
    %v1364 = vpop.xlane.xlu0 %1363
    %v1367 = vlaneseq
    %v1368 = vshrl.u32 %v1367, 7
    %v1369 = vsub.s32 %v927, %v1368
    %v1370 = vrot.slane %v1361, %v1369
    %v1371 = vlaneseq
    %v1372 = vshrl.u32 %v1371, 7
    %v1373 = vsub.s32 %v927, %v1372
    %v1374 = vrot.slane %v1364, %v1373
    %v1375 = vsel %vm936, %v1374, %v1370
    %v1377 = vsel %vm939, %v1375, -inf
    %1378 = vmax.xlane.f32.xlu0 %v1377
    %v1379 = vpop.xlane.xlu0 %1378
    %v1381 = vlaneseq
    %v1382 = vshrl.u32 %v1381, 7
    %v1383 = vsub.s32 0, %v1382
    %v1384 = vrot.slane %v1379, %v1383
    %v1385 = vlaneseq
    %v1386 = vshrl.u32 %v1385, 7
    %v1387 = vsub.s32 1, %v1386
    %v1388 = vrot.slane %v1379, %v1387
    %v1391 = vsub.f32 %v1361, %v1384
    %v1392 = vsub.f32 %v1364, %v1388
    %v1393 = vmul.f32 %v1391, 1.442695
    %v1394 = vpow.pop %v1393
    %v1395 = vmul.f32 %v1392, 1.442695
    %v1396 = vpow.pop %v1395
    %1399 = vset.pattern.permute.xlu0 0
    %1400 = vperm.xlu0 %1399, %v1394
    %v1401 = vpop.permute.xlu0 %1400
    %1402 = vset.pattern.permute.xlu0 0
    %1403 = vperm.xlu0 %1402, %v1396
    %v1404 = vpop.permute.xlu0 %1403
    %v1405 = vlaneseq
    %v1406 = vshrl.u32 %v1405, 7
    %v1407 = vsub.s32 %v927, %v1406
    %v1408 = vrot.slane %v1401, %v1407
    %v1409 = vlaneseq
    %v1410 = vshrl.u32 %v1409, 7
    %v1411 = vsub.s32 %v927, %v1410
    %v1412 = vrot.slane %v1404, %v1411
    %v1413 = vsel %vm936, %v1412, %v1408
    %v1415 = vsel %vm939, %v1413, 0.0
    %1416 = vadd.xlane.f32.xlu0 %v1415
    %v1417 = vpop.xlane.xlu0 %1416
    %v1418 = vrcp.pop %v1417
    %v1421 = vmul.f32 %v1401, %v180
    %v1422 = vmul.f32 %v1404, %v181
    %v1423 = vsel %vm222, %v1421, 0.0
    %v1424 = vrot.slane %v1423, 4
    %v1425 = vadd.f32 %v1423, %v1424
    %v1426 = vrot.slane %v1425, 2
    %v1427 = vadd.f32 %v1425, %v1426
    %v1428 = vrot.slane %v1427, 1
    %v1429 = vadd.f32 %v1427, %v1428
    %v1430 = vsel %vm222, %v1422, 0.0
    %v1431 = vrot.slane %v1430, 4
    %v1432 = vadd.f32 %v1430, %v1431
    %v1433 = vrot.slane %v1432, 2
    %v1434 = vadd.f32 %v1432, %v1433
    %v1435 = vrot.slane %v1434, 1
    %v1436 = vadd.f32 %v1434, %v1435
    %v1438 = vrot.slane %v1418, 1
    %v1441 = vmul.f32 %v1429, %v1418
    %v1442 = vmul.f32 %v1436, %v1438
    %v1445 = vrot.slane %v1442, 7
    %v1446 = vsel %vm936, %v1445, %v1441
    %v1447 = vsel %vm222, %v1446, 0
    %1449 = vmatprep.subr.mxu0 0.0
    %1450 = vmatpush1.msra.mxu0 0.0
    %1451 = vmatprep.subr.mxu0 0.0
    %1452 = vmatpush1.msra.mxu0 0.0
    %1453 = vmatprep.subr.mxu0 0.0
    %1454 = vmatpush1.msra.mxu0 0.0
    %1455 = vmatprep.subr.mxu0 0.0
    %1456 = vmatpush1.msra.mxu0 0.0
    %1457 = vmatprep.subr.mxu0 0.0
    %1458 = vmatpush1.msra.mxu0 0.0
    %1459 = vmatprep.subr.mxu0 0.0
    %1460 = vmatpush1.msra.mxu0 0.0
    %1461 = vmatprep.subr.mxu0 0.0
    %1462 = vmatpush1.msra.mxu0 0.0
    %1463 = vmatprep.subr.mxu0 0.0
    %1464 = vmatpush1.msra.mxu0 0.0
    %1465 = vmatprep.subr.mxu0 0.0
    %1466 = vmatpush1.msra.mxu0 0.0
    %1467 = vmatprep.subr.mxu0 0.0
    %1468 = vmatpush1.msra.mxu0 0.0
    %1469 = vmatprep.subr.mxu0 0.0
    %1470 = vmatpush1.msra.mxu0 0.0
    %1471 = vmatprep.subr.mxu0 0.0
    %1472 = vmatpush1.msra.mxu0 0.0
    %1473 = vmatprep.subr.mxu0 %v216
    %1474 = vmatpush1.msra.mxu0 %v215
    %1475 = vmatprep.subr.mxu0 %v213
    %1476 = vmatpush1.msra.mxu0 %v212
    %1477 = vmatprep.subr.mxu0 %v210
    %1478 = vmatpush1.msra.mxu0 %v209
    %1479 = vmatprep.subr.mxu0 %v207
    %1480 = vmatpush1.msra.mxu0 %v206
    %1481 = vmatprep.subr.mxu0 0.0
    %1482 = vmatpush2.msra.mxu0 0.0
    %1483 = vmatprep.subr.mxu0 0.0
    %1484 = vmatpush2.msra.mxu0 0.0
    %1485 = vmatprep.subr.mxu0 0.0
    %1486 = vmatpush2.msra.mxu0 0.0
    %1487 = vmatprep.subr.mxu0 0.0
    %1488 = vmatpush2.msra.mxu0 0.0
    %1489 = vmatprep.subr.mxu0 0.0
    %1490 = vmatpush2.msra.mxu0 0.0
    %1491 = vmatprep.subr.mxu0 0.0
    %1492 = vmatpush2.msra.mxu0 0.0
    %1493 = vmatprep.subr.mxu0 0.0
    %1494 = vmatpush2.msra.mxu0 0.0
    %1495 = vmatprep.subr.mxu0 0.0
    %1496 = vmatpush2.msra.mxu0 0.0
    %1497 = vmatprep.subr.mxu0 0.0
    %1498 = vmatpush2.msra.mxu0 0.0
    %1499 = vmatprep.subr.mxu0 0.0
    %1500 = vmatpush2.msra.mxu0 0.0
    %1501 = vmatprep.subr.mxu0 0.0
    %1502 = vmatpush2.msra.mxu0 0.0
    %1503 = vmatprep.subr.mxu0 0.0
    %1504 = vmatpush2.msra.mxu0 0.0
    %1505 = vmatprep.subr.mxu0 0.0
    %1506 = vmatpush2.msra.mxu0 0.0
    %1507 = vmatprep.subr.mxu0 0.0
    %1508 = vmatpush2.msra.mxu0 0.0
    %1509 = vmatprep.subr.mxu0 0.0
    %1510 = vmatpush2.msra.mxu0 0.0
    %1511 = vmatprep.subr.mxu0 0.0
    %1512 = vmatpush2.msra.mxu0 0.0
    %1513 = vmatprep.mubr.f32.mxu0 0.0
    %1514 = vmatmul.mubr.f32.gmra.mxu0 %v1447
    %v1515 = vpop.f32.mrf.mxu0
    %v1516 = vadd.f32 %v463, %v1515
    %v1517 = vpop.f32.mrf.mxu0
    %v1518 = vadd.f32 %v465, %v1517
    %1519 = vdwg.mxu0
    %1520 = vmatprep.subr.mxu0 0.0
    %1521 = vmatpush1.msra.mxu0 0.0
    %1522 = vmatprep.subr.mxu0 0.0
    %1523 = vmatpush1.msra.mxu0 0.0
    %1524 = vmatprep.subr.mxu0 0.0
    %1525 = vmatpush1.msra.mxu0 0.0
    %1526 = vmatprep.subr.mxu0 0.0
    %1527 = vmatpush1.msra.mxu0 0.0
    %1528 = vmatprep.subr.mxu0 0.0
    %1529 = vmatpush1.msra.mxu0 0.0
    %1530 = vmatprep.subr.mxu0 0.0
    %1531 = vmatpush1.msra.mxu0 0.0
    %1532 = vmatprep.subr.mxu0 0.0
    %1533 = vmatpush1.msra.mxu0 0.0
    %1534 = vmatprep.subr.mxu0 0.0
    %1535 = vmatpush1.msra.mxu0 0.0
    %1536 = vmatprep.subr.mxu0 0.0
    %1537 = vmatpush1.msra.mxu0 0.0
    %1538 = vmatprep.subr.mxu0 0.0
    %1539 = vmatpush1.msra.mxu0 0.0
    %1540 = vmatprep.subr.mxu0 0.0
    %1541 = vmatpush1.msra.mxu0 0.0
    %1542 = vmatprep.subr.mxu0 0.0
    %1543 = vmatpush1.msra.mxu0 0.0
    %1544 = vmatprep.subr.mxu0 0.0
    %1545 = vmatpush1.msra.mxu0 %v217
    %1546 = vmatprep.subr.mxu0 0.0
    %1547 = vmatpush1.msra.mxu0 %v214
    %1548 = vmatprep.subr.mxu0 0.0
    %1549 = vmatpush1.msra.mxu0 %v211
    %1550 = vmatprep.subr.mxu0 0.0
    %1551 = vmatpush1.msra.mxu0 %v208
    %1552 = vmatprep.subr.mxu0 0.0
    %1553 = vmatpush2.msra.mxu0 0.0
    %1554 = vmatprep.subr.mxu0 0.0
    %1555 = vmatpush2.msra.mxu0 0.0
    %1556 = vmatprep.subr.mxu0 0.0
    %1557 = vmatpush2.msra.mxu0 0.0
    %1558 = vmatprep.subr.mxu0 0.0
    %1559 = vmatpush2.msra.mxu0 0.0
    %1560 = vmatprep.subr.mxu0 0.0
    %1561 = vmatpush2.msra.mxu0 0.0
    %1562 = vmatprep.subr.mxu0 0.0
    %1563 = vmatpush2.msra.mxu0 0.0
    %1564 = vmatprep.subr.mxu0 0.0
    %1565 = vmatpush2.msra.mxu0 0.0
    %1566 = vmatprep.subr.mxu0 0.0
    %1567 = vmatpush2.msra.mxu0 0.0
    %1568 = vmatprep.subr.mxu0 0.0
    %1569 = vmatpush2.msra.mxu0 0.0
    %1570 = vmatprep.subr.mxu0 0.0
    %1571 = vmatpush2.msra.mxu0 0.0
    %1572 = vmatprep.subr.mxu0 0.0
    %1573 = vmatpush2.msra.mxu0 0.0
    %1574 = vmatprep.subr.mxu0 0.0
    %1575 = vmatpush2.msra.mxu0 0.0
    %1576 = vmatprep.subr.mxu0 0.0
    %1577 = vmatpush2.msra.mxu0 0.0
    %1578 = vmatprep.subr.mxu0 0.0
    %1579 = vmatpush2.msra.mxu0 0.0
    %1580 = vmatprep.subr.mxu0 0.0
    %1581 = vmatpush2.msra.mxu0 0.0
    %1582 = vmatprep.subr.mxu0 0.0
    %1583 = vmatpush2.msra.mxu0 0.0
    %1584 = vmatprep.mubr.f32.mxu0 0.0
    %1585 = vmatmul.mubr.f32.gmra.mxu0 %v1447
    %v1586 = vpop.f32.mrf.mxu0
    %v1587 = vadd.f32 %v575, %v1586
    %v1588 = vpop.f32.mrf.mxu0
    %1589 = vdwg.mxu0
    %v1590 = vadd.f32 %v1516, %v1247
    %v1591 = vxor.u32 %v1590, 2147483648
    %v1592 = vmul.f32 %v1591, 1.442695
    %v1593 = vpow.pop %v1592
    %v1594 = vadd.f32 %v1593, 1.0
    %v1595 = vrcp.pop %v1594
    %v1596 = vmul.f32 1.0, %v1595
    %v1597 = vadd.f32 %v1518, %v1316
    %v1598 = vxor.u32 %v1597, 2147483648
    %v1599 = vmul.f32 %v1598, 1.442695
    %v1600 = vpow.pop %v1599
    %v1601 = vadd.f32 %v1600, 1.0
    %v1602 = vrcp.pop %v1601
    %v1603 = vmul.f32 1.0, %v1602
    %v1604 = vmul.f32 %v1596, %v1318
    %v1605 = vadd.f32 %v1587, %v1604
    %v1606 = vtanh.pop %v1605
    %v1607 = vsub.f32 1.0, %v1603
    %v1608 = vmul.f32 %v1607, %v1606
    %v1609 = vmul.f32 %v1603, %v1173
    %v1610 = vadd.f32 %v1608, %v1609
    %1611 = vst.msk [vmem:[#allocation2 + $0x10] sm:$0x3] %vm732, %v1610
    %v1613 = vsel %vm222, %v1610, 0
    %1615 = vmatprep.subr.mxu0 0.0
    %1616 = vmatpush1.msra.mxu0 0.0
    %1617 = vmatprep.subr.mxu0 0.0
    %1618 = vmatpush1.msra.mxu0 0.0
    %1619 = vmatprep.subr.mxu0 0.0
    %1620 = vmatpush1.msra.mxu0 0.0
    %1621 = vmatprep.subr.mxu0 0.0
    %1622 = vmatpush1.msra.mxu0 0.0
    %1623 = vmatprep.subr.mxu0 0.0
    %1624 = vmatpush1.msra.mxu0 0.0
    %1625 = vmatprep.subr.mxu0 0.0
    %1626 = vmatpush1.msra.mxu0 0.0
    %1627 = vmatprep.subr.mxu0 0.0
    %1628 = vmatpush1.msra.mxu0 0.0
    %1629 = vmatprep.subr.mxu0 0.0
    %1630 = vmatpush1.msra.mxu0 0.0
    %1631 = vmatprep.subr.mxu0 0.0
    %1632 = vmatpush1.msra.mxu0 0.0
    %1633 = vmatprep.subr.mxu0 0.0
    %1634 = vmatpush1.msra.mxu0 0.0
    %1635 = vmatprep.subr.mxu0 0.0
    %1636 = vmatpush1.msra.mxu0 0.0
    %1637 = vmatprep.subr.mxu0 0.0
    %1638 = vmatpush1.msra.mxu0 0.0
    %1639 = vmatprep.subr.mxu0 %v203
    %1640 = vmatpush1.msra.mxu0 %v202
    %1641 = vmatprep.subr.mxu0 %v199
    %1642 = vmatpush1.msra.mxu0 %v198
    %1643 = vmatprep.subr.mxu0 %v195
    %1644 = vmatpush1.msra.mxu0 %v194
    %1645 = vmatprep.subr.mxu0 %v191
    %1646 = vmatpush1.msra.mxu0 %v190
    %1647 = vmatprep.subr.mxu0 0.0
    %1648 = vmatpush2.msra.mxu0 0.0
    %1649 = vmatprep.subr.mxu0 0.0
    %1650 = vmatpush2.msra.mxu0 0.0
    %1651 = vmatprep.subr.mxu0 0.0
    %1652 = vmatpush2.msra.mxu0 0.0
    %1653 = vmatprep.subr.mxu0 0.0
    %1654 = vmatpush2.msra.mxu0 0.0
    %1655 = vmatprep.subr.mxu0 0.0
    %1656 = vmatpush2.msra.mxu0 0.0
    %1657 = vmatprep.subr.mxu0 0.0
    %1658 = vmatpush2.msra.mxu0 0.0
    %1659 = vmatprep.subr.mxu0 0.0
    %1660 = vmatpush2.msra.mxu0 0.0
    %1661 = vmatprep.subr.mxu0 0.0
    %1662 = vmatpush2.msra.mxu0 0.0
    %1663 = vmatprep.subr.mxu0 0.0
    %1664 = vmatpush2.msra.mxu0 0.0
    %1665 = vmatprep.subr.mxu0 0.0
    %1666 = vmatpush2.msra.mxu0 0.0
    %1667 = vmatprep.subr.mxu0 0.0
    %1668 = vmatpush2.msra.mxu0 0.0
    %1669 = vmatprep.subr.mxu0 0.0
    %1670 = vmatpush2.msra.mxu0 0.0
    %1671 = vmatprep.subr.mxu0 0.0
    %1672 = vmatpush2.msra.mxu0 0.0
    %1673 = vmatprep.subr.mxu0 0.0
    %1674 = vmatpush2.msra.mxu0 0.0
    %1675 = vmatprep.subr.mxu0 0.0
    %1676 = vmatpush2.msra.mxu0 0.0
    %1677 = vmatprep.subr.mxu0 0.0
    %1678 = vmatpush2.msra.mxu0 0.0
    %1679 = vmatprep.mubr.f32.mxu0 0.0
    %1680 = vmatmul.mubr.f32.gmra.mxu0 %v1613
    %v1681 = vpop.f32.mrf.mxu0
    %v1682 = vadd.f32 %v325, %v1681
    %v1683 = vpop.f32.mrf.mxu0
    %v1684 = vadd.f32 %v329, %v1683
    %1685 = vdwg.mxu0
    %1686 = vmatprep.subr.mxu0 0.0
    %1687 = vmatpush1.msra.mxu0 0.0
    %1688 = vmatprep.subr.mxu0 0.0
    %1689 = vmatpush1.msra.mxu0 0.0
    %1690 = vmatprep.subr.mxu0 0.0
    %1691 = vmatpush1.msra.mxu0 0.0
    %1692 = vmatprep.subr.mxu0 0.0
    %1693 = vmatpush1.msra.mxu0 0.0
    %1694 = vmatprep.subr.mxu0 0.0
    %1695 = vmatpush1.msra.mxu0 0.0
    %1696 = vmatprep.subr.mxu0 0.0
    %1697 = vmatpush1.msra.mxu0 0.0
    %1698 = vmatprep.subr.mxu0 0.0
    %1699 = vmatpush1.msra.mxu0 0.0
    %1700 = vmatprep.subr.mxu0 0.0
    %1701 = vmatpush1.msra.mxu0 0.0
    %1702 = vmatprep.subr.mxu0 0.0
    %1703 = vmatpush1.msra.mxu0 0.0
    %1704 = vmatprep.subr.mxu0 0.0
    %1705 = vmatpush1.msra.mxu0 0.0
    %1706 = vmatprep.subr.mxu0 0.0
    %1707 = vmatpush1.msra.mxu0 0.0
    %1708 = vmatprep.subr.mxu0 0.0
    %1709 = vmatpush1.msra.mxu0 0.0
    %1710 = vmatprep.subr.mxu0 %v205
    %1711 = vmatpush1.msra.mxu0 %v204
    %1712 = vmatprep.subr.mxu0 %v201
    %1713 = vmatpush1.msra.mxu0 %v200
    %1714 = vmatprep.subr.mxu0 %v197
    %1715 = vmatpush1.msra.mxu0 %v196
    %1716 = vmatprep.subr.mxu0 %v193
    %1717 = vmatpush1.msra.mxu0 %v192
    %1718 = vmatprep.subr.mxu0 0.0
    %1719 = vmatpush2.msra.mxu0 0.0
    %1720 = vmatprep.subr.mxu0 0.0
    %1721 = vmatpush2.msra.mxu0 0.0
    %1722 = vmatprep.subr.mxu0 0.0
    %1723 = vmatpush2.msra.mxu0 0.0
    %1724 = vmatprep.subr.mxu0 0.0
    %1725 = vmatpush2.msra.mxu0 0.0
    %1726 = vmatprep.subr.mxu0 0.0
    %1727 = vmatpush2.msra.mxu0 0.0
    %1728 = vmatprep.subr.mxu0 0.0
    %1729 = vmatpush2.msra.mxu0 0.0
    %1730 = vmatprep.subr.mxu0 0.0
    %1731 = vmatpush2.msra.mxu0 0.0
    %1732 = vmatprep.subr.mxu0 0.0
    %1733 = vmatpush2.msra.mxu0 0.0
    %1734 = vmatprep.subr.mxu0 0.0
    %1735 = vmatpush2.msra.mxu0 0.0
    %1736 = vmatprep.subr.mxu0 0.0
    %1737 = vmatpush2.msra.mxu0 0.0
    %1738 = vmatprep.subr.mxu0 0.0
    %1739 = vmatpush2.msra.mxu0 0.0
    %1740 = vmatprep.subr.mxu0 0.0
    %1741 = vmatpush2.msra.mxu0 0.0
    %1742 = vmatprep.subr.mxu0 0.0
    %1743 = vmatpush2.msra.mxu0 0.0
    %1744 = vmatprep.subr.mxu0 0.0
    %1745 = vmatpush2.msra.mxu0 0.0
    %1746 = vmatprep.subr.mxu0 0.0
    %1747 = vmatpush2.msra.mxu0 0.0
    %1748 = vmatprep.subr.mxu0 0.0
    %1749 = vmatpush2.msra.mxu0 0.0
    %1750 = vmatprep.mubr.f32.mxu0 0.0
    %1751 = vmatmul.mubr.f32.gmra.mxu0 %v1613
    %v1752 = vpop.f32.mrf.mxu0
    %v1753 = vadd.f32 %v333, %v1752
    %v1754 = vpop.f32.mrf.mxu0
    %v1755 = vadd.f32 %v337, %v1754
    %1756 = vdwg.mxu0
    %v1759 = vunpack.c.l.s4 1966171168
    %v1760 = vunpack.c.0.s8 %v1759
    %v1761 = vlaneseq
    %v1762 = vshrl.u32 %v1761, 7
    %v1763 = vsub.s32 %v1760, %v1762
    %v1764 = vrot.slane %v1682, %v1763
    %v1765 = vcombine.high %v1764, %v1764
    %v1767 = vunpack.c.l.s4 1966171168
    %v1768 = vunpack.c.0.s8 %v1767
    %v1769 = vlaneseq
    %v1770 = vshrl.u32 %v1769, 7
    %v1771 = vsub.s32 %v1768, %v1770
    %v1772 = vrot.slane %v1764, %v1771
    %v1774 = vunpack.c.l.s4 1966171168
    %v1775 = vunpack.c.0.s8 %v1774
    %v1776 = vlaneseq
    %v1777 = vshrl.u32 %v1776, 7
    %v1778 = vsub.s32 %v1775, %v1777
    %v1779 = vrot.slane %v1765, %v1778
    %v1780 = vlaneseq
    %v1781 = vshrl.u32 %v1780, 7
    %v1782 = vsub.s32 0, %v1781
    %v1783 = vrot.slane %v1772, %v1782
    %v1784 = vlaneseq
    %v1785 = vshrl.u32 %v1784, 7
    %v1786 = vsub.s32 0, %v1785
    %v1787 = vrot.slane %v1779, %v1786
    %v1790 = vadd.f32 %v311, %v1783
    %v1791 = vadd.f32 %v312, %v1787
    %v1792 = vtanh.pop %v1790
    %v1793 = vtanh.pop %v1791
    %v1794 = vmul.f32 %v1792, %v318
    %v1795 = vmul.f32 %v1793, %v318
    %v1796 = vsel %vm222, %v1794, 0.0
    %1797 = vadd.xlane.f32.xlu0 %v1796
    %v1798 = vpop.xlane.xlu0 %1797
    %v1799 = vsel %vm222, %v1795, 0.0
    %1800 = vadd.xlane.f32.xlu0 %v1799
    %v1801 = vpop.xlane.xlu0 %1800
    %v1804 = vlaneseq
    %v1805 = vshrl.u32 %v1804, 7
    %v1806 = vsub.s32 %v927, %v1805
    %v1807 = vrot.slane %v1798, %v1806
    %v1808 = vlaneseq
    %v1809 = vshrl.u32 %v1808, 7
    %v1810 = vsub.s32 %v927, %v1809
    %v1811 = vrot.slane %v1801, %v1810
    %v1812 = vsel %vm936, %v1811, %v1807
    %v1814 = vsel %vm939, %v1812, -inf
    %1815 = vmax.xlane.f32.xlu0 %v1814
    %v1816 = vpop.xlane.xlu0 %1815
    %v1818 = vlaneseq
    %v1819 = vshrl.u32 %v1818, 7
    %v1820 = vsub.s32 0, %v1819
    %v1821 = vrot.slane %v1816, %v1820
    %v1822 = vlaneseq
    %v1823 = vshrl.u32 %v1822, 7
    %v1824 = vsub.s32 1, %v1823
    %v1825 = vrot.slane %v1816, %v1824
    %v1828 = vsub.f32 %v1798, %v1821
    %v1829 = vsub.f32 %v1801, %v1825
    %v1830 = vmul.f32 %v1828, 1.442695
    %v1831 = vpow.pop %v1830
    %v1832 = vmul.f32 %v1829, 1.442695
    %v1833 = vpow.pop %v1832
    %1836 = vset.pattern.permute.xlu0 0
    %1837 = vperm.xlu0 %1836, %v1831
    %v1838 = vpop.permute.xlu0 %1837
    %1839 = vset.pattern.permute.xlu0 0
    %1840 = vperm.xlu0 %1839, %v1833
    %v1841 = vpop.permute.xlu0 %1840
    %v1842 = vlaneseq
    %v1843 = vshrl.u32 %v1842, 7
    %v1844 = vsub.s32 %v927, %v1843
    %v1845 = vrot.slane %v1838, %v1844
    %v1846 = vlaneseq
    %v1847 = vshrl.u32 %v1846, 7
    %v1848 = vsub.s32 %v927, %v1847
    %v1849 = vrot.slane %v1841, %v1848
    %v1850 = vsel %vm936, %v1849, %v1845
    %v1852 = vsel %vm939, %v1850, 0.0
    %1853 = vadd.xlane.f32.xlu0 %v1852
    %v1854 = vpop.xlane.xlu0 %1853
    %v1855 = vrcp.pop %v1854
    %v1858 = vmul.f32 %v1838, %v180
    %v1859 = vmul.f32 %v1841, %v181
    %v1860 = vsel %vm222, %v1858, 0.0
    %v1861 = vrot.slane %v1860, 4
    %v1862 = vadd.f32 %v1860, %v1861
    %v1863 = vrot.slane %v1862, 2
    %v1864 = vadd.f32 %v1862, %v1863
    %v1865 = vrot.slane %v1864, 1
    %v1866 = vadd.f32 %v1864, %v1865
    %v1867 = vsel %vm222, %v1859, 0.0
    %v1868 = vrot.slane %v1867, 4
    %v1869 = vadd.f32 %v1867, %v1868
    %v1870 = vrot.slane %v1869, 2
    %v1871 = vadd.f32 %v1869, %v1870
    %v1872 = vrot.slane %v1871, 1
    %v1873 = vadd.f32 %v1871, %v1872
    %v1875 = vrot.slane %v1855, 1
    %v1878 = vmul.f32 %v1866, %v1855
    %v1879 = vmul.f32 %v1873, %v1875
    %v1882 = vrot.slane %v1879, 7
    %v1883 = vsel %vm936, %v1882, %v1878
    %v1884 = vsel %vm222, %v1883, 0
    %1886 = vmatprep.subr.mxu0 0.0
    %1887 = vmatpush1.msra.mxu0 0.0
    %1888 = vmatprep.subr.mxu0 0.0
    %1889 = vmatpush1.msra.mxu0 0.0
    %1890 = vmatprep.subr.mxu0 0.0
    %1891 = vmatpush1.msra.mxu0 0.0
    %1892 = vmatprep.subr.mxu0 0.0
    %1893 = vmatpush1.msra.mxu0 0.0
    %1894 = vmatprep.subr.mxu0 0.0
    %1895 = vmatpush1.msra.mxu0 0.0
    %1896 = vmatprep.subr.mxu0 0.0
    %1897 = vmatpush1.msra.mxu0 0.0
    %1898 = vmatprep.subr.mxu0 0.0
    %1899 = vmatpush1.msra.mxu0 0.0
    %1900 = vmatprep.subr.mxu0 0.0
    %1901 = vmatpush1.msra.mxu0 0.0
    %1902 = vmatprep.subr.mxu0 0.0
    %1903 = vmatpush1.msra.mxu0 0.0
    %1904 = vmatprep.subr.mxu0 0.0
    %1905 = vmatpush1.msra.mxu0 0.0
    %1906 = vmatprep.subr.mxu0 0.0
    %1907 = vmatpush1.msra.mxu0 0.0
    %1908 = vmatprep.subr.mxu0 0.0
    %1909 = vmatpush1.msra.mxu0 0.0
    %1910 = vmatprep.subr.mxu0 %v216
    %1911 = vmatpush1.msra.mxu0 %v215
    %1912 = vmatprep.subr.mxu0 %v213
    %1913 = vmatpush1.msra.mxu0 %v212
    %1914 = vmatprep.subr.mxu0 %v210
    %1915 = vmatpush1.msra.mxu0 %v209
    %1916 = vmatprep.subr.mxu0 %v207
    %1917 = vmatpush1.msra.mxu0 %v206
    %1918 = vmatprep.subr.mxu0 0.0
    %1919 = vmatpush2.msra.mxu0 0.0
    %1920 = vmatprep.subr.mxu0 0.0
    %1921 = vmatpush2.msra.mxu0 0.0
    %1922 = vmatprep.subr.mxu0 0.0
    %1923 = vmatpush2.msra.mxu0 0.0
    %1924 = vmatprep.subr.mxu0 0.0
    %1925 = vmatpush2.msra.mxu0 0.0
    %1926 = vmatprep.subr.mxu0 0.0
    %1927 = vmatpush2.msra.mxu0 0.0
    %1928 = vmatprep.subr.mxu0 0.0
    %1929 = vmatpush2.msra.mxu0 0.0
    %1930 = vmatprep.subr.mxu0 0.0
    %1931 = vmatpush2.msra.mxu0 0.0
    %1932 = vmatprep.subr.mxu0 0.0
    %1933 = vmatpush2.msra.mxu0 0.0
    %1934 = vmatprep.subr.mxu0 0.0
    %1935 = vmatpush2.msra.mxu0 0.0
    %1936 = vmatprep.subr.mxu0 0.0
    %1937 = vmatpush2.msra.mxu0 0.0
    %1938 = vmatprep.subr.mxu0 0.0
    %1939 = vmatpush2.msra.mxu0 0.0
    %1940 = vmatprep.subr.mxu0 0.0
    %1941 = vmatpush2.msra.mxu0 0.0
    %1942 = vmatprep.subr.mxu0 0.0
    %1943 = vmatpush2.msra.mxu0 0.0
    %1944 = vmatprep.subr.mxu0 0.0
    %1945 = vmatpush2.msra.mxu0 0.0
    %1946 = vmatprep.subr.mxu0 0.0
    %1947 = vmatpush2.msra.mxu0 0.0
    %1948 = vmatprep.subr.mxu0 0.0
    %1949 = vmatpush2.msra.mxu0 0.0
    %1950 = vmatprep.mubr.f32.mxu0 0.0
    %1951 = vmatmul.mubr.f32.gmra.mxu0 %v1884
    %v1952 = vpop.f32.mrf.mxu0
    %v1953 = vadd.f32 %v469, %v1952
    %v1954 = vpop.f32.mrf.mxu0
    %v1955 = vadd.f32 %v471, %v1954
    %1956 = vdwg.mxu0
    %1957 = vmatprep.subr.mxu0 0.0
    %1958 = vmatpush1.msra.mxu0 0.0
    %1959 = vmatprep.subr.mxu0 0.0
    %1960 = vmatpush1.msra.mxu0 0.0
    %1961 = vmatprep.subr.mxu0 0.0
    %1962 = vmatpush1.msra.mxu0 0.0
    %1963 = vmatprep.subr.mxu0 0.0
    %1964 = vmatpush1.msra.mxu0 0.0
    %1965 = vmatprep.subr.mxu0 0.0
    %1966 = vmatpush1.msra.mxu0 0.0
    %1967 = vmatprep.subr.mxu0 0.0
    %1968 = vmatpush1.msra.mxu0 0.0
    %1969 = vmatprep.subr.mxu0 0.0
    %1970 = vmatpush1.msra.mxu0 0.0
    %1971 = vmatprep.subr.mxu0 0.0
    %1972 = vmatpush1.msra.mxu0 0.0
    %1973 = vmatprep.subr.mxu0 0.0
    %1974 = vmatpush1.msra.mxu0 0.0
    %1975 = vmatprep.subr.mxu0 0.0
    %1976 = vmatpush1.msra.mxu0 0.0
    %1977 = vmatprep.subr.mxu0 0.0
    %1978 = vmatpush1.msra.mxu0 0.0
    %1979 = vmatprep.subr.mxu0 0.0
    %1980 = vmatpush1.msra.mxu0 0.0
    %1981 = vmatprep.subr.mxu0 0.0
    %1982 = vmatpush1.msra.mxu0 %v217
    %1983 = vmatprep.subr.mxu0 0.0
    %1984 = vmatpush1.msra.mxu0 %v214
    %1985 = vmatprep.subr.mxu0 0.0
    %1986 = vmatpush1.msra.mxu0 %v211
    %1987 = vmatprep.subr.mxu0 0.0
    %1988 = vmatpush1.msra.mxu0 %v208
    %1989 = vmatprep.subr.mxu0 0.0
    %1990 = vmatpush2.msra.mxu0 0.0
    %1991 = vmatprep.subr.mxu0 0.0
    %1992 = vmatpush2.msra.mxu0 0.0
    %1993 = vmatprep.subr.mxu0 0.0
    %1994 = vmatpush2.msra.mxu0 0.0
    %1995 = vmatprep.subr.mxu0 0.0
    %1996 = vmatpush2.msra.mxu0 0.0
    %1997 = vmatprep.subr.mxu0 0.0
    %1998 = vmatpush2.msra.mxu0 0.0
    %1999 = vmatprep.subr.mxu0 0.0
    %2000 = vmatpush2.msra.mxu0 0.0
    %2001 = vmatprep.subr.mxu0 0.0
    %2002 = vmatpush2.msra.mxu0 0.0
    %2003 = vmatprep.subr.mxu0 0.0
    %2004 = vmatpush2.msra.mxu0 0.0
    %2005 = vmatprep.subr.mxu0 0.0
    %2006 = vmatpush2.msra.mxu0 0.0
    %2007 = vmatprep.subr.mxu0 0.0
    %2008 = vmatpush2.msra.mxu0 0.0
    %2009 = vmatprep.subr.mxu0 0.0
    %2010 = vmatpush2.msra.mxu0 0.0
    %2011 = vmatprep.subr.mxu0 0.0
    %2012 = vmatpush2.msra.mxu0 0.0
    %2013 = vmatprep.subr.mxu0 0.0
    %2014 = vmatpush2.msra.mxu0 0.0
    %2015 = vmatprep.subr.mxu0 0.0
    %2016 = vmatpush2.msra.mxu0 0.0
    %2017 = vmatprep.subr.mxu0 0.0
    %2018 = vmatpush2.msra.mxu0 0.0
    %2019 = vmatprep.subr.mxu0 0.0
    %2020 = vmatpush2.msra.mxu0 0.0
    %2021 = vmatprep.mubr.f32.mxu0 0.0
    %2022 = vmatmul.mubr.f32.gmra.mxu0 %v1884
    %v2023 = vpop.f32.mrf.mxu0
    %v2024 = vadd.f32 %v580, %v2023
    %v2025 = vpop.f32.mrf.mxu0
    %2026 = vdwg.mxu0
    %v2027 = vadd.f32 %v1953, %v1684
    %v2028 = vxor.u32 %v2027, 2147483648
    %v2029 = vmul.f32 %v2028, 1.442695
    %v2030 = vpow.pop %v2029
    %v2031 = vadd.f32 %v2030, 1.0
    %v2032 = vrcp.pop %v2031
    %v2033 = vmul.f32 1.0, %v2032
    %v2034 = vadd.f32 %v1955, %v1753
    %v2035 = vxor.u32 %v2034, 2147483648
    %v2036 = vmul.f32 %v2035, 1.442695
    %v2037 = vpow.pop %v2036
    %v2038 = vadd.f32 %v2037, 1.0
    %v2039 = vrcp.pop %v2038
    %v2040 = vmul.f32 1.0, %v2039
    %v2041 = vmul.f32 %v2033, %v1755
    %v2042 = vadd.f32 %v2024, %v2041
    %v2043 = vtanh.pop %v2042
    %v2044 = vsub.f32 1.0, %v2040
    %v2045 = vmul.f32 %v2044, %v2043
    %v2046 = vmul.f32 %v2040, %v1610
    %v2047 = vadd.f32 %v2045, %v2046
    %2048 = vst.msk [vmem:[#allocation2 + $0x18] sm:$0x3] %vm732, %v2047
    %v2050 = vsel %vm222, %v2047, 0
    %2052 = vmatprep.subr.mxu0 0.0
    %2053 = vmatpush1.msra.mxu0 0.0
    %2054 = vmatprep.subr.mxu0 0.0
    %2055 = vmatpush1.msra.mxu0 0.0
    %2056 = vmatprep.subr.mxu0 0.0
    %2057 = vmatpush1.msra.mxu0 0.0
    %2058 = vmatprep.subr.mxu0 0.0
    %2059 = vmatpush1.msra.mxu0 0.0
    %2060 = vmatprep.subr.mxu0 0.0
    %2061 = vmatpush1.msra.mxu0 0.0
    %2062 = vmatprep.subr.mxu0 0.0
    %2063 = vmatpush1.msra.mxu0 0.0
    %2064 = vmatprep.subr.mxu0 0.0
    %2065 = vmatpush1.msra.mxu0 0.0
    %2066 = vmatprep.subr.mxu0 0.0
    %2067 = vmatpush1.msra.mxu0 0.0
    %2068 = vmatprep.subr.mxu0 0.0
    %2069 = vmatpush1.msra.mxu0 0.0
    %2070 = vmatprep.subr.mxu0 0.0
    %2071 = vmatpush1.msra.mxu0 0.0
    %2072 = vmatprep.subr.mxu0 0.0
    %2073 = vmatpush1.msra.mxu0 0.0
    %2074 = vmatprep.subr.mxu0 0.0
    %2075 = vmatpush1.msra.mxu0 0.0
    %2076 = vmatprep.subr.mxu0 %v203
    %2077 = vmatpush1.msra.mxu0 %v202
    %2078 = vmatprep.subr.mxu0 %v199
    %2079 = vmatpush1.msra.mxu0 %v198
    %2080 = vmatprep.subr.mxu0 %v195
    %2081 = vmatpush1.msra.mxu0 %v194
    %2082 = vmatprep.subr.mxu0 %v191
    %2083 = vmatpush1.msra.mxu0 %v190
    %2084 = vmatprep.subr.mxu0 0.0
    %2085 = vmatpush2.msra.mxu0 0.0
    %2086 = vmatprep.subr.mxu0 0.0
    %2087 = vmatpush2.msra.mxu0 0.0
    %2088 = vmatprep.subr.mxu0 0.0
    %2089 = vmatpush2.msra.mxu0 0.0
    %2090 = vmatprep.subr.mxu0 0.0
    %2091 = vmatpush2.msra.mxu0 0.0
    %2092 = vmatprep.subr.mxu0 0.0
    %2093 = vmatpush2.msra.mxu0 0.0
    %2094 = vmatprep.subr.mxu0 0.0
    %2095 = vmatpush2.msra.mxu0 0.0
    %2096 = vmatprep.subr.mxu0 0.0
    %2097 = vmatpush2.msra.mxu0 0.0
    %2098 = vmatprep.subr.mxu0 0.0
    %2099 = vmatpush2.msra.mxu0 0.0
    %2100 = vmatprep.subr.mxu0 0.0
    %2101 = vmatpush2.msra.mxu0 0.0
    %2102 = vmatprep.subr.mxu0 0.0
    %2103 = vmatpush2.msra.mxu0 0.0
    %2104 = vmatprep.subr.mxu0 0.0
    %2105 = vmatpush2.msra.mxu0 0.0
    %2106 = vmatprep.subr.mxu0 0.0
    %2107 = vmatpush2.msra.mxu0 0.0
    %2108 = vmatprep.subr.mxu0 0.0
    %2109 = vmatpush2.msra.mxu0 0.0
    %2110 = vmatprep.subr.mxu0 0.0
    %2111 = vmatpush2.msra.mxu0 0.0
    %2112 = vmatprep.subr.mxu0 0.0
    %2113 = vmatpush2.msra.mxu0 0.0
    %2114 = vmatprep.subr.mxu0 0.0
    %2115 = vmatpush2.msra.mxu0 0.0
    %2116 = vmatprep.mubr.f32.mxu0 0.0
    %2117 = vmatmul.mubr.f32.gmra.mxu0 %v2050
    %v2118 = vpop.f32.mrf.mxu0
    %v2119 = vadd.f32 %v325, %v2118
    %v2120 = vpop.f32.mrf.mxu0
    %v2121 = vadd.f32 %v329, %v2120
    %2122 = vdwg.mxu0
    %2123 = vmatprep.subr.mxu0 0.0
    %2124 = vmatpush1.msra.mxu0 0.0
    %2125 = vmatprep.subr.mxu0 0.0
    %2126 = vmatpush1.msra.mxu0 0.0
    %2127 = vmatprep.subr.mxu0 0.0
    %2128 = vmatpush1.msra.mxu0 0.0
    %2129 = vmatprep.subr.mxu0 0.0
    %2130 = vmatpush1.msra.mxu0 0.0
    %2131 = vmatprep.subr.mxu0 0.0
    %2132 = vmatpush1.msra.mxu0 0.0
    %2133 = vmatprep.subr.mxu0 0.0
    %2134 = vmatpush1.msra.mxu0 0.0
    %2135 = vmatprep.subr.mxu0 0.0
    %2136 = vmatpush1.msra.mxu0 0.0
    %2137 = vmatprep.subr.mxu0 0.0
    %2138 = vmatpush1.msra.mxu0 0.0
    %2139 = vmatprep.subr.mxu0 0.0
    %2140 = vmatpush1.msra.mxu0 0.0
    %2141 = vmatprep.subr.mxu0 0.0
    %2142 = vmatpush1.msra.mxu0 0.0
    %2143 = vmatprep.subr.mxu0 0.0
    %2144 = vmatpush1.msra.mxu0 0.0
    %2145 = vmatprep.subr.mxu0 0.0
    %2146 = vmatpush1.msra.mxu0 0.0
    %2147 = vmatprep.subr.mxu0 %v205
    %2148 = vmatpush1.msra.mxu0 %v204
    %2149 = vmatprep.subr.mxu0 %v201
    %2150 = vmatpush1.msra.mxu0 %v200
    %2151 = vmatprep.subr.mxu0 %v197
    %2152 = vmatpush1.msra.mxu0 %v196
    %2153 = vmatprep.subr.mxu0 %v193
    %2154 = vmatpush1.msra.mxu0 %v192
    %2155 = vmatprep.subr.mxu0 0.0
    %2156 = vmatpush2.msra.mxu0 0.0
    %2157 = vmatprep.subr.mxu0 0.0
    %2158 = vmatpush2.msra.mxu0 0.0
    %2159 = vmatprep.subr.mxu0 0.0
    %2160 = vmatpush2.msra.mxu0 0.0
    %2161 = vmatprep.subr.mxu0 0.0
    %2162 = vmatpush2.msra.mxu0 0.0
    %2163 = vmatprep.subr.mxu0 0.0
    %2164 = vmatpush2.msra.mxu0 0.0
    %2165 = vmatprep.subr.mxu0 0.0
    %2166 = vmatpush2.msra.mxu0 0.0
    %2167 = vmatprep.subr.mxu0 0.0
    %2168 = vmatpush2.msra.mxu0 0.0
    %2169 = vmatprep.subr.mxu0 0.0
    %2170 = vmatpush2.msra.mxu0 0.0
    %2171 = vmatprep.subr.mxu0 0.0
    %2172 = vmatpush2.msra.mxu0 0.0
    %2173 = vmatprep.subr.mxu0 0.0
    %2174 = vmatpush2.msra.mxu0 0.0
    %2175 = vmatprep.subr.mxu0 0.0
    %2176 = vmatpush2.msra.mxu0 0.0
    %2177 = vmatprep.subr.mxu0 0.0
    %2178 = vmatpush2.msra.mxu0 0.0
    %2179 = vmatprep.subr.mxu0 0.0
    %2180 = vmatpush2.msra.mxu0 0.0
    %2181 = vmatprep.subr.mxu0 0.0
    %2182 = vmatpush2.msra.mxu0 0.0
    %2183 = vmatprep.subr.mxu0 0.0
    %2184 = vmatpush2.msra.mxu0 0.0
    %2185 = vmatprep.subr.mxu0 0.0
    %2186 = vmatpush2.msra.mxu0 0.0
    %2187 = vmatprep.mubr.f32.mxu0 0.0
    %2188 = vmatmul.mubr.f32.gmra.mxu0 %v2050
    %v2189 = vpop.f32.mrf.mxu0
    %v2190 = vadd.f32 %v333, %v2189
    %v2191 = vpop.f32.mrf.mxu0
    %v2192 = vadd.f32 %v337, %v2191
    %2193 = vdwg.mxu0
    %v2196 = vunpack.c.l.s4 1966171168
    %v2197 = vunpack.c.0.s8 %v2196
    %v2198 = vlaneseq
    %v2199 = vshrl.u32 %v2198, 7
    %v2200 = vsub.s32 %v2197, %v2199
    %v2201 = vrot.slane %v2119, %v2200
    %v2202 = vcombine.high %v2201, %v2201
    %v2204 = vunpack.c.l.s4 1966171168
    %v2205 = vunpack.c.0.s8 %v2204
    %v2206 = vlaneseq
    %v2207 = vshrl.u32 %v2206, 7
    %v2208 = vsub.s32 %v2205, %v2207
    %v2209 = vrot.slane %v2201, %v2208
    %v2211 = vunpack.c.l.s4 1966171168
    %v2212 = vunpack.c.0.s8 %v2211
    %v2213 = vlaneseq
    %v2214 = vshrl.u32 %v2213, 7
    %v2215 = vsub.s32 %v2212, %v2214
    %v2216 = vrot.slane %v2202, %v2215
    %v2217 = vlaneseq
    %v2218 = vshrl.u32 %v2217, 7
    %v2219 = vsub.s32 0, %v2218
    %v2220 = vrot.slane %v2209, %v2219
    %v2221 = vlaneseq
    %v2222 = vshrl.u32 %v2221, 7
    %v2223 = vsub.s32 0, %v2222
    %v2224 = vrot.slane %v2216, %v2223
    %v2227 = vadd.f32 %v311, %v2220
    %v2228 = vadd.f32 %v312, %v2224
    %v2229 = vtanh.pop %v2227
    %v2230 = vtanh.pop %v2228
    %v2231 = vmul.f32 %v2229, %v318
    %v2232 = vmul.f32 %v2230, %v318
    %v2233 = vsel %vm222, %v2231, 0.0
    %2234 = vadd.xlane.f32.xlu0 %v2233
    %v2235 = vpop.xlane.xlu0 %2234
    %v2236 = vsel %vm222, %v2232, 0.0
    %2237 = vadd.xlane.f32.xlu0 %v2236
    %v2238 = vpop.xlane.xlu0 %2237
    %v2241 = vlaneseq
    %v2242 = vshrl.u32 %v2241, 7
    %v2243 = vsub.s32 %v927, %v2242
    %v2244 = vrot.slane %v2235, %v2243
    %v2245 = vlaneseq
    %v2246 = vshrl.u32 %v2245, 7
    %v2247 = vsub.s32 %v927, %v2246
    %v2248 = vrot.slane %v2238, %v2247
    %v2249 = vsel %vm936, %v2248, %v2244
    %v2251 = vsel %vm939, %v2249, -inf
    %2252 = vmax.xlane.f32.xlu0 %v2251
    %v2253 = vpop.xlane.xlu0 %2252
    %v2255 = vlaneseq
    %v2256 = vshrl.u32 %v2255, 7
    %v2257 = vsub.s32 0, %v2256
    %v2258 = vrot.slane %v2253, %v2257
    %v2259 = vlaneseq
    %v2260 = vshrl.u32 %v2259, 7
    %v2261 = vsub.s32 1, %v2260
    %v2262 = vrot.slane %v2253, %v2261
    %v2265 = vsub.f32 %v2235, %v2258
    %v2266 = vsub.f32 %v2238, %v2262
    %v2267 = vmul.f32 %v2265, 1.442695
    %v2268 = vpow.pop %v2267
    %v2269 = vmul.f32 %v2266, 1.442695
    %v2270 = vpow.pop %v2269
    %2273 = vset.pattern.permute.xlu0 0
    %2274 = vperm.xlu0 %2273, %v2268
    %v2275 = vpop.permute.xlu0 %2274
    %2276 = vset.pattern.permute.xlu0 0
    %2277 = vperm.xlu0 %2276, %v2270
    %v2278 = vpop.permute.xlu0 %2277
    %v2279 = vlaneseq
    %v2280 = vshrl.u32 %v2279, 7
    %v2281 = vsub.s32 %v927, %v2280
    %v2282 = vrot.slane %v2275, %v2281
    %v2283 = vlaneseq
    %v2284 = vshrl.u32 %v2283, 7
    %v2285 = vsub.s32 %v927, %v2284
    %v2286 = vrot.slane %v2278, %v2285
    %v2287 = vsel %vm936, %v2286, %v2282
    %v2289 = vsel %vm939, %v2287, 0.0
    %2290 = vadd.xlane.f32.xlu0 %v2289
    %v2291 = vpop.xlane.xlu0 %2290
    %v2292 = vrcp.pop %v2291
    %v2295 = vmul.f32 %v2275, %v180
    %v2296 = vmul.f32 %v2278, %v181
    %v2297 = vsel %vm222, %v2295, 0.0
    %v2298 = vrot.slane %v2297, 4
    %v2299 = vadd.f32 %v2297, %v2298
    %v2300 = vrot.slane %v2299, 2
    %v2301 = vadd.f32 %v2299, %v2300
    %v2302 = vrot.slane %v2301, 1
    %v2303 = vadd.f32 %v2301, %v2302
    %v2304 = vsel %vm222, %v2296, 0.0
    %v2305 = vrot.slane %v2304, 4
    %v2306 = vadd.f32 %v2304, %v2305
    %v2307 = vrot.slane %v2306, 2
    %v2308 = vadd.f32 %v2306, %v2307
    %v2309 = vrot.slane %v2308, 1
    %v2310 = vadd.f32 %v2308, %v2309
    %v2312 = vrot.slane %v2292, 1
    %v2315 = vmul.f32 %v2303, %v2292
    %v2316 = vmul.f32 %v2310, %v2312
    %v2319 = vrot.slane %v2316, 7
    %v2320 = vsel %vm936, %v2319, %v2315
    %v2321 = vsel %vm222, %v2320, 0
    %2323 = vmatprep.subr.mxu0 0.0
    %2324 = vmatpush1.msra.mxu0 0.0
    %2325 = vmatprep.subr.mxu0 0.0
    %2326 = vmatpush1.msra.mxu0 0.0
    %2327 = vmatprep.subr.mxu0 0.0
    %2328 = vmatpush1.msra.mxu0 0.0
    %2329 = vmatprep.subr.mxu0 0.0
    %2330 = vmatpush1.msra.mxu0 0.0
    %2331 = vmatprep.subr.mxu0 0.0
    %2332 = vmatpush1.msra.mxu0 0.0
    %2333 = vmatprep.subr.mxu0 0.0
    %2334 = vmatpush1.msra.mxu0 0.0
    %2335 = vmatprep.subr.mxu0 0.0
    %2336 = vmatpush1.msra.mxu0 0.0
    %2337 = vmatprep.subr.mxu0 0.0
    %2338 = vmatpush1.msra.mxu0 0.0
    %2339 = vmatprep.subr.mxu0 0.0
    %2340 = vmatpush1.msra.mxu0 0.0
    %2341 = vmatprep.subr.mxu0 0.0
    %2342 = vmatpush1.msra.mxu0 0.0
    %2343 = vmatprep.subr.mxu0 0.0
    %2344 = vmatpush1.msra.mxu0 0.0
    %2345 = vmatprep.subr.mxu0 0.0
    %2346 = vmatpush1.msra.mxu0 0.0
    %2347 = vmatprep.subr.mxu0 %v216
    %2348 = vmatpush1.msra.mxu0 %v215
    %2349 = vmatprep.subr.mxu0 %v213
    %2350 = vmatpush1.msra.mxu0 %v212
    %2351 = vmatprep.subr.mxu0 %v210
    %2352 = vmatpush1.msra.mxu0 %v209
    %2353 = vmatprep.subr.mxu0 %v207
    %2354 = vmatpush1.msra.mxu0 %v206
    %2355 = vmatprep.subr.mxu0 0.0
    %2356 = vmatpush2.msra.mxu0 0.0
    %2357 = vmatprep.subr.mxu0 0.0
    %2358 = vmatpush2.msra.mxu0 0.0
    %2359 = vmatprep.subr.mxu0 0.0
    %2360 = vmatpush2.msra.mxu0 0.0
    %2361 = vmatprep.subr.mxu0 0.0
    %2362 = vmatpush2.msra.mxu0 0.0
    %2363 = vmatprep.subr.mxu0 0.0
    %2364 = vmatpush2.msra.mxu0 0.0
    %2365 = vmatprep.subr.mxu0 0.0
    %2366 = vmatpush2.msra.mxu0 0.0
    %2367 = vmatprep.subr.mxu0 0.0
    %2368 = vmatpush2.msra.mxu0 0.0
    %2369 = vmatprep.subr.mxu0 0.0
    %2370 = vmatpush2.msra.mxu0 0.0
    %2371 = vmatprep.subr.mxu0 0.0
    %2372 = vmatpush2.msra.mxu0 0.0
    %2373 = vmatprep.subr.mxu0 0.0
    %2374 = vmatpush2.msra.mxu0 0.0
    %2375 = vmatprep.subr.mxu0 0.0
    %2376 = vmatpush2.msra.mxu0 0.0
    %2377 = vmatprep.subr.mxu0 0.0
    %2378 = vmatpush2.msra.mxu0 0.0
    %2379 = vmatprep.subr.mxu0 0.0
    %2380 = vmatpush2.msra.mxu0 0.0
    %2381 = vmatprep.subr.mxu0 0.0
    %2382 = vmatpush2.msra.mxu0 0.0
    %2383 = vmatprep.subr.mxu0 0.0
    %2384 = vmatpush2.msra.mxu0 0.0
    %2385 = vmatprep.subr.mxu0 0.0
    %2386 = vmatpush2.msra.mxu0 0.0
    %2387 = vmatprep.mubr.f32.mxu0 0.0
    %2388 = vmatmul.mubr.f32.gmra.mxu0 %v2321
    %v2389 = vpop.f32.mrf.mxu0
    %v2390 = vadd.f32 %v475, %v2389
    %v2391 = vpop.f32.mrf.mxu0
    %v2392 = vadd.f32 %v477, %v2391
    %2393 = vdwg.mxu0
    %2394 = vmatprep.subr.mxu0 0.0
    %2395 = vmatpush1.msra.mxu0 0.0
    %2396 = vmatprep.subr.mxu0 0.0
    %2397 = vmatpush1.msra.mxu0 0.0
    %2398 = vmatprep.subr.mxu0 0.0
    %2399 = vmatpush1.msra.mxu0 0.0
    %2400 = vmatprep.subr.mxu0 0.0
    %2401 = vmatpush1.msra.mxu0 0.0
    %2402 = vmatprep.subr.mxu0 0.0
    %2403 = vmatpush1.msra.mxu0 0.0
    %2404 = vmatprep.subr.mxu0 0.0
    %2405 = vmatpush1.msra.mxu0 0.0
    %2406 = vmatprep.subr.mxu0 0.0
    %2407 = vmatpush1.msra.mxu0 0.0
    %2408 = vmatprep.subr.mxu0 0.0
    %2409 = vmatpush1.msra.mxu0 0.0
    %2410 = vmatprep.subr.mxu0 0.0
    %2411 = vmatpush1.msra.mxu0 0.0
    %2412 = vmatprep.subr.mxu0 0.0
    %2413 = vmatpush1.msra.mxu0 0.0
    %2414 = vmatprep.subr.mxu0 0.0
    %2415 = vmatpush1.msra.mxu0 0.0
    %2416 = vmatprep.subr.mxu0 0.0
    %2417 = vmatpush1.msra.mxu0 0.0
    %2418 = vmatprep.subr.mxu0 0.0
    %2419 = vmatpush1.msra.mxu0 %v217
    %2420 = vmatprep.subr.mxu0 0.0
    %2421 = vmatpush1.msra.mxu0 %v214
    %2422 = vmatprep.subr.mxu0 0.0
    %2423 = vmatpush1.msra.mxu0 %v211
    %2424 = vmatprep.subr.mxu0 0.0
    %2425 = vmatpush1.msra.mxu0 %v208
    %2426 = vmatprep.subr.mxu0 0.0
    %2427 = vmatpush2.msra.mxu0 0.0
    %2428 = vmatprep.subr.mxu0 0.0
    %2429 = vmatpush2.msra.mxu0 0.0
    %2430 = vmatprep.subr.mxu0 0.0
    %2431 = vmatpush2.msra.mxu0 0.0
    %2432 = vmatprep.subr.mxu0 0.0
    %2433 = vmatpush2.msra.mxu0 0.0
    %2434 = vmatprep.subr.mxu0 0.0
    %2435 = vmatpush2.msra.mxu0 0.0
    %2436 = vmatprep.subr.mxu0 0.0
    %2437 = vmatpush2.msra.mxu0 0.0
    %2438 = vmatprep.subr.mxu0 0.0
    %2439 = vmatpush2.msra.mxu0 0.0
    %2440 = vmatprep.subr.mxu0 0.0
    %2441 = vmatpush2.msra.mxu0 0.0
    %2442 = vmatprep.subr.mxu0 0.0
    %2443 = vmatpush2.msra.mxu0 0.0
    %2444 = vmatprep.subr.mxu0 0.0
    %2445 = vmatpush2.msra.mxu0 0.0
    %2446 = vmatprep.subr.mxu0 0.0
    %2447 = vmatpush2.msra.mxu0 0.0
    %2448 = vmatprep.subr.mxu0 0.0
    %2449 = vmatpush2.msra.mxu0 0.0
    %2450 = vmatprep.subr.mxu0 0.0
    %2451 = vmatpush2.msra.mxu0 0.0
    %2452 = vmatprep.subr.mxu0 0.0
    %2453 = vmatpush2.msra.mxu0 0.0
    %2454 = vmatprep.subr.mxu0 0.0
    %2455 = vmatpush2.msra.mxu0 0.0
    %2456 = vmatprep.subr.mxu0 0.0
    %2457 = vmatpush2.msra.mxu0 0.0
    %2458 = vmatprep.mubr.f32.mxu0 0.0
    %2459 = vmatmul.mubr.f32.gmra.mxu0 %v2321
    %v2460 = vpop.f32.mrf.mxu0
    %v2461 = vadd.f32 %v585, %v2460
    %v2462 = vpop.f32.mrf.mxu0
    %2463 = vdwg.mxu0
    %v2464 = vadd.f32 %v2390, %v2121
    %v2465 = vxor.u32 %v2464, 2147483648
    %v2466 = vmul.f32 %v2465, 1.442695
    %v2467 = vpow.pop %v2466
    %v2468 = vadd.f32 %v2467, 1.0
    %v2469 = vrcp.pop %v2468
    %v2470 = vmul.f32 1.0, %v2469
    %v2471 = vadd.f32 %v2392, %v2190
    %v2472 = vxor.u32 %v2471, 2147483648
    %v2473 = vmul.f32 %v2472, 1.442695
    %v2474 = vpow.pop %v2473
    %v2475 = vadd.f32 %v2474, 1.0
    %v2476 = vrcp.pop %v2475
    %v2477 = vmul.f32 1.0, %v2476
    %v2478 = vmul.f32 %v2470, %v2192
    %v2479 = vadd.f32 %v2461, %v2478
    %v2480 = vtanh.pop %v2479
    %v2481 = vsub.f32 1.0, %v2477
    %v2482 = vmul.f32 %v2481, %v2480
    %v2483 = vmul.f32 %v2477, %v2047
    %v2484 = vadd.f32 %v2482, %v2483
    %2485 = vst.msk [vmem:[#allocation2 + $0x20] sm:$0x3] %vm732, %v2484
    %v2487 = vsel %vm222, %v2484, 0
    %2489 = vmatprep.subr.mxu0 0.0
    %2490 = vmatpush1.msra.mxu0 0.0
    %2491 = vmatprep.subr.mxu0 0.0
    %2492 = vmatpush1.msra.mxu0 0.0
    %2493 = vmatprep.subr.mxu0 0.0
    %2494 = vmatpush1.msra.mxu0 0.0
    %2495 = vmatprep.subr.mxu0 0.0
    %2496 = vmatpush1.msra.mxu0 0.0
    %2497 = vmatprep.subr.mxu0 0.0
    %2498 = vmatpush1.msra.mxu0 0.0
    %2499 = vmatprep.subr.mxu0 0.0
    %2500 = vmatpush1.msra.mxu0 0.0
    %2501 = vmatprep.subr.mxu0 0.0
    %2502 = vmatpush1.msra.mxu0 0.0
    %2503 = vmatprep.subr.mxu0 0.0
    %2504 = vmatpush1.msra.mxu0 0.0
    %2505 = vmatprep.subr.mxu0 0.0
    %2506 = vmatpush1.msra.mxu0 0.0
    %2507 = vmatprep.subr.mxu0 0.0
    %2508 = vmatpush1.msra.mxu0 0.0
    %2509 = vmatprep.subr.mxu0 0.0
    %2510 = vmatpush1.msra.mxu0 0.0
    %2511 = vmatprep.subr.mxu0 0.0
    %2512 = vmatpush1.msra.mxu0 0.0
    %2513 = vmatprep.subr.mxu0 %v203
    %2514 = vmatpush1.msra.mxu0 %v202
    %2515 = vmatprep.subr.mxu0 %v199
    %2516 = vmatpush1.msra.mxu0 %v198
    %2517 = vmatprep.subr.mxu0 %v195
    %2518 = vmatpush1.msra.mxu0 %v194
    %2519 = vmatprep.subr.mxu0 %v191
    %2520 = vmatpush1.msra.mxu0 %v190
    %2521 = vmatprep.subr.mxu0 0.0
    %2522 = vmatpush2.msra.mxu0 0.0
    %2523 = vmatprep.subr.mxu0 0.0
    %2524 = vmatpush2.msra.mxu0 0.0
    %2525 = vmatprep.subr.mxu0 0.0
    %2526 = vmatpush2.msra.mxu0 0.0
    %2527 = vmatprep.subr.mxu0 0.0
    %2528 = vmatpush2.msra.mxu0 0.0
    %2529 = vmatprep.subr.mxu0 0.0
    %2530 = vmatpush2.msra.mxu0 0.0
    %2531 = vmatprep.subr.mxu0 0.0
    %2532 = vmatpush2.msra.mxu0 0.0
    %2533 = vmatprep.subr.mxu0 0.0
    %2534 = vmatpush2.msra.mxu0 0.0
    %2535 = vmatprep.subr.mxu0 0.0
    %2536 = vmatpush2.msra.mxu0 0.0
    %2537 = vmatprep.subr.mxu0 0.0
    %2538 = vmatpush2.msra.mxu0 0.0
    %2539 = vmatprep.subr.mxu0 0.0
    %2540 = vmatpush2.msra.mxu0 0.0
    %2541 = vmatprep.subr.mxu0 0.0
    %2542 = vmatpush2.msra.mxu0 0.0
    %2543 = vmatprep.subr.mxu0 0.0
    %2544 = vmatpush2.msra.mxu0 0.0
    %2545 = vmatprep.subr.mxu0 0.0
    %2546 = vmatpush2.msra.mxu0 0.0
    %2547 = vmatprep.subr.mxu0 0.0
    %2548 = vmatpush2.msra.mxu0 0.0
    %2549 = vmatprep.subr.mxu0 0.0
    %2550 = vmatpush2.msra.mxu0 0.0
    %2551 = vmatprep.subr.mxu0 0.0
    %2552 = vmatpush2.msra.mxu0 0.0
    %2553 = vmatprep.mubr.f32.mxu0 0.0
    %2554 = vmatmul.mubr.f32.gmra.mxu0 %v2487
    %v2555 = vpop.f32.mrf.mxu0
    %v2556 = vadd.f32 %v325, %v2555
    %v2557 = vpop.f32.mrf.mxu0
    %v2558 = vadd.f32 %v329, %v2557
    %2559 = vdwg.mxu0
    %2560 = vmatprep.subr.mxu0 0.0
    %2561 = vmatpush1.msra.mxu0 0.0
    %2562 = vmatprep.subr.mxu0 0.0
    %2563 = vmatpush1.msra.mxu0 0.0
    %2564 = vmatprep.subr.mxu0 0.0
    %2565 = vmatpush1.msra.mxu0 0.0
    %2566 = vmatprep.subr.mxu0 0.0
    %2567 = vmatpush1.msra.mxu0 0.0
    %2568 = vmatprep.subr.mxu0 0.0
    %2569 = vmatpush1.msra.mxu0 0.0
    %2570 = vmatprep.subr.mxu0 0.0
    %2571 = vmatpush1.msra.mxu0 0.0
    %2572 = vmatprep.subr.mxu0 0.0
    %2573 = vmatpush1.msra.mxu0 0.0
    %2574 = vmatprep.subr.mxu0 0.0
    %2575 = vmatpush1.msra.mxu0 0.0
    %2576 = vmatprep.subr.mxu0 0.0
    %2577 = vmatpush1.msra.mxu0 0.0
    %2578 = vmatprep.subr.mxu0 0.0
    %2579 = vmatpush1.msra.mxu0 0.0
    %2580 = vmatprep.subr.mxu0 0.0
    %2581 = vmatpush1.msra.mxu0 0.0
    %2582 = vmatprep.subr.mxu0 0.0
    %2583 = vmatpush1.msra.mxu0 0.0
    %2584 = vmatprep.subr.mxu0 %v205
    %2585 = vmatpush1.msra.mxu0 %v204
    %2586 = vmatprep.subr.mxu0 %v201
    %2587 = vmatpush1.msra.mxu0 %v200
    %2588 = vmatprep.subr.mxu0 %v197
    %2589 = vmatpush1.msra.mxu0 %v196
    %2590 = vmatprep.subr.mxu0 %v193
    %2591 = vmatpush1.msra.mxu0 %v192
    %2592 = vmatprep.subr.mxu0 0.0
    %2593 = vmatpush2.msra.mxu0 0.0
    %2594 = vmatprep.subr.mxu0 0.0
    %2595 = vmatpush2.msra.mxu0 0.0
    %2596 = vmatprep.subr.mxu0 0.0
    %2597 = vmatpush2.msra.mxu0 0.0
    %2598 = vmatprep.subr.mxu0 0.0
    %2599 = vmatpush2.msra.mxu0 0.0
    %2600 = vmatprep.subr.mxu0 0.0
    %2601 = vmatpush2.msra.mxu0 0.0
    %2602 = vmatprep.subr.mxu0 0.0
    %2603 = vmatpush2.msra.mxu0 0.0
    %2604 = vmatprep.subr.mxu0 0.0
    %2605 = vmatpush2.msra.mxu0 0.0
    %2606 = vmatprep.subr.mxu0 0.0
    %2607 = vmatpush2.msra.mxu0 0.0
    %2608 = vmatprep.subr.mxu0 0.0
    %2609 = vmatpush2.msra.mxu0 0.0
    %2610 = vmatprep.subr.mxu0 0.0
    %2611 = vmatpush2.msra.mxu0 0.0
    %2612 = vmatprep.subr.mxu0 0.0
    %2613 = vmatpush2.msra.mxu0 0.0
    %2614 = vmatprep.subr.mxu0 0.0
    %2615 = vmatpush2.msra.mxu0 0.0
    %2616 = vmatprep.subr.mxu0 0.0
    %2617 = vmatpush2.msra.mxu0 0.0
    %2618 = vmatprep.subr.mxu0 0.0
    %2619 = vmatpush2.msra.mxu0 0.0
    %2620 = vmatprep.subr.mxu0 0.0
    %2621 = vmatpush2.msra.mxu0 0.0
    %2622 = vmatprep.subr.mxu0 0.0
    %2623 = vmatpush2.msra.mxu0 0.0
    %2624 = vmatprep.mubr.f32.mxu0 0.0
    %2625 = vmatmul.mubr.f32.gmra.mxu0 %v2487
    %v2626 = vpop.f32.mrf.mxu0
    %v2627 = vadd.f32 %v333, %v2626
    %v2628 = vpop.f32.mrf.mxu0
    %v2629 = vadd.f32 %v337, %v2628
    %2630 = vdwg.mxu0
    %v2633 = vunpack.c.l.s4 1966171168
    %v2634 = vunpack.c.0.s8 %v2633
    %v2635 = vlaneseq
    %v2636 = vshrl.u32 %v2635, 7
    %v2637 = vsub.s32 %v2634, %v2636
    %v2638 = vrot.slane %v2556, %v2637
    %v2639 = vcombine.high %v2638, %v2638
    %v2641 = vunpack.c.l.s4 1966171168
    %v2642 = vunpack.c.0.s8 %v2641
    %v2643 = vlaneseq
    %v2644 = vshrl.u32 %v2643, 7
    %v2645 = vsub.s32 %v2642, %v2644
    %v2646 = vrot.slane %v2638, %v2645
    %v2648 = vunpack.c.l.s4 1966171168
    %v2649 = vunpack.c.0.s8 %v2648
    %v2650 = vlaneseq
    %v2651 = vshrl.u32 %v2650, 7
    %v2652 = vsub.s32 %v2649, %v2651
    %v2653 = vrot.slane %v2639, %v2652
    %v2654 = vlaneseq
    %v2655 = vshrl.u32 %v2654, 7
    %v2656 = vsub.s32 0, %v2655
    %v2657 = vrot.slane %v2646, %v2656
    %v2658 = vlaneseq
    %v2659 = vshrl.u32 %v2658, 7
    %v2660 = vsub.s32 0, %v2659
    %v2661 = vrot.slane %v2653, %v2660
    %v2664 = vadd.f32 %v311, %v2657
    %v2665 = vadd.f32 %v312, %v2661
    %v2666 = vtanh.pop %v2664
    %v2667 = vtanh.pop %v2665
    %v2668 = vmul.f32 %v2666, %v318
    %v2669 = vmul.f32 %v2667, %v318
    %v2670 = vsel %vm222, %v2668, 0.0
    %2671 = vadd.xlane.f32.xlu0 %v2670
    %v2672 = vpop.xlane.xlu0 %2671
    %v2673 = vsel %vm222, %v2669, 0.0
    %2674 = vadd.xlane.f32.xlu0 %v2673
    %v2675 = vpop.xlane.xlu0 %2674
    %v2678 = vlaneseq
    %v2679 = vshrl.u32 %v2678, 7
    %v2680 = vsub.s32 %v927, %v2679
    %v2681 = vrot.slane %v2672, %v2680
    %v2682 = vlaneseq
    %v2683 = vshrl.u32 %v2682, 7
    %v2684 = vsub.s32 %v927, %v2683
    %v2685 = vrot.slane %v2675, %v2684
    %v2686 = vsel %vm936, %v2685, %v2681
    %v2688 = vsel %vm939, %v2686, -inf
    %2689 = vmax.xlane.f32.xlu0 %v2688
    %v2690 = vpop.xlane.xlu0 %2689
    %v2692 = vlaneseq
    %v2693 = vshrl.u32 %v2692, 7
    %v2694 = vsub.s32 0, %v2693
    %v2695 = vrot.slane %v2690, %v2694
    %v2696 = vlaneseq
    %v2697 = vshrl.u32 %v2696, 7
    %v2698 = vsub.s32 1, %v2697
    %v2699 = vrot.slane %v2690, %v2698
    %v2702 = vsub.f32 %v2672, %v2695
    %v2703 = vsub.f32 %v2675, %v2699
    %v2704 = vmul.f32 %v2702, 1.442695
    %v2705 = vpow.pop %v2704
    %v2706 = vmul.f32 %v2703, 1.442695
    %v2707 = vpow.pop %v2706
    %2710 = vset.pattern.permute.xlu0 0
    %2711 = vperm.xlu0 %2710, %v2705
    %v2712 = vpop.permute.xlu0 %2711
    %2713 = vset.pattern.permute.xlu0 0
    %2714 = vperm.xlu0 %2713, %v2707
    %v2715 = vpop.permute.xlu0 %2714
    %v2716 = vlaneseq
    %v2717 = vshrl.u32 %v2716, 7
    %v2718 = vsub.s32 %v927, %v2717
    %v2719 = vrot.slane %v2712, %v2718
    %v2720 = vlaneseq
    %v2721 = vshrl.u32 %v2720, 7
    %v2722 = vsub.s32 %v927, %v2721
    %v2723 = vrot.slane %v2715, %v2722
    %v2724 = vsel %vm936, %v2723, %v2719
    %v2726 = vsel %vm939, %v2724, 0.0
    %2727 = vadd.xlane.f32.xlu0 %v2726
    %v2728 = vpop.xlane.xlu0 %2727
    %v2729 = vrcp.pop %v2728
    %v2732 = vmul.f32 %v2712, %v180
    %v2733 = vmul.f32 %v2715, %v181
    %v2734 = vsel %vm222, %v2732, 0.0
    %v2735 = vrot.slane %v2734, 4
    %v2736 = vadd.f32 %v2734, %v2735
    %v2737 = vrot.slane %v2736, 2
    %v2738 = vadd.f32 %v2736, %v2737
    %v2739 = vrot.slane %v2738, 1
    %v2740 = vadd.f32 %v2738, %v2739
    %v2741 = vsel %vm222, %v2733, 0.0
    %v2742 = vrot.slane %v2741, 4
    %v2743 = vadd.f32 %v2741, %v2742
    %v2744 = vrot.slane %v2743, 2
    %v2745 = vadd.f32 %v2743, %v2744
    %v2746 = vrot.slane %v2745, 1
    %v2747 = vadd.f32 %v2745, %v2746
    %v2749 = vrot.slane %v2729, 1
    %v2752 = vmul.f32 %v2740, %v2729
    %v2753 = vmul.f32 %v2747, %v2749
    %v2756 = vrot.slane %v2753, 7
    %v2757 = vsel %vm936, %v2756, %v2752
    %v2758 = vsel %vm222, %v2757, 0
    %2760 = vmatprep.subr.mxu0 0.0
    %2761 = vmatpush1.msra.mxu0 0.0
    %2762 = vmatprep.subr.mxu0 0.0
    %2763 = vmatpush1.msra.mxu0 0.0
    %2764 = vmatprep.subr.mxu0 0.0
    %2765 = vmatpush1.msra.mxu0 0.0
    %2766 = vmatprep.subr.mxu0 0.0
    %2767 = vmatpush1.msra.mxu0 0.0
    %2768 = vmatprep.subr.mxu0 0.0
    %2769 = vmatpush1.msra.mxu0 0.0
    %2770 = vmatprep.subr.mxu0 0.0
    %2771 = vmatpush1.msra.mxu0 0.0
    %2772 = vmatprep.subr.mxu0 0.0
    %2773 = vmatpush1.msra.mxu0 0.0
    %2774 = vmatprep.subr.mxu0 0.0
    %2775 = vmatpush1.msra.mxu0 0.0
    %2776 = vmatprep.subr.mxu0 0.0
    %2777 = vmatpush1.msra.mxu0 0.0
    %2778 = vmatprep.subr.mxu0 0.0
    %2779 = vmatpush1.msra.mxu0 0.0
    %2780 = vmatprep.subr.mxu0 0.0
    %2781 = vmatpush1.msra.mxu0 0.0
    %2782 = vmatprep.subr.mxu0 0.0
    %2783 = vmatpush1.msra.mxu0 0.0
    %2784 = vmatprep.subr.mxu0 %v216
    %2785 = vmatpush1.msra.mxu0 %v215
    %2786 = vmatprep.subr.mxu0 %v213
    %2787 = vmatpush1.msra.mxu0 %v212
    %2788 = vmatprep.subr.mxu0 %v210
    %2789 = vmatpush1.msra.mxu0 %v209
    %2790 = vmatprep.subr.mxu0 %v207
    %2791 = vmatpush1.msra.mxu0 %v206
    %2792 = vmatprep.subr.mxu0 0.0
    %2793 = vmatpush2.msra.mxu0 0.0
    %2794 = vmatprep.subr.mxu0 0.0
    %2795 = vmatpush2.msra.mxu0 0.0
    %2796 = vmatprep.subr.mxu0 0.0
    %2797 = vmatpush2.msra.mxu0 0.0
    %2798 = vmatprep.subr.mxu0 0.0
    %2799 = vmatpush2.msra.mxu0 0.0
    %2800 = vmatprep.subr.mxu0 0.0
    %2801 = vmatpush2.msra.mxu0 0.0
    %2802 = vmatprep.subr.mxu0 0.0
    %2803 = vmatpush2.msra.mxu0 0.0
    %2804 = vmatprep.subr.mxu0 0.0
    %2805 = vmatpush2.msra.mxu0 0.0
    %2806 = vmatprep.subr.mxu0 0.0
    %2807 = vmatpush2.msra.mxu0 0.0
    %2808 = vmatprep.subr.mxu0 0.0
    %2809 = vmatpush2.msra.mxu0 0.0
    %2810 = vmatprep.subr.mxu0 0.0
    %2811 = vmatpush2.msra.mxu0 0.0
    %2812 = vmatprep.subr.mxu0 0.0
    %2813 = vmatpush2.msra.mxu0 0.0
    %2814 = vmatprep.subr.mxu0 0.0
    %2815 = vmatpush2.msra.mxu0 0.0
    %2816 = vmatprep.subr.mxu0 0.0
    %2817 = vmatpush2.msra.mxu0 0.0
    %2818 = vmatprep.subr.mxu0 0.0
    %2819 = vmatpush2.msra.mxu0 0.0
    %2820 = vmatprep.subr.mxu0 0.0
    %2821 = vmatpush2.msra.mxu0 0.0
    %2822 = vmatprep.subr.mxu0 0.0
    %2823 = vmatpush2.msra.mxu0 0.0
    %2824 = vmatprep.mubr.f32.mxu0 0.0
    %2825 = vmatmul.mubr.f32.gmra.mxu0 %v2758
    %v2826 = vpop.f32.mrf.mxu0
    %v2827 = vadd.f32 %v481, %v2826
    %v2828 = vpop.f32.mrf.mxu0
    %v2829 = vadd.f32 %v483, %v2828
    %2830 = vdwg.mxu0
    %2831 = vmatprep.subr.mxu0 0.0
    %2832 = vmatpush1.msra.mxu0 0.0
    %2833 = vmatprep.subr.mxu0 0.0
    %2834 = vmatpush1.msra.mxu0 0.0
    %2835 = vmatprep.subr.mxu0 0.0
    %2836 = vmatpush1.msra.mxu0 0.0
    %2837 = vmatprep.subr.mxu0 0.0
    %2838 = vmatpush1.msra.mxu0 0.0
    %2839 = vmatprep.subr.mxu0 0.0
    %2840 = vmatpush1.msra.mxu0 0.0
    %2841 = vmatprep.subr.mxu0 0.0
    %2842 = vmatpush1.msra.mxu0 0.0
    %2843 = vmatprep.subr.mxu0 0.0
    %2844 = vmatpush1.msra.mxu0 0.0
    %2845 = vmatprep.subr.mxu0 0.0
    %2846 = vmatpush1.msra.mxu0 0.0
    %2847 = vmatprep.subr.mxu0 0.0
    %2848 = vmatpush1.msra.mxu0 0.0
    %2849 = vmatprep.subr.mxu0 0.0
    %2850 = vmatpush1.msra.mxu0 0.0
    %2851 = vmatprep.subr.mxu0 0.0
    %2852 = vmatpush1.msra.mxu0 0.0
    %2853 = vmatprep.subr.mxu0 0.0
    %2854 = vmatpush1.msra.mxu0 0.0
    %2855 = vmatprep.subr.mxu0 0.0
    %2856 = vmatpush1.msra.mxu0 %v217
    %2857 = vmatprep.subr.mxu0 0.0
    %2858 = vmatpush1.msra.mxu0 %v214
    %2859 = vmatprep.subr.mxu0 0.0
    %2860 = vmatpush1.msra.mxu0 %v211
    %2861 = vmatprep.subr.mxu0 0.0
    %2862 = vmatpush1.msra.mxu0 %v208
    %2863 = vmatprep.subr.mxu0 0.0
    %2864 = vmatpush2.msra.mxu0 0.0
    %2865 = vmatprep.subr.mxu0 0.0
    %2866 = vmatpush2.msra.mxu0 0.0
    %2867 = vmatprep.subr.mxu0 0.0
    %2868 = vmatpush2.msra.mxu0 0.0
    %2869 = vmatprep.subr.mxu0 0.0
    %2870 = vmatpush2.msra.mxu0 0.0
    %2871 = vmatprep.subr.mxu0 0.0
    %2872 = vmatpush2.msra.mxu0 0.0
    %2873 = vmatprep.subr.mxu0 0.0
    %2874 = vmatpush2.msra.mxu0 0.0
    %2875 = vmatprep.subr.mxu0 0.0
    %2876 = vmatpush2.msra.mxu0 0.0
    %2877 = vmatprep.subr.mxu0 0.0
    %2878 = vmatpush2.msra.mxu0 0.0
    %2879 = vmatprep.subr.mxu0 0.0
    %2880 = vmatpush2.msra.mxu0 0.0
    %2881 = vmatprep.subr.mxu0 0.0
    %2882 = vmatpush2.msra.mxu0 0.0
    %2883 = vmatprep.subr.mxu0 0.0
    %2884 = vmatpush2.msra.mxu0 0.0
    %2885 = vmatprep.subr.mxu0 0.0
    %2886 = vmatpush2.msra.mxu0 0.0
    %2887 = vmatprep.subr.mxu0 0.0
    %2888 = vmatpush2.msra.mxu0 0.0
    %2889 = vmatprep.subr.mxu0 0.0
    %2890 = vmatpush2.msra.mxu0 0.0
    %2891 = vmatprep.subr.mxu0 0.0
    %2892 = vmatpush2.msra.mxu0 0.0
    %2893 = vmatprep.subr.mxu0 0.0
    %2894 = vmatpush2.msra.mxu0 0.0
    %2895 = vmatprep.mubr.f32.mxu0 0.0
    %2896 = vmatmul.mubr.f32.gmra.mxu0 %v2758
    %v2897 = vpop.f32.mrf.mxu0
    %v2898 = vadd.f32 %v590, %v2897
    %v2899 = vpop.f32.mrf.mxu0
    %2900 = vdwg.mxu0
    %v2901 = vadd.f32 %v2827, %v2558
    %v2902 = vxor.u32 %v2901, 2147483648
    %v2903 = vmul.f32 %v2902, 1.442695
    %v2904 = vpow.pop %v2903
    %v2905 = vadd.f32 %v2904, 1.0
    %v2906 = vrcp.pop %v2905
    %v2907 = vmul.f32 1.0, %v2906
    %v2908 = vadd.f32 %v2829, %v2627
    %v2909 = vxor.u32 %v2908, 2147483648
    %v2910 = vmul.f32 %v2909, 1.442695
    %v2911 = vpow.pop %v2910
    %v2912 = vadd.f32 %v2911, 1.0
    %v2913 = vrcp.pop %v2912
    %v2914 = vmul.f32 1.0, %v2913
    %v2915 = vmul.f32 %v2907, %v2629
    %v2916 = vadd.f32 %v2898, %v2915
    %v2917 = vtanh.pop %v2916
    %v2918 = vsub.f32 1.0, %v2914
    %v2919 = vmul.f32 %v2918, %v2917
    %v2920 = vmul.f32 %v2914, %v2484
    %v2921 = vadd.f32 %v2919, %v2920
    %2922 = vst.msk [vmem:[#allocation2 + $0x28] sm:$0x3] %vm732, %v2921
    %v2924 = vsel %vm222, %v2921, 0
    %2926 = vmatprep.subr.mxu0 0.0
    %2927 = vmatpush1.msra.mxu0 0.0
    %2928 = vmatprep.subr.mxu0 0.0
    %2929 = vmatpush1.msra.mxu0 0.0
    %2930 = vmatprep.subr.mxu0 0.0
    %2931 = vmatpush1.msra.mxu0 0.0
    %2932 = vmatprep.subr.mxu0 0.0
    %2933 = vmatpush1.msra.mxu0 0.0
    %2934 = vmatprep.subr.mxu0 0.0
    %2935 = vmatpush1.msra.mxu0 0.0
    %2936 = vmatprep.subr.mxu0 0.0
    %2937 = vmatpush1.msra.mxu0 0.0
    %2938 = vmatprep.subr.mxu0 0.0
    %2939 = vmatpush1.msra.mxu0 0.0
    %2940 = vmatprep.subr.mxu0 0.0
    %2941 = vmatpush1.msra.mxu0 0.0
    %2942 = vmatprep.subr.mxu0 0.0
    %2943 = vmatpush1.msra.mxu0 0.0
    %2944 = vmatprep.subr.mxu0 0.0
    %2945 = vmatpush1.msra.mxu0 0.0
    %2946 = vmatprep.subr.mxu0 0.0
    %2947 = vmatpush1.msra.mxu0 0.0
    %2948 = vmatprep.subr.mxu0 0.0
    %2949 = vmatpush1.msra.mxu0 0.0
    %2950 = vmatprep.subr.mxu0 %v203
    %2951 = vmatpush1.msra.mxu0 %v202
    %2952 = vmatprep.subr.mxu0 %v199
    %2953 = vmatpush1.msra.mxu0 %v198
    %2954 = vmatprep.subr.mxu0 %v195
    %2955 = vmatpush1.msra.mxu0 %v194
    %2956 = vmatprep.subr.mxu0 %v191
    %2957 = vmatpush1.msra.mxu0 %v190
    %2958 = vmatprep.subr.mxu0 0.0
    %2959 = vmatpush2.msra.mxu0 0.0
    %2960 = vmatprep.subr.mxu0 0.0
    %2961 = vmatpush2.msra.mxu0 0.0
    %2962 = vmatprep.subr.mxu0 0.0
    %2963 = vmatpush2.msra.mxu0 0.0
    %2964 = vmatprep.subr.mxu0 0.0
    %2965 = vmatpush2.msra.mxu0 0.0
    %2966 = vmatprep.subr.mxu0 0.0
    %2967 = vmatpush2.msra.mxu0 0.0
    %2968 = vmatprep.subr.mxu0 0.0
    %2969 = vmatpush2.msra.mxu0 0.0
    %2970 = vmatprep.subr.mxu0 0.0
    %2971 = vmatpush2.msra.mxu0 0.0
    %2972 = vmatprep.subr.mxu0 0.0
    %2973 = vmatpush2.msra.mxu0 0.0
    %2974 = vmatprep.subr.mxu0 0.0
    %2975 = vmatpush2.msra.mxu0 0.0
    %2976 = vmatprep.subr.mxu0 0.0
    %2977 = vmatpush2.msra.mxu0 0.0
    %2978 = vmatprep.subr.mxu0 0.0
    %2979 = vmatpush2.msra.mxu0 0.0
    %2980 = vmatprep.subr.mxu0 0.0
    %2981 = vmatpush2.msra.mxu0 0.0
    %2982 = vmatprep.subr.mxu0 0.0
    %2983 = vmatpush2.msra.mxu0 0.0
    %2984 = vmatprep.subr.mxu0 0.0
    %2985 = vmatpush2.msra.mxu0 0.0
    %2986 = vmatprep.subr.mxu0 0.0
    %2987 = vmatpush2.msra.mxu0 0.0
    %2988 = vmatprep.subr.mxu0 0.0
    %2989 = vmatpush2.msra.mxu0 0.0
    %2990 = vmatprep.mubr.f32.mxu0 0.0
    %2991 = vmatmul.mubr.f32.gmra.mxu0 %v2924
    %v2992 = vpop.f32.mrf.mxu0
    %v2993 = vadd.f32 %v325, %v2992
    %v2994 = vpop.f32.mrf.mxu0
    %v2995 = vadd.f32 %v329, %v2994
    %2996 = vdwg.mxu0
    %2997 = vmatprep.subr.mxu0 0.0
    %2998 = vmatpush1.msra.mxu0 0.0
    %2999 = vmatprep.subr.mxu0 0.0
    %3000 = vmatpush1.msra.mxu0 0.0
    %3001 = vmatprep.subr.mxu0 0.0
    %3002 = vmatpush1.msra.mxu0 0.0
    %3003 = vmatprep.subr.mxu0 0.0
    %3004 = vmatpush1.msra.mxu0 0.0
    %3005 = vmatprep.subr.mxu0 0.0
    %3006 = vmatpush1.msra.mxu0 0.0
    %3007 = vmatprep.subr.mxu0 0.0
    %3008 = vmatpush1.msra.mxu0 0.0
    %3009 = vmatprep.subr.mxu0 0.0
    %3010 = vmatpush1.msra.mxu0 0.0
    %3011 = vmatprep.subr.mxu0 0.0
    %3012 = vmatpush1.msra.mxu0 0.0
    %3013 = vmatprep.subr.mxu0 0.0
    %3014 = vmatpush1.msra.mxu0 0.0
    %3015 = vmatprep.subr.mxu0 0.0
    %3016 = vmatpush1.msra.mxu0 0.0
    %3017 = vmatprep.subr.mxu0 0.0
    %3018 = vmatpush1.msra.mxu0 0.0
    %3019 = vmatprep.subr.mxu0 0.0
    %3020 = vmatpush1.msra.mxu0 0.0
    %3021 = vmatprep.subr.mxu0 %v205
    %3022 = vmatpush1.msra.mxu0 %v204
    %3023 = vmatprep.subr.mxu0 %v201
    %3024 = vmatpush1.msra.mxu0 %v200
    %3025 = vmatprep.subr.mxu0 %v197
    %3026 = vmatpush1.msra.mxu0 %v196
    %3027 = vmatprep.subr.mxu0 %v193
    %3028 = vmatpush1.msra.mxu0 %v192
    %3029 = vmatprep.subr.mxu0 0.0
    %3030 = vmatpush2.msra.mxu0 0.0
    %3031 = vmatprep.subr.mxu0 0.0
    %3032 = vmatpush2.msra.mxu0 0.0
    %3033 = vmatprep.subr.mxu0 0.0
    %3034 = vmatpush2.msra.mxu0 0.0
    %3035 = vmatprep.subr.mxu0 0.0
    %3036 = vmatpush2.msra.mxu0 0.0
    %3037 = vmatprep.subr.mxu0 0.0
    %3038 = vmatpush2.msra.mxu0 0.0
    %3039 = vmatprep.subr.mxu0 0.0
    %3040 = vmatpush2.msra.mxu0 0.0
    %3041 = vmatprep.subr.mxu0 0.0
    %3042 = vmatpush2.msra.mxu0 0.0
    %3043 = vmatprep.subr.mxu0 0.0
    %3044 = vmatpush2.msra.mxu0 0.0
    %3045 = vmatprep.subr.mxu0 0.0
    %3046 = vmatpush2.msra.mxu0 0.0
    %3047 = vmatprep.subr.mxu0 0.0
    %3048 = vmatpush2.msra.mxu0 0.0
    %3049 = vmatprep.subr.mxu0 0.0
    %3050 = vmatpush2.msra.mxu0 0.0
    %3051 = vmatprep.subr.mxu0 0.0
    %3052 = vmatpush2.msra.mxu0 0.0
    %3053 = vmatprep.subr.mxu0 0.0
    %3054 = vmatpush2.msra.mxu0 0.0
    %3055 = vmatprep.subr.mxu0 0.0
    %3056 = vmatpush2.msra.mxu0 0.0
    %3057 = vmatprep.subr.mxu0 0.0
    %3058 = vmatpush2.msra.mxu0 0.0
    %3059 = vmatprep.subr.mxu0 0.0
    %3060 = vmatpush2.msra.mxu0 0.0
    %3061 = vmatprep.mubr.f32.mxu0 0.0
    %3062 = vmatmul.mubr.f32.gmra.mxu0 %v2924
    %v3063 = vpop.f32.mrf.mxu0
    %v3064 = vadd.f32 %v333, %v3063
    %v3065 = vpop.f32.mrf.mxu0
    %v3066 = vadd.f32 %v337, %v3065
    %3067 = vdwg.mxu0
    %v3070 = vunpack.c.l.s4 1966171168
    %v3071 = vunpack.c.0.s8 %v3070
    %v3072 = vlaneseq
    %v3073 = vshrl.u32 %v3072, 7
    %v3074 = vsub.s32 %v3071, %v3073
    %v3075 = vrot.slane %v2993, %v3074
    %v3076 = vcombine.high %v3075, %v3075
    %v3078 = vunpack.c.l.s4 1966171168
    %v3079 = vunpack.c.0.s8 %v3078
    %v3080 = vlaneseq
    %v3081 = vshrl.u32 %v3080, 7
    %v3082 = vsub.s32 %v3079, %v3081
    %v3083 = vrot.slane %v3075, %v3082
    %v3085 = vunpack.c.l.s4 1966171168
    %v3086 = vunpack.c.0.s8 %v3085
    %v3087 = vlaneseq
    %v3088 = vshrl.u32 %v3087, 7
    %v3089 = vsub.s32 %v3086, %v3088
    %v3090 = vrot.slane %v3076, %v3089
    %v3091 = vlaneseq
    %v3092 = vshrl.u32 %v3091, 7
    %v3093 = vsub.s32 0, %v3092
    %v3094 = vrot.slane %v3083, %v3093
    %v3095 = vlaneseq
    %v3096 = vshrl.u32 %v3095, 7
    %v3097 = vsub.s32 0, %v3096
    %v3098 = vrot.slane %v3090, %v3097
    %v3101 = vadd.f32 %v311, %v3094
    %v3102 = vadd.f32 %v312, %v3098
    %v3103 = vtanh.pop %v3101
    %v3104 = vtanh.pop %v3102
    %v3105 = vmul.f32 %v3103, %v318
    %v3106 = vmul.f32 %v3104, %v318
    %v3107 = vsel %vm222, %v3105, 0.0
    %3108 = vadd.xlane.f32.xlu0 %v3107
    %v3109 = vpop.xlane.xlu0 %3108
    %v3110 = vsel %vm222, %v3106, 0.0
    %3111 = vadd.xlane.f32.xlu0 %v3110
    %v3112 = vpop.xlane.xlu0 %3111
    %v3115 = vlaneseq
    %v3116 = vshrl.u32 %v3115, 7
    %v3117 = vsub.s32 %v927, %v3116
    %v3118 = vrot.slane %v3109, %v3117
    %v3119 = vlaneseq
    %v3120 = vshrl.u32 %v3119, 7
    %v3121 = vsub.s32 %v927, %v3120
    %v3122 = vrot.slane %v3112, %v3121
    %v3123 = vsel %vm936, %v3122, %v3118
    %v3125 = vsel %vm939, %v3123, -inf
    %3126 = vmax.xlane.f32.xlu0 %v3125
    %v3127 = vpop.xlane.xlu0 %3126
    %v3129 = vlaneseq
    %v3130 = vshrl.u32 %v3129, 7
    %v3131 = vsub.s32 0, %v3130
    %v3132 = vrot.slane %v3127, %v3131
    %v3133 = vlaneseq
    %v3134 = vshrl.u32 %v3133, 7
    %v3135 = vsub.s32 1, %v3134
    %v3136 = vrot.slane %v3127, %v3135
    %v3139 = vsub.f32 %v3109, %v3132
    %v3140 = vsub.f32 %v3112, %v3136
    %v3141 = vmul.f32 %v3139, 1.442695
    %v3142 = vpow.pop %v3141
    %v3143 = vmul.f32 %v3140, 1.442695
    %v3144 = vpow.pop %v3143
    %3147 = vset.pattern.permute.xlu0 0
    %3148 = vperm.xlu0 %3147, %v3142
    %v3149 = vpop.permute.xlu0 %3148
    %3150 = vset.pattern.permute.xlu0 0
    %3151 = vperm.xlu0 %3150, %v3144
    %v3152 = vpop.permute.xlu0 %3151
    %v3153 = vlaneseq
    %v3154 = vshrl.u32 %v3153, 7
    %v3155 = vsub.s32 %v927, %v3154
    %v3156 = vrot.slane %v3149, %v3155
    %v3157 = vlaneseq
    %v3158 = vshrl.u32 %v3157, 7
    %v3159 = vsub.s32 %v927, %v3158
    %v3160 = vrot.slane %v3152, %v3159
    %v3161 = vsel %vm936, %v3160, %v3156
    %v3163 = vsel %vm939, %v3161, 0.0
    %3164 = vadd.xlane.f32.xlu0 %v3163
    %v3165 = vpop.xlane.xlu0 %3164
    %v3166 = vrcp.pop %v3165
    %v3169 = vmul.f32 %v3149, %v180
    %v3170 = vmul.f32 %v3152, %v181
    %v3171 = vsel %vm222, %v3169, 0.0
    %v3172 = vrot.slane %v3171, 4
    %v3173 = vadd.f32 %v3171, %v3172
    %v3174 = vrot.slane %v3173, 2
    %v3175 = vadd.f32 %v3173, %v3174
    %v3176 = vrot.slane %v3175, 1
    %v3177 = vadd.f32 %v3175, %v3176
    %v3178 = vsel %vm222, %v3170, 0.0
    %v3179 = vrot.slane %v3178, 4
    %v3180 = vadd.f32 %v3178, %v3179
    %v3181 = vrot.slane %v3180, 2
    %v3182 = vadd.f32 %v3180, %v3181
    %v3183 = vrot.slane %v3182, 1
    %v3184 = vadd.f32 %v3182, %v3183
    %v3186 = vrot.slane %v3166, 1
    %v3189 = vmul.f32 %v3177, %v3166
    %v3190 = vmul.f32 %v3184, %v3186
    %v3193 = vrot.slane %v3190, 7
    %v3194 = vsel %vm936, %v3193, %v3189
    %v3195 = vsel %vm222, %v3194, 0
    %3197 = vmatprep.subr.mxu0 0.0
    %3198 = vmatpush1.msra.mxu0 0.0
    %3199 = vmatprep.subr.mxu0 0.0
    %3200 = vmatpush1.msra.mxu0 0.0
    %3201 = vmatprep.subr.mxu0 0.0
    %3202 = vmatpush1.msra.mxu0 0.0
    %3203 = vmatprep.subr.mxu0 0.0
    %3204 = vmatpush1.msra.mxu0 0.0
    %3205 = vmatprep.subr.mxu0 0.0
    %3206 = vmatpush1.msra.mxu0 0.0
    %3207 = vmatprep.subr.mxu0 0.0
    %3208 = vmatpush1.msra.mxu0 0.0
    %3209 = vmatprep.subr.mxu0 0.0
    %3210 = vmatpush1.msra.mxu0 0.0
    %3211 = vmatprep.subr.mxu0 0.0
    %3212 = vmatpush1.msra.mxu0 0.0
    %3213 = vmatprep.subr.mxu0 0.0
    %3214 = vmatpush1.msra.mxu0 0.0
    %3215 = vmatprep.subr.mxu0 0.0
    %3216 = vmatpush1.msra.mxu0 0.0
    %3217 = vmatprep.subr.mxu0 0.0
    %3218 = vmatpush1.msra.mxu0 0.0
    %3219 = vmatprep.subr.mxu0 0.0
    %3220 = vmatpush1.msra.mxu0 0.0
    %3221 = vmatprep.subr.mxu0 %v216
    %3222 = vmatpush1.msra.mxu0 %v215
    %3223 = vmatprep.subr.mxu0 %v213
    %3224 = vmatpush1.msra.mxu0 %v212
    %3225 = vmatprep.subr.mxu0 %v210
    %3226 = vmatpush1.msra.mxu0 %v209
    %3227 = vmatprep.subr.mxu0 %v207
    %3228 = vmatpush1.msra.mxu0 %v206
    %3229 = vmatprep.subr.mxu0 0.0
    %3230 = vmatpush2.msra.mxu0 0.0
    %3231 = vmatprep.subr.mxu0 0.0
    %3232 = vmatpush2.msra.mxu0 0.0
    %3233 = vmatprep.subr.mxu0 0.0
    %3234 = vmatpush2.msra.mxu0 0.0
    %3235 = vmatprep.subr.mxu0 0.0
    %3236 = vmatpush2.msra.mxu0 0.0
    %3237 = vmatprep.subr.mxu0 0.0
    %3238 = vmatpush2.msra.mxu0 0.0
    %3239 = vmatprep.subr.mxu0 0.0
    %3240 = vmatpush2.msra.mxu0 0.0
    %3241 = vmatprep.subr.mxu0 0.0
    %3242 = vmatpush2.msra.mxu0 0.0
    %3243 = vmatprep.subr.mxu0 0.0
    %3244 = vmatpush2.msra.mxu0 0.0
    %3245 = vmatprep.subr.mxu0 0.0
    %3246 = vmatpush2.msra.mxu0 0.0
    %3247 = vmatprep.subr.mxu0 0.0
    %3248 = vmatpush2.msra.mxu0 0.0
    %3249 = vmatprep.subr.mxu0 0.0
    %3250 = vmatpush2.msra.mxu0 0.0
    %3251 = vmatprep.subr.mxu0 0.0
    %3252 = vmatpush2.msra.mxu0 0.0
    %3253 = vmatprep.subr.mxu0 0.0
    %3254 = vmatpush2.msra.mxu0 0.0
    %3255 = vmatprep.subr.mxu0 0.0
    %3256 = vmatpush2.msra.mxu0 0.0
    %3257 = vmatprep.subr.mxu0 0.0
    %3258 = vmatpush2.msra.mxu0 0.0
    %3259 = vmatprep.subr.mxu0 0.0
    %3260 = vmatpush2.msra.mxu0 0.0
    %3261 = vmatprep.mubr.f32.mxu0 0.0
    %3262 = vmatmul.mubr.f32.gmra.mxu0 %v3195
    %v3263 = vpop.f32.mrf.mxu0
    %v3264 = vadd.f32 %v487, %v3263
    %v3265 = vpop.f32.mrf.mxu0
    %v3266 = vadd.f32 %v489, %v3265
    %3267 = vdwg.mxu0
    %3268 = vmatprep.subr.mxu0 0.0
    %3269 = vmatpush1.msra.mxu0 0.0
    %3270 = vmatprep.subr.mxu0 0.0
    %3271 = vmatpush1.msra.mxu0 0.0
    %3272 = vmatprep.subr.mxu0 0.0
    %3273 = vmatpush1.msra.mxu0 0.0
    %3274 = vmatprep.subr.mxu0 0.0
    %3275 = vmatpush1.msra.mxu0 0.0
    %3276 = vmatprep.subr.mxu0 0.0
    %3277 = vmatpush1.msra.mxu0 0.0
    %3278 = vmatprep.subr.mxu0 0.0
    %3279 = vmatpush1.msra.mxu0 0.0
    %3280 = vmatprep.subr.mxu0 0.0
    %3281 = vmatpush1.msra.mxu0 0.0
    %3282 = vmatprep.subr.mxu0 0.0
    %3283 = vmatpush1.msra.mxu0 0.0
    %3284 = vmatprep.subr.mxu0 0.0
    %3285 = vmatpush1.msra.mxu0 0.0
    %3286 = vmatprep.subr.mxu0 0.0
    %3287 = vmatpush1.msra.mxu0 0.0
    %3288 = vmatprep.subr.mxu0 0.0
    %3289 = vmatpush1.msra.mxu0 0.0
    %3290 = vmatprep.subr.mxu0 0.0
    %3291 = vmatpush1.msra.mxu0 0.0
    %3292 = vmatprep.subr.mxu0 0.0
    %3293 = vmatpush1.msra.mxu0 %v217
    %3294 = vmatprep.subr.mxu0 0.0
    %3295 = vmatpush1.msra.mxu0 %v214
    %3296 = vmatprep.subr.mxu0 0.0
    %3297 = vmatpush1.msra.mxu0 %v211
    %3298 = vmatprep.subr.mxu0 0.0
    %3299 = vmatpush1.msra.mxu0 %v208
    %3300 = vmatprep.subr.mxu0 0.0
    %3301 = vmatpush2.msra.mxu0 0.0
    %3302 = vmatprep.subr.mxu0 0.0
    %3303 = vmatpush2.msra.mxu0 0.0
    %3304 = vmatprep.subr.mxu0 0.0
    %3305 = vmatpush2.msra.mxu0 0.0
    %3306 = vmatprep.subr.mxu0 0.0
    %3307 = vmatpush2.msra.mxu0 0.0
    %3308 = vmatprep.subr.mxu0 0.0
    %3309 = vmatpush2.msra.mxu0 0.0
    %3310 = vmatprep.subr.mxu0 0.0
    %3311 = vmatpush2.msra.mxu0 0.0
    %3312 = vmatprep.subr.mxu0 0.0
    %3313 = vmatpush2.msra.mxu0 0.0
    %3314 = vmatprep.subr.mxu0 0.0
    %3315 = vmatpush2.msra.mxu0 0.0
    %3316 = vmatprep.subr.mxu0 0.0
    %3317 = vmatpush2.msra.mxu0 0.0
    %3318 = vmatprep.subr.mxu0 0.0
    %3319 = vmatpush2.msra.mxu0 0.0
    %3320 = vmatprep.subr.mxu0 0.0
    %3321 = vmatpush2.msra.mxu0 0.0
    %3322 = vmatprep.subr.mxu0 0.0
    %3323 = vmatpush2.msra.mxu0 0.0
    %3324 = vmatprep.subr.mxu0 0.0
    %3325 = vmatpush2.msra.mxu0 0.0
    %3326 = vmatprep.subr.mxu0 0.0
    %3327 = vmatpush2.msra.mxu0 0.0
    %3328 = vmatprep.subr.mxu0 0.0
    %3329 = vmatpush2.msra.mxu0 0.0
    %3330 = vmatprep.subr.mxu0 0.0
    %3331 = vmatpush2.msra.mxu0 0.0
    %3332 = vmatprep.mubr.f32.mxu0 0.0
    %3333 = vmatmul.mubr.f32.gmra.mxu0 %v3195
    %v3334 = vpop.f32.mrf.mxu0
    %v3335 = vadd.f32 %v595, %v3334
    %v3336 = vpop.f32.mrf.mxu0
    %3337 = vdwg.mxu0
    %v3338 = vadd.f32 %v3264, %v2995
    %v3339 = vxor.u32 %v3338, 2147483648
    %v3340 = vmul.f32 %v3339, 1.442695
    %v3341 = vpow.pop %v3340
    %v3342 = vadd.f32 %v3341, 1.0
    %v3343 = vrcp.pop %v3342
    %v3344 = vmul.f32 1.0, %v3343
    %v3345 = vadd.f32 %v3266, %v3064
    %v3346 = vxor.u32 %v3345, 2147483648
    %v3347 = vmul.f32 %v3346, 1.442695
    %v3348 = vpow.pop %v3347
    %v3349 = vadd.f32 %v3348, 1.0
    %v3350 = vrcp.pop %v3349
    %v3351 = vmul.f32 1.0, %v3350
    %v3352 = vmul.f32 %v3344, %v3066
    %v3353 = vadd.f32 %v3335, %v3352
    %v3354 = vtanh.pop %v3353
    %v3355 = vsub.f32 1.0, %v3351
    %v3356 = vmul.f32 %v3355, %v3354
    %v3357 = vmul.f32 %v3351, %v2921
    %v3358 = vadd.f32 %v3356, %v3357
    %3359 = vst.msk [vmem:[#allocation2 + $0x30] sm:$0x3] %vm732, %v3358
    %v3361 = vsel %vm222, %v3358, 0
    %3363 = vmatprep.subr.mxu0 0.0
    %3364 = vmatpush1.msra.mxu0 0.0
    %3365 = vmatprep.subr.mxu0 0.0
    %3366 = vmatpush1.msra.mxu0 0.0
    %3367 = vmatprep.subr.mxu0 0.0
    %3368 = vmatpush1.msra.mxu0 0.0
    %3369 = vmatprep.subr.mxu0 0.0
    %3370 = vmatpush1.msra.mxu0 0.0
    %3371 = vmatprep.subr.mxu0 0.0
    %3372 = vmatpush1.msra.mxu0 0.0
    %3373 = vmatprep.subr.mxu0 0.0
    %3374 = vmatpush1.msra.mxu0 0.0
    %3375 = vmatprep.subr.mxu0 0.0
    %3376 = vmatpush1.msra.mxu0 0.0
    %3377 = vmatprep.subr.mxu0 0.0
    %3378 = vmatpush1.msra.mxu0 0.0
    %3379 = vmatprep.subr.mxu0 0.0
    %3380 = vmatpush1.msra.mxu0 0.0
    %3381 = vmatprep.subr.mxu0 0.0
    %3382 = vmatpush1.msra.mxu0 0.0
    %3383 = vmatprep.subr.mxu0 0.0
    %3384 = vmatpush1.msra.mxu0 0.0
    %3385 = vmatprep.subr.mxu0 0.0
    %3386 = vmatpush1.msra.mxu0 0.0
    %3387 = vmatprep.subr.mxu0 %v203
    %3388 = vmatpush1.msra.mxu0 %v202
    %3389 = vmatprep.subr.mxu0 %v199
    %3390 = vmatpush1.msra.mxu0 %v198
    %3391 = vmatprep.subr.mxu0 %v195
    %3392 = vmatpush1.msra.mxu0 %v194
    %3393 = vmatprep.subr.mxu0 %v191
    %3394 = vmatpush1.msra.mxu0 %v190
    %3395 = vmatprep.subr.mxu0 0.0
    %3396 = vmatpush2.msra.mxu0 0.0
    %3397 = vmatprep.subr.mxu0 0.0
    %3398 = vmatpush2.msra.mxu0 0.0
    %3399 = vmatprep.subr.mxu0 0.0
    %3400 = vmatpush2.msra.mxu0 0.0
    %3401 = vmatprep.subr.mxu0 0.0
    %3402 = vmatpush2.msra.mxu0 0.0
    %3403 = vmatprep.subr.mxu0 0.0
    %3404 = vmatpush2.msra.mxu0 0.0
    %3405 = vmatprep.subr.mxu0 0.0
    %3406 = vmatpush2.msra.mxu0 0.0
    %3407 = vmatprep.subr.mxu0 0.0
    %3408 = vmatpush2.msra.mxu0 0.0
    %3409 = vmatprep.subr.mxu0 0.0
    %3410 = vmatpush2.msra.mxu0 0.0
    %3411 = vmatprep.subr.mxu0 0.0
    %3412 = vmatpush2.msra.mxu0 0.0
    %3413 = vmatprep.subr.mxu0 0.0
    %3414 = vmatpush2.msra.mxu0 0.0
    %3415 = vmatprep.subr.mxu0 0.0
    %3416 = vmatpush2.msra.mxu0 0.0
    %3417 = vmatprep.subr.mxu0 0.0
    %3418 = vmatpush2.msra.mxu0 0.0
    %3419 = vmatprep.subr.mxu0 0.0
    %3420 = vmatpush2.msra.mxu0 0.0
    %3421 = vmatprep.subr.mxu0 0.0
    %3422 = vmatpush2.msra.mxu0 0.0
    %3423 = vmatprep.subr.mxu0 0.0
    %3424 = vmatpush2.msra.mxu0 0.0
    %3425 = vmatprep.subr.mxu0 0.0
    %3426 = vmatpush2.msra.mxu0 0.0
    %3427 = vmatprep.mubr.f32.mxu0 0.0
    %3428 = vmatmul.mubr.f32.gmra.mxu0 %v3361
    %v3429 = vpop.f32.mrf.mxu0
    %v3430 = vadd.f32 %v325, %v3429
    %v3431 = vpop.f32.mrf.mxu0
    %v3432 = vadd.f32 %v329, %v3431
    %3433 = vdwg.mxu0
    %3434 = vmatprep.subr.mxu0 0.0
    %3435 = vmatpush1.msra.mxu0 0.0
    %3436 = vmatprep.subr.mxu0 0.0
    %3437 = vmatpush1.msra.mxu0 0.0
    %3438 = vmatprep.subr.mxu0 0.0
    %3439 = vmatpush1.msra.mxu0 0.0
    %3440 = vmatprep.subr.mxu0 0.0
    %3441 = vmatpush1.msra.mxu0 0.0
    %3442 = vmatprep.subr.mxu0 0.0
    %3443 = vmatpush1.msra.mxu0 0.0
    %3444 = vmatprep.subr.mxu0 0.0
    %3445 = vmatpush1.msra.mxu0 0.0
    %3446 = vmatprep.subr.mxu0 0.0
    %3447 = vmatpush1.msra.mxu0 0.0
    %3448 = vmatprep.subr.mxu0 0.0
    %3449 = vmatpush1.msra.mxu0 0.0
    %3450 = vmatprep.subr.mxu0 0.0
    %3451 = vmatpush1.msra.mxu0 0.0
    %3452 = vmatprep.subr.mxu0 0.0
    %3453 = vmatpush1.msra.mxu0 0.0
    %3454 = vmatprep.subr.mxu0 0.0
    %3455 = vmatpush1.msra.mxu0 0.0
    %3456 = vmatprep.subr.mxu0 0.0
    %3457 = vmatpush1.msra.mxu0 0.0
    %3458 = vmatprep.subr.mxu0 %v205
    %3459 = vmatpush1.msra.mxu0 %v204
    %3460 = vmatprep.subr.mxu0 %v201
    %3461 = vmatpush1.msra.mxu0 %v200
    %3462 = vmatprep.subr.mxu0 %v197
    %3463 = vmatpush1.msra.mxu0 %v196
    %3464 = vmatprep.subr.mxu0 %v193
    %3465 = vmatpush1.msra.mxu0 %v192
    %3466 = vmatprep.subr.mxu0 0.0
    %3467 = vmatpush2.msra.mxu0 0.0
    %3468 = vmatprep.subr.mxu0 0.0
    %3469 = vmatpush2.msra.mxu0 0.0
    %3470 = vmatprep.subr.mxu0 0.0
    %3471 = vmatpush2.msra.mxu0 0.0
    %3472 = vmatprep.subr.mxu0 0.0
    %3473 = vmatpush2.msra.mxu0 0.0
    %3474 = vmatprep.subr.mxu0 0.0
    %3475 = vmatpush2.msra.mxu0 0.0
    %3476 = vmatprep.subr.mxu0 0.0
    %3477 = vmatpush2.msra.mxu0 0.0
    %3478 = vmatprep.subr.mxu0 0.0
    %3479 = vmatpush2.msra.mxu0 0.0
    %3480 = vmatprep.subr.mxu0 0.0
    %3481 = vmatpush2.msra.mxu0 0.0
    %3482 = vmatprep.subr.mxu0 0.0
    %3483 = vmatpush2.msra.mxu0 0.0
    %3484 = vmatprep.subr.mxu0 0.0
    %3485 = vmatpush2.msra.mxu0 0.0
    %3486 = vmatprep.subr.mxu0 0.0
    %3487 = vmatpush2.msra.mxu0 0.0
    %3488 = vmatprep.subr.mxu0 0.0
    %3489 = vmatpush2.msra.mxu0 0.0
    %3490 = vmatprep.subr.mxu0 0.0
    %3491 = vmatpush2.msra.mxu0 0.0
    %3492 = vmatprep.subr.mxu0 0.0
    %3493 = vmatpush2.msra.mxu0 0.0
    %3494 = vmatprep.subr.mxu0 0.0
    %3495 = vmatpush2.msra.mxu0 0.0
    %3496 = vmatprep.subr.mxu0 0.0
    %3497 = vmatpush2.msra.mxu0 0.0
    %3498 = vmatprep.mubr.f32.mxu0 0.0
    %3499 = vmatmul.mubr.f32.gmra.mxu0 %v3361
    %v3500 = vpop.f32.mrf.mxu0
    %v3501 = vadd.f32 %v333, %v3500
    %v3502 = vpop.f32.mrf.mxu0
    %v3503 = vadd.f32 %v337, %v3502
    %3504 = vdwg.mxu0
    %v3507 = vunpack.c.l.s4 1966171168
    %v3508 = vunpack.c.0.s8 %v3507
    %v3509 = vlaneseq
    %v3510 = vshrl.u32 %v3509, 7
    %v3511 = vsub.s32 %v3508, %v3510
    %v3512 = vrot.slane %v3430, %v3511
    %v3513 = vcombine.high %v3512, %v3512
    %v3515 = vunpack.c.l.s4 1966171168
    %v3516 = vunpack.c.0.s8 %v3515
    %v3517 = vlaneseq
    %v3518 = vshrl.u32 %v3517, 7
    %v3519 = vsub.s32 %v3516, %v3518
    %v3520 = vrot.slane %v3512, %v3519
    %v3522 = vunpack.c.l.s4 1966171168
    %v3523 = vunpack.c.0.s8 %v3522
    %v3524 = vlaneseq
    %v3525 = vshrl.u32 %v3524, 7
    %v3526 = vsub.s32 %v3523, %v3525
    %v3527 = vrot.slane %v3513, %v3526
    %v3528 = vlaneseq
    %v3529 = vshrl.u32 %v3528, 7
    %v3530 = vsub.s32 0, %v3529
    %v3531 = vrot.slane %v3520, %v3530
    %v3532 = vlaneseq
    %v3533 = vshrl.u32 %v3532, 7
    %v3534 = vsub.s32 0, %v3533
    %v3535 = vrot.slane %v3527, %v3534
    %v3538 = vadd.f32 %v311, %v3531
    %v3539 = vadd.f32 %v312, %v3535
    %v3540 = vtanh.pop %v3538
    %v3541 = vtanh.pop %v3539
    %v3542 = vmul.f32 %v3540, %v318
    %v3543 = vmul.f32 %v3541, %v318
    %v3544 = vsel %vm222, %v3542, 0.0
    %3545 = vadd.xlane.f32.xlu0 %v3544
    %v3546 = vpop.xlane.xlu0 %3545
    %v3547 = vsel %vm222, %v3543, 0.0
    %3548 = vadd.xlane.f32.xlu0 %v3547
    %v3549 = vpop.xlane.xlu0 %3548
    %v3552 = vlaneseq
    %v3553 = vshrl.u32 %v3552, 7
    %v3554 = vsub.s32 %v927, %v3553
    %v3555 = vrot.slane %v3546, %v3554
    %v3556 = vlaneseq
    %v3557 = vshrl.u32 %v3556, 7
    %v3558 = vsub.s32 %v927, %v3557
    %v3559 = vrot.slane %v3549, %v3558
    %v3560 = vsel %vm936, %v3559, %v3555
    %v3562 = vsel %vm939, %v3560, -inf
    %3563 = vmax.xlane.f32.xlu0 %v3562
    %v3564 = vpop.xlane.xlu0 %3563
    %v3566 = vlaneseq
    %v3567 = vshrl.u32 %v3566, 7
    %v3568 = vsub.s32 0, %v3567
    %v3569 = vrot.slane %v3564, %v3568
    %v3570 = vlaneseq
    %v3571 = vshrl.u32 %v3570, 7
    %v3572 = vsub.s32 1, %v3571
    %v3573 = vrot.slane %v3564, %v3572
    %v3576 = vsub.f32 %v3546, %v3569
    %v3577 = vsub.f32 %v3549, %v3573
    %v3578 = vmul.f32 %v3576, 1.442695
    %v3579 = vpow.pop %v3578
    %v3580 = vmul.f32 %v3577, 1.442695
    %v3581 = vpow.pop %v3580
    %3584 = vset.pattern.permute.xlu0 0
    %3585 = vperm.xlu0 %3584, %v3579
    %v3586 = vpop.permute.xlu0 %3585
    %3587 = vset.pattern.permute.xlu0 0
    %3588 = vperm.xlu0 %3587, %v3581
    %v3589 = vpop.permute.xlu0 %3588
    %v3590 = vlaneseq
    %v3591 = vshrl.u32 %v3590, 7
    %v3592 = vsub.s32 %v927, %v3591
    %v3593 = vrot.slane %v3586, %v3592
    %v3594 = vlaneseq
    %v3595 = vshrl.u32 %v3594, 7
    %v3596 = vsub.s32 %v927, %v3595
    %v3597 = vrot.slane %v3589, %v3596
    %v3598 = vsel %vm936, %v3597, %v3593
    %v3600 = vsel %vm939, %v3598, 0.0
    %3601 = vadd.xlane.f32.xlu0 %v3600
    %v3602 = vpop.xlane.xlu0 %3601
    %v3603 = vrcp.pop %v3602
    %v3606 = vmul.f32 %v3586, %v180
    %v3607 = vmul.f32 %v3589, %v181
    %v3608 = vsel %vm222, %v3606, 0.0
    %v3609 = vrot.slane %v3608, 4
    %v3610 = vadd.f32 %v3608, %v3609
    %v3611 = vrot.slane %v3610, 2
    %v3612 = vadd.f32 %v3610, %v3611
    %v3613 = vrot.slane %v3612, 1
    %v3614 = vadd.f32 %v3612, %v3613
    %v3615 = vsel %vm222, %v3607, 0.0
    %v3616 = vrot.slane %v3615, 4
    %v3617 = vadd.f32 %v3615, %v3616
    %v3618 = vrot.slane %v3617, 2
    %v3619 = vadd.f32 %v3617, %v3618
    %v3620 = vrot.slane %v3619, 1
    %v3621 = vadd.f32 %v3619, %v3620
    %v3623 = vrot.slane %v3603, 1
    %v3626 = vmul.f32 %v3614, %v3603
    %v3627 = vmul.f32 %v3621, %v3623
    %v3630 = vrot.slane %v3627, 7
    %v3631 = vsel %vm936, %v3630, %v3626
    %v3632 = vsel %vm222, %v3631, 0
    %3634 = vmatprep.subr.mxu0 0.0
    %3635 = vmatpush1.msra.mxu0 0.0
    %3636 = vmatprep.subr.mxu0 0.0
    %3637 = vmatpush1.msra.mxu0 0.0
    %3638 = vmatprep.subr.mxu0 0.0
    %3639 = vmatpush1.msra.mxu0 0.0
    %3640 = vmatprep.subr.mxu0 0.0
    %3641 = vmatpush1.msra.mxu0 0.0
    %3642 = vmatprep.subr.mxu0 0.0
    %3643 = vmatpush1.msra.mxu0 0.0
    %3644 = vmatprep.subr.mxu0 0.0
    %3645 = vmatpush1.msra.mxu0 0.0
    %3646 = vmatprep.subr.mxu0 0.0
    %3647 = vmatpush1.msra.mxu0 0.0
    %3648 = vmatprep.subr.mxu0 0.0
    %3649 = vmatpush1.msra.mxu0 0.0
    %3650 = vmatprep.subr.mxu0 0.0
    %3651 = vmatpush1.msra.mxu0 0.0
    %3652 = vmatprep.subr.mxu0 0.0
    %3653 = vmatpush1.msra.mxu0 0.0
    %3654 = vmatprep.subr.mxu0 0.0
    %3655 = vmatpush1.msra.mxu0 0.0
    %3656 = vmatprep.subr.mxu0 0.0
    %3657 = vmatpush1.msra.mxu0 0.0
    %3658 = vmatprep.subr.mxu0 %v216
    %3659 = vmatpush1.msra.mxu0 %v215
    %3660 = vmatprep.subr.mxu0 %v213
    %3661 = vmatpush1.msra.mxu0 %v212
    %3662 = vmatprep.subr.mxu0 %v210
    %3663 = vmatpush1.msra.mxu0 %v209
    %3664 = vmatprep.subr.mxu0 %v207
    %3665 = vmatpush1.msra.mxu0 %v206
    %3666 = vmatprep.subr.mxu0 0.0
    %3667 = vmatpush2.msra.mxu0 0.0
    %3668 = vmatprep.subr.mxu0 0.0
    %3669 = vmatpush2.msra.mxu0 0.0
    %3670 = vmatprep.subr.mxu0 0.0
    %3671 = vmatpush2.msra.mxu0 0.0
    %3672 = vmatprep.subr.mxu0 0.0
    %3673 = vmatpush2.msra.mxu0 0.0
    %3674 = vmatprep.subr.mxu0 0.0
    %3675 = vmatpush2.msra.mxu0 0.0
    %3676 = vmatprep.subr.mxu0 0.0
    %3677 = vmatpush2.msra.mxu0 0.0
    %3678 = vmatprep.subr.mxu0 0.0
    %3679 = vmatpush2.msra.mxu0 0.0
    %3680 = vmatprep.subr.mxu0 0.0
    %3681 = vmatpush2.msra.mxu0 0.0
    %3682 = vmatprep.subr.mxu0 0.0
    %3683 = vmatpush2.msra.mxu0 0.0
    %3684 = vmatprep.subr.mxu0 0.0
    %3685 = vmatpush2.msra.mxu0 0.0
    %3686 = vmatprep.subr.mxu0 0.0
    %3687 = vmatpush2.msra.mxu0 0.0
    %3688 = vmatprep.subr.mxu0 0.0
    %3689 = vmatpush2.msra.mxu0 0.0
    %3690 = vmatprep.subr.mxu0 0.0
    %3691 = vmatpush2.msra.mxu0 0.0
    %3692 = vmatprep.subr.mxu0 0.0
    %3693 = vmatpush2.msra.mxu0 0.0
    %3694 = vmatprep.subr.mxu0 0.0
    %3695 = vmatpush2.msra.mxu0 0.0
    %3696 = vmatprep.subr.mxu0 0.0
    %3697 = vmatpush2.msra.mxu0 0.0
    %3698 = vmatprep.mubr.f32.mxu0 0.0
    %3699 = vmatmul.mubr.f32.gmra.mxu0 %v3632
    %v3700 = vpop.f32.mrf.mxu0
    %v3701 = vadd.f32 %v493, %v3700
    %v3702 = vpop.f32.mrf.mxu0
    %v3703 = vadd.f32 %v495, %v3702
    %3704 = vdwg.mxu0
    %3705 = vmatprep.subr.mxu0 0.0
    %3706 = vmatpush1.msra.mxu0 0.0
    %3707 = vmatprep.subr.mxu0 0.0
    %3708 = vmatpush1.msra.mxu0 0.0
    %3709 = vmatprep.subr.mxu0 0.0
    %3710 = vmatpush1.msra.mxu0 0.0
    %3711 = vmatprep.subr.mxu0 0.0
    %3712 = vmatpush1.msra.mxu0 0.0
    %3713 = vmatprep.subr.mxu0 0.0
    %3714 = vmatpush1.msra.mxu0 0.0
    %3715 = vmatprep.subr.mxu0 0.0
    %3716 = vmatpush1.msra.mxu0 0.0
    %3717 = vmatprep.subr.mxu0 0.0
    %3718 = vmatpush1.msra.mxu0 0.0
    %3719 = vmatprep.subr.mxu0 0.0
    %3720 = vmatpush1.msra.mxu0 0.0
    %3721 = vmatprep.subr.mxu0 0.0
    %3722 = vmatpush1.msra.mxu0 0.0
    %3723 = vmatprep.subr.mxu0 0.0
    %3724 = vmatpush1.msra.mxu0 0.0
    %3725 = vmatprep.subr.mxu0 0.0
    %3726 = vmatpush1.msra.mxu0 0.0
    %3727 = vmatprep.subr.mxu0 0.0
    %3728 = vmatpush1.msra.mxu0 0.0
    %3729 = vmatprep.subr.mxu0 0.0
    %3730 = vmatpush1.msra.mxu0 %v217
    %3731 = vmatprep.subr.mxu0 0.0
    %3732 = vmatpush1.msra.mxu0 %v214
    %3733 = vmatprep.subr.mxu0 0.0
    %3734 = vmatpush1.msra.mxu0 %v211
    %3735 = vmatprep.subr.mxu0 0.0
    %3736 = vmatpush1.msra.mxu0 %v208
    %3737 = vmatprep.subr.mxu0 0.0
    %3738 = vmatpush2.msra.mxu0 0.0
    %3739 = vmatprep.subr.mxu0 0.0
    %3740 = vmatpush2.msra.mxu0 0.0
    %3741 = vmatprep.subr.mxu0 0.0
    %3742 = vmatpush2.msra.mxu0 0.0
    %3743 = vmatprep.subr.mxu0 0.0
    %3744 = vmatpush2.msra.mxu0 0.0
    %3745 = vmatprep.subr.mxu0 0.0
    %3746 = vmatpush2.msra.mxu0 0.0
    %3747 = vmatprep.subr.mxu0 0.0
    %3748 = vmatpush2.msra.mxu0 0.0
    %3749 = vmatprep.subr.mxu0 0.0
    %3750 = vmatpush2.msra.mxu0 0.0
    %3751 = vmatprep.subr.mxu0 0.0
    %3752 = vmatpush2.msra.mxu0 0.0
    %3753 = vmatprep.subr.mxu0 0.0
    %3754 = vmatpush2.msra.mxu0 0.0
    %3755 = vmatprep.subr.mxu0 0.0
    %3756 = vmatpush2.msra.mxu0 0.0
    %3757 = vmatprep.subr.mxu0 0.0
    %3758 = vmatpush2.msra.mxu0 0.0
    %3759 = vmatprep.subr.mxu0 0.0
    %3760 = vmatpush2.msra.mxu0 0.0
    %3761 = vmatprep.subr.mxu0 0.0
    %3762 = vmatpush2.msra.mxu0 0.0
    %3763 = vmatprep.subr.mxu0 0.0
    %3764 = vmatpush2.msra.mxu0 0.0
    %3765 = vmatprep.subr.mxu0 0.0
    %3766 = vmatpush2.msra.mxu0 0.0
    %3767 = vmatprep.subr.mxu0 0.0
    %3768 = vmatpush2.msra.mxu0 0.0
    %3769 = vmatprep.mubr.f32.mxu0 0.0
    %3770 = vmatmul.mubr.f32.gmra.mxu0 %v3632
    %v3771 = vpop.f32.mrf.mxu0
    %v3772 = vadd.f32 %v600, %v3771
    %v3773 = vpop.f32.mrf.mxu0
    %3774 = vdwg.mxu0
    %v3775 = vadd.f32 %v3701, %v3432
    %v3776 = vxor.u32 %v3775, 2147483648
    %v3777 = vmul.f32 %v3776, 1.442695
    %v3778 = vpow.pop %v3777
    %v3779 = vadd.f32 %v3778, 1.0
    %v3780 = vrcp.pop %v3779
    %v3781 = vmul.f32 1.0, %v3780
    %v3782 = vadd.f32 %v3703, %v3501
    %v3783 = vxor.u32 %v3782, 2147483648
    %v3784 = vmul.f32 %v3783, 1.442695
    %v3785 = vpow.pop %v3784
    %v3786 = vadd.f32 %v3785, 1.0
    %v3787 = vrcp.pop %v3786
    %v3788 = vmul.f32 1.0, %v3787
    %v3789 = vmul.f32 %v3781, %v3503
    %v3790 = vadd.f32 %v3772, %v3789
    %v3791 = vtanh.pop %v3790
    %v3792 = vsub.f32 1.0, %v3788
    %v3793 = vmul.f32 %v3792, %v3791
    %v3794 = vmul.f32 %v3788, %v3358
    %v3795 = vadd.f32 %v3793, %v3794
    %3796 = vst.msk [vmem:[#allocation2 + $0x38] sm:$0x3] %vm732, %v3795
    %v3798 = vsel %vm222, %v3795, 0
    %3800 = vmatprep.subr.mxu0 0.0
    %3801 = vmatpush1.msra.mxu0 0.0
    %3802 = vmatprep.subr.mxu0 0.0
    %3803 = vmatpush1.msra.mxu0 0.0
    %3804 = vmatprep.subr.mxu0 0.0
    %3805 = vmatpush1.msra.mxu0 0.0
    %3806 = vmatprep.subr.mxu0 0.0
    %3807 = vmatpush1.msra.mxu0 0.0
    %3808 = vmatprep.subr.mxu0 0.0
    %3809 = vmatpush1.msra.mxu0 0.0
    %3810 = vmatprep.subr.mxu0 0.0
    %3811 = vmatpush1.msra.mxu0 0.0
    %3812 = vmatprep.subr.mxu0 0.0
    %3813 = vmatpush1.msra.mxu0 0.0
    %3814 = vmatprep.subr.mxu0 0.0
    %3815 = vmatpush1.msra.mxu0 0.0
    %3816 = vmatprep.subr.mxu0 0.0
    %3817 = vmatpush1.msra.mxu0 0.0
    %3818 = vmatprep.subr.mxu0 0.0
    %3819 = vmatpush1.msra.mxu0 0.0
    %3820 = vmatprep.subr.mxu0 0.0
    %3821 = vmatpush1.msra.mxu0 0.0
    %3822 = vmatprep.subr.mxu0 0.0
    %3823 = vmatpush1.msra.mxu0 0.0
    %3824 = vmatprep.subr.mxu0 %v203
    %3825 = vmatpush1.msra.mxu0 %v202
    %3826 = vmatprep.subr.mxu0 %v199
    %3827 = vmatpush1.msra.mxu0 %v198
    %3828 = vmatprep.subr.mxu0 %v195
    %3829 = vmatpush1.msra.mxu0 %v194
    %3830 = vmatprep.subr.mxu0 %v191
    %3831 = vmatpush1.msra.mxu0 %v190
    %3832 = vmatprep.subr.mxu0 0.0
    %3833 = vmatpush2.msra.mxu0 0.0
    %3834 = vmatprep.subr.mxu0 0.0
    %3835 = vmatpush2.msra.mxu0 0.0
    %3836 = vmatprep.subr.mxu0 0.0
    %3837 = vmatpush2.msra.mxu0 0.0
    %3838 = vmatprep.subr.mxu0 0.0
    %3839 = vmatpush2.msra.mxu0 0.0
    %3840 = vmatprep.subr.mxu0 0.0
    %3841 = vmatpush2.msra.mxu0 0.0
    %3842 = vmatprep.subr.mxu0 0.0
    %3843 = vmatpush2.msra.mxu0 0.0
    %3844 = vmatprep.subr.mxu0 0.0
    %3845 = vmatpush2.msra.mxu0 0.0
    %3846 = vmatprep.subr.mxu0 0.0
    %3847 = vmatpush2.msra.mxu0 0.0
    %3848 = vmatprep.subr.mxu0 0.0
    %3849 = vmatpush2.msra.mxu0 0.0
    %3850 = vmatprep.subr.mxu0 0.0
    %3851 = vmatpush2.msra.mxu0 0.0
    %3852 = vmatprep.subr.mxu0 0.0
    %3853 = vmatpush2.msra.mxu0 0.0
    %3854 = vmatprep.subr.mxu0 0.0
    %3855 = vmatpush2.msra.mxu0 0.0
    %3856 = vmatprep.subr.mxu0 0.0
    %3857 = vmatpush2.msra.mxu0 0.0
    %3858 = vmatprep.subr.mxu0 0.0
    %3859 = vmatpush2.msra.mxu0 0.0
    %3860 = vmatprep.subr.mxu0 0.0
    %3861 = vmatpush2.msra.mxu0 0.0
    %3862 = vmatprep.subr.mxu0 0.0
    %3863 = vmatpush2.msra.mxu0 0.0
    %3864 = vmatprep.mubr.f32.mxu0 0.0
    %3865 = vmatmul.mubr.f32.gmra.mxu0 %v3798
    %v3866 = vpop.f32.mrf.mxu0
    %v3867 = vadd.f32 %v325, %v3866
    %v3868 = vpop.f32.mrf.mxu0
    %v3869 = vadd.f32 %v329, %v3868
    %3870 = vdwg.mxu0
    %3871 = vmatprep.subr.mxu0 0.0
    %3872 = vmatpush1.msra.mxu0 0.0
    %3873 = vmatprep.subr.mxu0 0.0
    %3874 = vmatpush1.msra.mxu0 0.0
    %3875 = vmatprep.subr.mxu0 0.0
    %3876 = vmatpush1.msra.mxu0 0.0
    %3877 = vmatprep.subr.mxu0 0.0
    %3878 = vmatpush1.msra.mxu0 0.0
    %3879 = vmatprep.subr.mxu0 0.0
    %3880 = vmatpush1.msra.mxu0 0.0
    %3881 = vmatprep.subr.mxu0 0.0
    %3882 = vmatpush1.msra.mxu0 0.0
    %3883 = vmatprep.subr.mxu0 0.0
    %3884 = vmatpush1.msra.mxu0 0.0
    %3885 = vmatprep.subr.mxu0 0.0
    %3886 = vmatpush1.msra.mxu0 0.0
    %3887 = vmatprep.subr.mxu0 0.0
    %3888 = vmatpush1.msra.mxu0 0.0
    %3889 = vmatprep.subr.mxu0 0.0
    %3890 = vmatpush1.msra.mxu0 0.0
    %3891 = vmatprep.subr.mxu0 0.0
    %3892 = vmatpush1.msra.mxu0 0.0
    %3893 = vmatprep.subr.mxu0 0.0
    %3894 = vmatpush1.msra.mxu0 0.0
    %3895 = vmatprep.subr.mxu0 %v205
    %3896 = vmatpush1.msra.mxu0 %v204
    %3897 = vmatprep.subr.mxu0 %v201
    %3898 = vmatpush1.msra.mxu0 %v200
    %3899 = vmatprep.subr.mxu0 %v197
    %3900 = vmatpush1.msra.mxu0 %v196
    %3901 = vmatprep.subr.mxu0 %v193
    %3902 = vmatpush1.msra.mxu0 %v192
    %3903 = vmatprep.subr.mxu0 0.0
    %3904 = vmatpush2.msra.mxu0 0.0
    %3905 = vmatprep.subr.mxu0 0.0
    %3906 = vmatpush2.msra.mxu0 0.0
    %3907 = vmatprep.subr.mxu0 0.0
    %3908 = vmatpush2.msra.mxu0 0.0
    %3909 = vmatprep.subr.mxu0 0.0
    %3910 = vmatpush2.msra.mxu0 0.0
    %3911 = vmatprep.subr.mxu0 0.0
    %3912 = vmatpush2.msra.mxu0 0.0
    %3913 = vmatprep.subr.mxu0 0.0
    %3914 = vmatpush2.msra.mxu0 0.0
    %3915 = vmatprep.subr.mxu0 0.0
    %3916 = vmatpush2.msra.mxu0 0.0
    %3917 = vmatprep.subr.mxu0 0.0
    %3918 = vmatpush2.msra.mxu0 0.0
    %3919 = vmatprep.subr.mxu0 0.0
    %3920 = vmatpush2.msra.mxu0 0.0
    %3921 = vmatprep.subr.mxu0 0.0
    %3922 = vmatpush2.msra.mxu0 0.0
    %3923 = vmatprep.subr.mxu0 0.0
    %3924 = vmatpush2.msra.mxu0 0.0
    %3925 = vmatprep.subr.mxu0 0.0
    %3926 = vmatpush2.msra.mxu0 0.0
    %3927 = vmatprep.subr.mxu0 0.0
    %3928 = vmatpush2.msra.mxu0 0.0
    %3929 = vmatprep.subr.mxu0 0.0
    %3930 = vmatpush2.msra.mxu0 0.0
    %3931 = vmatprep.subr.mxu0 0.0
    %3932 = vmatpush2.msra.mxu0 0.0
    %3933 = vmatprep.subr.mxu0 0.0
    %3934 = vmatpush2.msra.mxu0 0.0
    %3935 = vmatprep.mubr.f32.mxu0 0.0
    %3936 = vmatmul.mubr.f32.gmra.mxu0 %v3798
    %v3937 = vpop.f32.mrf.mxu0
    %v3938 = vadd.f32 %v333, %v3937
    %v3939 = vpop.f32.mrf.mxu0
    %v3940 = vadd.f32 %v337, %v3939
    %3941 = vdwg.mxu0
    %v3944 = vunpack.c.l.s4 1966171168
    %v3945 = vunpack.c.0.s8 %v3944
    %v3946 = vlaneseq
    %v3947 = vshrl.u32 %v3946, 7
    %v3948 = vsub.s32 %v3945, %v3947
    %v3949 = vrot.slane %v3867, %v3948
    %v3950 = vcombine.high %v3949, %v3949
    %v3952 = vunpack.c.l.s4 1966171168
    %v3953 = vunpack.c.0.s8 %v3952
    %v3954 = vlaneseq
    %v3955 = vshrl.u32 %v3954, 7
    %v3956 = vsub.s32 %v3953, %v3955
    %v3957 = vrot.slane %v3949, %v3956
    %v3959 = vunpack.c.l.s4 1966171168
    %v3960 = vunpack.c.0.s8 %v3959
    %v3961 = vlaneseq
    %v3962 = vshrl.u32 %v3961, 7
    %v3963 = vsub.s32 %v3960, %v3962
    %v3964 = vrot.slane %v3950, %v3963
    %v3965 = vlaneseq
    %v3966 = vshrl.u32 %v3965, 7
    %v3967 = vsub.s32 0, %v3966
    %v3968 = vrot.slane %v3957, %v3967
    %v3969 = vlaneseq
    %v3970 = vshrl.u32 %v3969, 7
    %v3971 = vsub.s32 0, %v3970
    %v3972 = vrot.slane %v3964, %v3971
    %v3975 = vadd.f32 %v311, %v3968
    %v3976 = vadd.f32 %v312, %v3972
    %v3977 = vtanh.pop %v3975
    %v3978 = vtanh.pop %v3976
    %v3979 = vmul.f32 %v3977, %v318
    %v3980 = vmul.f32 %v3978, %v318
    %v3981 = vsel %vm222, %v3979, 0.0
    %3982 = vadd.xlane.f32.xlu0 %v3981
    %v3983 = vpop.xlane.xlu0 %3982
    %v3984 = vsel %vm222, %v3980, 0.0
    %3985 = vadd.xlane.f32.xlu0 %v3984
    %v3986 = vpop.xlane.xlu0 %3985
    %v3989 = vlaneseq
    %v3990 = vshrl.u32 %v3989, 7
    %v3991 = vsub.s32 %v927, %v3990
    %v3992 = vrot.slane %v3983, %v3991
    %v3993 = vlaneseq
    %v3994 = vshrl.u32 %v3993, 7
    %v3995 = vsub.s32 %v927, %v3994
    %v3996 = vrot.slane %v3986, %v3995
    %v3997 = vsel %vm936, %v3996, %v3992
    %v3999 = vsel %vm939, %v3997, -inf
    %4000 = vmax.xlane.f32.xlu0 %v3999
    %v4001 = vpop.xlane.xlu0 %4000
    %v4003 = vlaneseq
    %v4004 = vshrl.u32 %v4003, 7
    %v4005 = vsub.s32 0, %v4004
    %v4006 = vrot.slane %v4001, %v4005
    %v4007 = vlaneseq
    %v4008 = vshrl.u32 %v4007, 7
    %v4009 = vsub.s32 1, %v4008
    %v4010 = vrot.slane %v4001, %v4009
    %v4013 = vsub.f32 %v3983, %v4006
    %v4014 = vsub.f32 %v3986, %v4010
    %v4015 = vmul.f32 %v4013, 1.442695
    %v4016 = vpow.pop %v4015
    %v4017 = vmul.f32 %v4014, 1.442695
    %v4018 = vpow.pop %v4017
    %4021 = vset.pattern.permute.xlu0 0
    %4022 = vperm.xlu0 %4021, %v4016
    %v4023 = vpop.permute.xlu0 %4022
    %4024 = vset.pattern.permute.xlu0 0
    %4025 = vperm.xlu0 %4024, %v4018
    %v4026 = vpop.permute.xlu0 %4025
    %v4027 = vlaneseq
    %v4028 = vshrl.u32 %v4027, 7
    %v4029 = vsub.s32 %v927, %v4028
    %v4030 = vrot.slane %v4023, %v4029
    %v4031 = vlaneseq
    %v4032 = vshrl.u32 %v4031, 7
    %v4033 = vsub.s32 %v927, %v4032
    %v4034 = vrot.slane %v4026, %v4033
    %v4035 = vsel %vm936, %v4034, %v4030
    %v4037 = vsel %vm939, %v4035, 0.0
    %4038 = vadd.xlane.f32.xlu0 %v4037
    %v4039 = vpop.xlane.xlu0 %4038
    %v4040 = vrcp.pop %v4039
    %v4043 = vmul.f32 %v4023, %v180
    %v4044 = vmul.f32 %v4026, %v181
    %v4045 = vsel %vm222, %v4043, 0.0
    %v4046 = vrot.slane %v4045, 4
    %v4047 = vadd.f32 %v4045, %v4046
    %v4048 = vrot.slane %v4047, 2
    %v4049 = vadd.f32 %v4047, %v4048
    %v4050 = vrot.slane %v4049, 1
    %v4051 = vadd.f32 %v4049, %v4050
    %v4052 = vsel %vm222, %v4044, 0.0
    %v4053 = vrot.slane %v4052, 4
    %v4054 = vadd.f32 %v4052, %v4053
    %v4055 = vrot.slane %v4054, 2
    %v4056 = vadd.f32 %v4054, %v4055
    %v4057 = vrot.slane %v4056, 1
    %v4058 = vadd.f32 %v4056, %v4057
    %v4060 = vrot.slane %v4040, 1
    %v4063 = vmul.f32 %v4051, %v4040
    %v4064 = vmul.f32 %v4058, %v4060
    %v4067 = vrot.slane %v4064, 7
    %v4068 = vsel %vm936, %v4067, %v4063
    %v4069 = vsel %vm222, %v4068, 0
    %4071 = vmatprep.subr.mxu0 0.0
    %4072 = vmatpush1.msra.mxu0 0.0
    %4073 = vmatprep.subr.mxu0 0.0
    %4074 = vmatpush1.msra.mxu0 0.0
    %4075 = vmatprep.subr.mxu0 0.0
    %4076 = vmatpush1.msra.mxu0 0.0
    %4077 = vmatprep.subr.mxu0 0.0
    %4078 = vmatpush1.msra.mxu0 0.0
    %4079 = vmatprep.subr.mxu0 0.0
    %4080 = vmatpush1.msra.mxu0 0.0
    %4081 = vmatprep.subr.mxu0 0.0
    %4082 = vmatpush1.msra.mxu0 0.0
    %4083 = vmatprep.subr.mxu0 0.0
    %4084 = vmatpush1.msra.mxu0 0.0
    %4085 = vmatprep.subr.mxu0 0.0
    %4086 = vmatpush1.msra.mxu0 0.0
    %4087 = vmatprep.subr.mxu0 0.0
    %4088 = vmatpush1.msra.mxu0 0.0
    %4089 = vmatprep.subr.mxu0 0.0
    %4090 = vmatpush1.msra.mxu0 0.0
    %4091 = vmatprep.subr.mxu0 0.0
    %4092 = vmatpush1.msra.mxu0 0.0
    %4093 = vmatprep.subr.mxu0 0.0
    %4094 = vmatpush1.msra.mxu0 0.0
    %4095 = vmatprep.subr.mxu0 %v216
    %4096 = vmatpush1.msra.mxu0 %v215
    %4097 = vmatprep.subr.mxu0 %v213
    %4098 = vmatpush1.msra.mxu0 %v212
    %4099 = vmatprep.subr.mxu0 %v210
    %4100 = vmatpush1.msra.mxu0 %v209
    %4101 = vmatprep.subr.mxu0 %v207
    %4102 = vmatpush1.msra.mxu0 %v206
    %4103 = vmatprep.subr.mxu0 0.0
    %4104 = vmatpush2.msra.mxu0 0.0
    %4105 = vmatprep.subr.mxu0 0.0
    %4106 = vmatpush2.msra.mxu0 0.0
    %4107 = vmatprep.subr.mxu0 0.0
    %4108 = vmatpush2.msra.mxu0 0.0
    %4109 = vmatprep.subr.mxu0 0.0
    %4110 = vmatpush2.msra.mxu0 0.0
    %4111 = vmatprep.subr.mxu0 0.0
    %4112 = vmatpush2.msra.mxu0 0.0
    %4113 = vmatprep.subr.mxu0 0.0
    %4114 = vmatpush2.msra.mxu0 0.0
    %4115 = vmatprep.subr.mxu0 0.0
    %4116 = vmatpush2.msra.mxu0 0.0
    %4117 = vmatprep.subr.mxu0 0.0
    %4118 = vmatpush2.msra.mxu0 0.0
    %4119 = vmatprep.subr.mxu0 0.0
    %4120 = vmatpush2.msra.mxu0 0.0
    %4121 = vmatprep.subr.mxu0 0.0
    %4122 = vmatpush2.msra.mxu0 0.0
    %4123 = vmatprep.subr.mxu0 0.0
    %4124 = vmatpush2.msra.mxu0 0.0
    %4125 = vmatprep.subr.mxu0 0.0
    %4126 = vmatpush2.msra.mxu0 0.0
    %4127 = vmatprep.subr.mxu0 0.0
    %4128 = vmatpush2.msra.mxu0 0.0
    %4129 = vmatprep.subr.mxu0 0.0
    %4130 = vmatpush2.msra.mxu0 0.0
    %4131 = vmatprep.subr.mxu0 0.0
    %4132 = vmatpush2.msra.mxu0 0.0
    %4133 = vmatprep.subr.mxu0 0.0
    %4134 = vmatpush2.msra.mxu0 0.0
    %4135 = vmatprep.mubr.f32.mxu0 0.0
    %4136 = vmatmul.mubr.f32.gmra.mxu0 %v4069
    %v4137 = vpop.f32.mrf.mxu0
    %v4138 = vadd.f32 %v499, %v4137
    %v4139 = vpop.f32.mrf.mxu0
    %v4140 = vadd.f32 %v501, %v4139
    %4141 = vdwg.mxu0
    %4142 = vmatprep.subr.mxu0 0.0
    %4143 = vmatpush1.msra.mxu0 0.0
    %4144 = vmatprep.subr.mxu0 0.0
    %4145 = vmatpush1.msra.mxu0 0.0
    %4146 = vmatprep.subr.mxu0 0.0
    %4147 = vmatpush1.msra.mxu0 0.0
    %4148 = vmatprep.subr.mxu0 0.0
    %4149 = vmatpush1.msra.mxu0 0.0
    %4150 = vmatprep.subr.mxu0 0.0
    %4151 = vmatpush1.msra.mxu0 0.0
    %4152 = vmatprep.subr.mxu0 0.0
    %4153 = vmatpush1.msra.mxu0 0.0
    %4154 = vmatprep.subr.mxu0 0.0
    %4155 = vmatpush1.msra.mxu0 0.0
    %4156 = vmatprep.subr.mxu0 0.0
    %4157 = vmatpush1.msra.mxu0 0.0
    %4158 = vmatprep.subr.mxu0 0.0
    %4159 = vmatpush1.msra.mxu0 0.0
    %4160 = vmatprep.subr.mxu0 0.0
    %4161 = vmatpush1.msra.mxu0 0.0
    %4162 = vmatprep.subr.mxu0 0.0
    %4163 = vmatpush1.msra.mxu0 0.0
    %4164 = vmatprep.subr.mxu0 0.0
    %4165 = vmatpush1.msra.mxu0 0.0
    %4166 = vmatprep.subr.mxu0 0.0
    %4167 = vmatpush1.msra.mxu0 %v217
    %4168 = vmatprep.subr.mxu0 0.0
    %4169 = vmatpush1.msra.mxu0 %v214
    %4170 = vmatprep.subr.mxu0 0.0
    %4171 = vmatpush1.msra.mxu0 %v211
    %4172 = vmatprep.subr.mxu0 0.0
    %4173 = vmatpush1.msra.mxu0 %v208
    %4174 = vmatprep.subr.mxu0 0.0
    %4175 = vmatpush2.msra.mxu0 0.0
    %4176 = vmatprep.subr.mxu0 0.0
    %4177 = vmatpush2.msra.mxu0 0.0
    %4178 = vmatprep.subr.mxu0 0.0
    %4179 = vmatpush2.msra.mxu0 0.0
    %4180 = vmatprep.subr.mxu0 0.0
    %4181 = vmatpush2.msra.mxu0 0.0
    %4182 = vmatprep.subr.mxu0 0.0
    %4183 = vmatpush2.msra.mxu0 0.0
    %4184 = vmatprep.subr.mxu0 0.0
    %4185 = vmatpush2.msra.mxu0 0.0
    %4186 = vmatprep.subr.mxu0 0.0
    %4187 = vmatpush2.msra.mxu0 0.0
    %4188 = vmatprep.subr.mxu0 0.0
    %4189 = vmatpush2.msra.mxu0 0.0
    %4190 = vmatprep.subr.mxu0 0.0
    %4191 = vmatpush2.msra.mxu0 0.0
    %4192 = vmatprep.subr.mxu0 0.0
    %4193 = vmatpush2.msra.mxu0 0.0
    %4194 = vmatprep.subr.mxu0 0.0
    %4195 = vmatpush2.msra.mxu0 0.0
    %4196 = vmatprep.subr.mxu0 0.0
    %4197 = vmatpush2.msra.mxu0 0.0
    %4198 = vmatprep.subr.mxu0 0.0
    %4199 = vmatpush2.msra.mxu0 0.0
    %4200 = vmatprep.subr.mxu0 0.0
    %4201 = vmatpush2.msra.mxu0 0.0
    %4202 = vmatprep.subr.mxu0 0.0
    %4203 = vmatpush2.msra.mxu0 0.0
    %4204 = vmatprep.subr.mxu0 0.0
    %4205 = vmatpush2.msra.mxu0 0.0
    %4206 = vmatprep.mubr.f32.mxu0 0.0
    %4207 = vmatmul.mubr.f32.gmra.mxu0 %v4069
    %v4208 = vpop.f32.mrf.mxu0
    %v4209 = vadd.f32 %v605, %v4208
    %v4210 = vpop.f32.mrf.mxu0
    %4211 = vdwg.mxu0
    %v4212 = vadd.f32 %v4138, %v3869
    %v4213 = vxor.u32 %v4212, 2147483648
    %v4214 = vmul.f32 %v4213, 1.442695
    %v4215 = vpow.pop %v4214
    %v4216 = vadd.f32 %v4215, 1.0
    %v4217 = vrcp.pop %v4216
    %v4218 = vmul.f32 1.0, %v4217
    %v4219 = vadd.f32 %v4140, %v3938
    %v4220 = vxor.u32 %v4219, 2147483648
    %v4221 = vmul.f32 %v4220, 1.442695
    %v4222 = vpow.pop %v4221
    %v4223 = vadd.f32 %v4222, 1.0
    %v4224 = vrcp.pop %v4223
    %v4225 = vmul.f32 1.0, %v4224
    %v4226 = vmul.f32 %v4218, %v3940
    %v4227 = vadd.f32 %v4209, %v4226
    %v4228 = vtanh.pop %v4227
    %v4229 = vsub.f32 1.0, %v4225
    %v4230 = vmul.f32 %v4229, %v4228
    %v4231 = vmul.f32 %v4225, %v3795
    %v4232 = vadd.f32 %v4230, %v4231
    %4233 = vst.msk [vmem:[#allocation2 + $0x40] sm:$0x3] %vm732, %v4232
    %v4234 = vld [vmem:[#allocation2] sm:$0xff]
    %v4235 = vld [vmem:[#allocation2 + $0x8] sm:$0xff]
    %v4236 = vld [vmem:[#allocation2 + $0x10] sm:$0xff]
    %v4237 = vld [vmem:[#allocation2 + $0x18] sm:$0xff]
    %v4238 = vld [vmem:[#allocation2 + $0x20] sm:$0xff]
    %v4239 = vld [vmem:[#allocation2 + $0x28] sm:$0xff]
    %v4240 = vld [vmem:[#allocation2 + $0x30] sm:$0xff]
    %v4241 = vld [vmem:[#allocation2 + $0x38] sm:$0xff]
    %v4242 = vld [vmem:[#allocation2 + $0x40] sm:$0xff]
    %v4243 = vld [vmem:[#allocation15] sm:$0xff]
    %v4244 = vld [vmem:[#allocation15 + $0x8] sm:$0xff]
    %v4245 = vld [vmem:[#allocation15 + $0x10] sm:$0xff]
    %v4246 = vld [vmem:[#allocation15 + $0x18] sm:$0xff]
    %v4247 = vld [vmem:[#allocation17] sm:$0xff]
    %v4248 = vld [vmem:[#allocation17 + $0x8] sm:$0xff]
    %v4249 = vld [vmem:[#allocation17 + $0x10] sm:$0xff]
    %v4250 = vld [vmem:[#allocation17 + $0x18] sm:$0xff]
    %v4252 = vsel %vm222, %v4234, 0
    %v4255 = vsel %vm222, %v4235, 0
    %v4258 = vsel %vm222, %v4236, 0
    %v4261 = vsel %vm222, %v4237, 0
    %v4264 = vsel %vm222, %v4238, 0
    %v4267 = vsel %vm222, %v4239, 0
    %v4270 = vsel %vm222, %v4240, 0
    %v4273 = vsel %vm222, %v4241, 0
    %4275 = vmatprep.subr.mxu0 0.0
    %4276 = vmatpush1.msra.mxu0 0.0
    %4277 = vmatprep.subr.mxu0 0.0
    %4278 = vmatpush1.msra.mxu0 0.0
    %4279 = vmatprep.subr.mxu0 0.0
    %4280 = vmatpush1.msra.mxu0 0.0
    %4281 = vmatprep.subr.mxu0 0.0
    %4282 = vmatpush1.msra.mxu0 0.0
    %4283 = vmatprep.subr.mxu0 0.0
    %4284 = vmatpush1.msra.mxu0 0.0
    %4285 = vmatprep.subr.mxu0 0.0
    %4286 = vmatpush1.msra.mxu0 0.0
    %4287 = vmatprep.subr.mxu0 0.0
    %4288 = vmatpush1.msra.mxu0 0.0
    %4289 = vmatprep.subr.mxu0 0.0
    %4290 = vmatpush1.msra.mxu0 0.0
    %4291 = vmatprep.subr.mxu0 0.0
    %4292 = vmatpush1.msra.mxu0 0.0
    %4293 = vmatprep.subr.mxu0 0.0
    %4294 = vmatpush1.msra.mxu0 0.0
    %4295 = vmatprep.subr.mxu0 0.0
    %4296 = vmatpush1.msra.mxu0 0.0
    %4297 = vmatprep.subr.mxu0 0.0
    %4298 = vmatpush1.msra.mxu0 0.0
    %4299 = vmatprep.subr.mxu0 0.0
    %4300 = vmatpush1.msra.mxu0 %v4250
    %4301 = vmatprep.subr.mxu0 0.0
    %4302 = vmatpush1.msra.mxu0 %v4249
    %4303 = vmatprep.subr.mxu0 0.0
    %4304 = vmatpush1.msra.mxu0 %v4248
    %4305 = vmatprep.subr.mxu0 0.0
    %4306 = vmatpush1.msra.mxu0 %v4247
    %4307 = vmatprep.subr.mxu0 0.0
    %4308 = vmatpush2.msra.mxu0 0.0
    %4309 = vmatprep.subr.mxu0 0.0
    %4310 = vmatpush2.msra.mxu0 0.0
    %4311 = vmatprep.subr.mxu0 0.0
    %4312 = vmatpush2.msra.mxu0 0.0
    %4313 = vmatprep.subr.mxu0 0.0
    %4314 = vmatpush2.msra.mxu0 0.0
    %4315 = vmatprep.subr.mxu0 0.0
    %4316 = vmatpush2.msra.mxu0 0.0
    %4317 = vmatprep.subr.mxu0 0.0
    %4318 = vmatpush2.msra.mxu0 0.0
    %4319 = vmatprep.subr.mxu0 0.0
    %4320 = vmatpush2.msra.mxu0 0.0
    %4321 = vmatprep.subr.mxu0 0.0
    %4322 = vmatpush2.msra.mxu0 0.0
    %4323 = vmatprep.subr.mxu0 0.0
    %4324 = vmatpush2.msra.mxu0 0.0
    %4325 = vmatprep.subr.mxu0 0.0
    %4326 = vmatpush2.msra.mxu0 0.0
    %4327 = vmatprep.subr.mxu0 0.0
    %4328 = vmatpush2.msra.mxu0 0.0
    %4329 = vmatprep.subr.mxu0 0.0
    %4330 = vmatpush2.msra.mxu0 0.0
    %4331 = vmatprep.subr.mxu0 0.0
    %4332 = vmatpush2.msra.mxu0 0.0
    %4333 = vmatprep.subr.mxu0 0.0
    %4334 = vmatpush2.msra.mxu0 0.0
    %4335 = vmatprep.subr.mxu0 0.0
    %4336 = vmatpush2.msra.mxu0 0.0
    %4337 = vmatprep.subr.mxu0 0.0
    %4338 = vmatpush2.msra.mxu0 0.0
    %4339 = vmatprep.mubr.f32.mxu0 0.0
    %4340 = vmatmul.mubr.f32.gmra.mxu0 %v4252
    %v4341 = vpop.f32.mrf.mxu0
    %v4342 = vadd.f32 0.0, %v4341
    %v4343 = vpop.f32.mrf.mxu0
    %4344 = vmatprep.mubr.f32.mxu0 0.0
    %4345 = vmatmul.mubr.f32.gmra.mxu0 %v4255
    %v4346 = vpop.f32.mrf.mxu0
    %v4347 = vadd.f32 0.0, %v4346
    %v4348 = vpop.f32.mrf.mxu0
    %4349 = vmatprep.mubr.f32.mxu0 0.0
    %4350 = vmatmul.mubr.f32.gmra.mxu0 %v4258
    %v4351 = vpop.f32.mrf.mxu0
    %v4352 = vadd.f32 0.0, %v4351
    %v4353 = vpop.f32.mrf.mxu0
    %4354 = vmatprep.mubr.f32.mxu0 0.0
    %4355 = vmatmul.mubr.f32.gmra.mxu0 %v4261
    %v4356 = vpop.f32.mrf.mxu0
    %v4357 = vadd.f32 0.0, %v4356
    %v4358 = vpop.f32.mrf.mxu0
    %4359 = vmatprep.mubr.f32.mxu0 0.0
    %4360 = vmatmul.mubr.f32.gmra.mxu0 %v4264
    %v4361 = vpop.f32.mrf.mxu0
    %v4362 = vadd.f32 0.0, %v4361
    %v4363 = vpop.f32.mrf.mxu0
    %4364 = vmatprep.mubr.f32.mxu0 0.0
    %4365 = vmatmul.mubr.f32.gmra.mxu0 %v4267
    %v4366 = vpop.f32.mrf.mxu0
    %v4367 = vadd.f32 0.0, %v4366
    %v4368 = vpop.f32.mrf.mxu0
    %4369 = vmatprep.mubr.f32.mxu0 0.0
    %4370 = vmatmul.mubr.f32.gmra.mxu0 %v4270
    %v4371 = vpop.f32.mrf.mxu0
    %v4372 = vadd.f32 0.0, %v4371
    %v4373 = vpop.f32.mrf.mxu0
    %4374 = vmatprep.mubr.f32.mxu0 0.0
    %4375 = vmatmul.mubr.f32.gmra.mxu0 %v4273
    %v4376 = vpop.f32.mrf.mxu0
    %v4377 = vadd.f32 0.0, %v4376
    %v4378 = vpop.f32.mrf.mxu0
    %4379 = vdwg.mxu0
    %v4381 = vsel %vm222, %v4242, 0
    %4383 = vmatprep.subr.mxu0 0.0
    %4384 = vmatpush1.msra.mxu0 0.0
    %4385 = vmatprep.subr.mxu0 0.0
    %4386 = vmatpush1.msra.mxu0 0.0
    %4387 = vmatprep.subr.mxu0 0.0
    %4388 = vmatpush1.msra.mxu0 0.0
    %4389 = vmatprep.subr.mxu0 0.0
    %4390 = vmatpush1.msra.mxu0 0.0
    %4391 = vmatprep.subr.mxu0 0.0
    %4392 = vmatpush1.msra.mxu0 0.0
    %4393 = vmatprep.subr.mxu0 0.0
    %4394 = vmatpush1.msra.mxu0 0.0
    %4395 = vmatprep.subr.mxu0 0.0
    %4396 = vmatpush1.msra.mxu0 0.0
    %4397 = vmatprep.subr.mxu0 0.0
    %4398 = vmatpush1.msra.mxu0 0.0
    %4399 = vmatprep.subr.mxu0 0.0
    %4400 = vmatpush1.msra.mxu0 0.0
    %4401 = vmatprep.subr.mxu0 0.0
    %4402 = vmatpush1.msra.mxu0 0.0
    %4403 = vmatprep.subr.mxu0 0.0
    %4404 = vmatpush1.msra.mxu0 0.0
    %4405 = vmatprep.subr.mxu0 0.0
    %4406 = vmatpush1.msra.mxu0 0.0
    %4407 = vmatprep.subr.mxu0 0.0
    %4408 = vmatpush1.msra.mxu0 %v4246
    %4409 = vmatprep.subr.mxu0 0.0
    %4410 = vmatpush1.msra.mxu0 %v4245
    %4411 = vmatprep.subr.mxu0 0.0
    %4412 = vmatpush1.msra.mxu0 %v4244
    %4413 = vmatprep.subr.mxu0 0.0
    %4414 = vmatpush1.msra.mxu0 %v4243
    %4415 = vmatprep.subr.mxu0 0.0
    %4416 = vmatpush2.msra.mxu0 0.0
    %4417 = vmatprep.subr.mxu0 0.0
    %4418 = vmatpush2.msra.mxu0 0.0
    %4419 = vmatprep.subr.mxu0 0.0
    %4420 = vmatpush2.msra.mxu0 0.0
    %4421 = vmatprep.subr.mxu0 0.0
    %4422 = vmatpush2.msra.mxu0 0.0
    %4423 = vmatprep.subr.mxu0 0.0
    %4424 = vmatpush2.msra.mxu0 0.0
    %4425 = vmatprep.subr.mxu0 0.0
    %4426 = vmatpush2.msra.mxu0 0.0
    %4427 = vmatprep.subr.mxu0 0.0
    %4428 = vmatpush2.msra.mxu0 0.0
    %4429 = vmatprep.subr.mxu0 0.0
    %4430 = vmatpush2.msra.mxu0 0.0
    %4431 = vmatprep.subr.mxu0 0.0
    %4432 = vmatpush2.msra.mxu0 0.0
    %4433 = vmatprep.subr.mxu0 0.0
    %4434 = vmatpush2.msra.mxu0 0.0
    %4435 = vmatprep.subr.mxu0 0.0
    %4436 = vmatpush2.msra.mxu0 0.0
    %4437 = vmatprep.subr.mxu0 0.0
    %4438 = vmatpush2.msra.mxu0 0.0
    %4439 = vmatprep.subr.mxu0 0.0
    %4440 = vmatpush2.msra.mxu0 0.0
    %4441 = vmatprep.subr.mxu0 0.0
    %4442 = vmatpush2.msra.mxu0 0.0
    %4443 = vmatprep.subr.mxu0 0.0
    %4444 = vmatpush2.msra.mxu0 0.0
    %4445 = vmatprep.subr.mxu0 0.0
    %4446 = vmatpush2.msra.mxu0 0.0
    %4447 = vmatprep.mubr.f32.mxu0 0.0
    %4448 = vmatmul.mubr.f32.gmra.mxu0 %v4255
    %v4449 = vpop.f32.mrf.mxu0
    %v4450 = vadd.f32 %v4342, %v4449
    %v4451 = vpop.f32.mrf.mxu0
    %4452 = vmatprep.mubr.f32.mxu0 0.0
    %4453 = vmatmul.mubr.f32.gmra.mxu0 %v4258
    %v4454 = vpop.f32.mrf.mxu0
    %v4455 = vadd.f32 %v4347, %v4454
    %v4456 = vpop.f32.mrf.mxu0
    %4457 = vmatprep.mubr.f32.mxu0 0.0
    %4458 = vmatmul.mubr.f32.gmra.mxu0 %v4261
    %v4459 = vpop.f32.mrf.mxu0
    %v4460 = vadd.f32 %v4352, %v4459
    %v4461 = vpop.f32.mrf.mxu0
    %4462 = vmatprep.mubr.f32.mxu0 0.0
    %4463 = vmatmul.mubr.f32.gmra.mxu0 %v4264
    %v4464 = vpop.f32.mrf.mxu0
    %v4465 = vadd.f32 %v4357, %v4464
    %v4466 = vpop.f32.mrf.mxu0
    %4467 = vmatprep.mubr.f32.mxu0 0.0
    %4468 = vmatmul.mubr.f32.gmra.mxu0 %v4267
    %v4469 = vpop.f32.mrf.mxu0
    %v4470 = vadd.f32 %v4362, %v4469
    %v4471 = vpop.f32.mrf.mxu0
    %4472 = vmatprep.mubr.f32.mxu0 0.0
    %4473 = vmatmul.mubr.f32.gmra.mxu0 %v4270
    %v4474 = vpop.f32.mrf.mxu0
    %v4475 = vadd.f32 %v4367, %v4474
    %v4476 = vpop.f32.mrf.mxu0
    %4477 = vmatprep.mubr.f32.mxu0 0.0
    %4478 = vmatmul.mubr.f32.gmra.mxu0 %v4273
    %v4479 = vpop.f32.mrf.mxu0
    %v4480 = vadd.f32 %v4372, %v4479
    %v4481 = vpop.f32.mrf.mxu0
    %4482 = vmatprep.mubr.f32.mxu0 0.0
    %4483 = vmatmul.mubr.f32.gmra.mxu0 %v4381
    %v4484 = vpop.f32.mrf.mxu0
    %v4485 = vadd.f32 %v4377, %v4484
    %v4486 = vpop.f32.mrf.mxu0
    %4487 = vdwg.mxu0
    %v4488 = vadd.f32 %v4450, %v684
    %v4489 = vadd.f32 %v4455, %v689
    %v4490 = vadd.f32 %v4460, %v694
    %v4491 = vadd.f32 %v4465, %v699
    %v4492 = vadd.f32 %v4470, %v704
    %v4493 = vadd.f32 %v4475, %v709
    %v4494 = vadd.f32 %v4480, %v714
    %v4495 = vadd.f32 %v4485, %v719
    %4496 = vmax.xlane.f32.xlu0 %v4488
    %v4497 = vpop.xlane.xlu0 %4496
    %4498 = vmax.xlane.f32.xlu0 %v4489
    %v4499 = vpop.xlane.xlu0 %4498
    %4500 = vmax.xlane.f32.xlu0 %v4490
    %v4501 = vpop.xlane.xlu0 %4500
    %4502 = vmax.xlane.f32.xlu0 %v4491
    %v4503 = vpop.xlane.xlu0 %4502
    %4504 = vmax.xlane.f32.xlu0 %v4492
    %v4505 = vpop.xlane.xlu0 %4504
    %4506 = vmax.xlane.f32.xlu0 %v4493
    %v4507 = vpop.xlane.xlu0 %4506
    %4508 = vmax.xlane.f32.xlu0 %v4494
    %v4509 = vpop.xlane.xlu0 %4508
    %4510 = vmax.xlane.f32.xlu0 %v4495
    %v4511 = vpop.xlane.xlu0 %4510
    %v4512 = vsub.f32 %v4488, %v4497
    %v4513 = vsub.f32 %v4489, %v4499
    %v4514 = vsub.f32 %v4490, %v4501
    %v4515 = vsub.f32 %v4491, %v4503
    %v4516 = vsub.f32 %v4492, %v4505
    %v4517 = vsub.f32 %v4493, %v4507
    %v4518 = vsub.f32 %v4494, %v4509
    %v4519 = vsub.f32 %v4495, %v4511
    %v4520 = vmul.f32 %v4512, 1.442695
    %v4521 = vpow.pop %v4520
    %v4522 = vmul.f32 %v4513, 1.442695
    %v4523 = vpow.pop %v4522
    %v4524 = vmul.f32 %v4514, 1.442695
    %v4525 = vpow.pop %v4524
    %v4526 = vmul.f32 %v4515, 1.442695
    %v4527 = vpow.pop %v4526
    %v4528 = vmul.f32 %v4516, 1.442695
    %v4529 = vpow.pop %v4528
    %v4530 = vmul.f32 %v4517, 1.442695
    %v4531 = vpow.pop %v4530
    %v4532 = vmul.f32 %v4518, 1.442695
    %v4533 = vpow.pop %v4532
    %v4534 = vmul.f32 %v4519, 1.442695
    %v4535 = vpow.pop %v4534
    %4536 = vadd.xlane.f32.xlu0 %v4521
    %v4537 = vpop.xlane.xlu0 %4536
    %4538 = vadd.xlane.f32.xlu0 %v4523
    %v4539 = vpop.xlane.xlu0 %4538
    %4540 = vadd.xlane.f32.xlu0 %v4525
    %v4541 = vpop.xlane.xlu0 %4540
    %4542 = vadd.xlane.f32.xlu0 %v4527
    %v4543 = vpop.xlane.xlu0 %4542
    %4544 = vadd.xlane.f32.xlu0 %v4529
    %v4545 = vpop.xlane.xlu0 %4544
    %4546 = vadd.xlane.f32.xlu0 %v4531
    %v4547 = vpop.xlane.xlu0 %4546
    %4548 = vadd.xlane.f32.xlu0 %v4533
    %v4549 = vpop.xlane.xlu0 %4548
    %4550 = vadd.xlane.f32.xlu0 %v4535
    %v4551 = vpop.xlane.xlu0 %4550
    %v4552 = vlog2.pop %v4537
    %v4553 = vmul.f32 %v4552, 0.6931472
    %v4554 = vlog2.pop %v4539
    %v4555 = vmul.f32 %v4554, 0.6931472
    %v4556 = vlog2.pop %v4541
    %v4557 = vmul.f32 %v4556, 0.6931472
    %v4558 = vlog2.pop %v4543
    %v4559 = vmul.f32 %v4558, 0.6931472
    %v4560 = vlog2.pop %v4545
    %v4561 = vmul.f32 %v4560, 0.6931472
    %v4562 = vlog2.pop %v4547
    %v4563 = vmul.f32 %v4562, 0.6931472
    %v4564 = vlog2.pop %v4549
    %v4565 = vmul.f32 %v4564, 0.6931472
    %v4566 = vlog2.pop %v4551
    %v4567 = vmul.f32 %v4566, 0.6931472
    %v4568 = vadd.f32 %v4553, %v4497
    %v4569 = vadd.f32 %v4555, %v4499
    %v4570 = vadd.f32 %v4557, %v4501
    %v4571 = vadd.f32 %v4559, %v4503
    %v4572 = vadd.f32 %v4561, %v4505
    %v4573 = vadd.f32 %v4563, %v4507
    %v4574 = vadd.f32 %v4565, %v4509
    %v4575 = vadd.f32 %v4567, %v4511
    %v4576 = vsub.f32 %v4488, %v4568
    %v4577 = vsub.f32 %v4489, %v4569
    %v4578 = vsub.f32 %v4490, %v4570
    %v4579 = vsub.f32 %v4491, %v4571
    %v4580 = vsub.f32 %v4492, %v4572
    %v4581 = vsub.f32 %v4493, %v4573
    %v4582 = vsub.f32 %v4494, %v4574
    %v4583 = vsub.f32 %v4495, %v4575
    %4584 = vst [vmem:[#allocation20] sm:$0xff] %v4576
    %4585 = vst [vmem:[#allocation20 + $0x8] sm:$0xff] %v4577
    %4586 = vst [vmem:[#allocation20 + $0x10] sm:$0xff] %v4578
    %4587 = vst [vmem:[#allocation20 + $0x18] sm:$0xff] %v4579
    %4588 = vst [vmem:[#allocation20 + $0x20] sm:$0xff] %v4580
    %4589 = vst [vmem:[#allocation20 + $0x28] sm:$0xff] %v4581
    %4590 = vst [vmem:[#allocation20 + $0x30] sm:$0xff] %v4582
    %4591 = vst [vmem:[#allocation20 + $0x38] sm:$0xff] %v4583
    %4592 = vst.msk [vmem:[#allocation21] sm:$0x3] %vm732, %v4232
    // Predicated region
    $region102: #{tpu_custom_call.1} parent=1 // pred_check
      _
    $region103: #{tpu_custom_call.1} parent=1 // pred_check_branch
      %4594 = sbr.rel (0) target = $region105
    $region104: #{tpu_custom_call.1} parent=1 // pred_region
      %s4596 = ssub.s32 1024, 1024
      %4597 = vsyncadd [#allocation5], %s4596
      %s4598 = sshll.u32 [#allocation20], 4
      %s4599 = int_to_ptr.vmem [resolvable:$true] %s4598
      %4604 = dma.vmem_to_hbm [thread:$0]  %s4599, 1024, %s15, [#allocation5], 128, 128, 8
    $region105: #{tpu_custom_call.1} parent=1 // pred_fallthru
      _
    // Predicated region
    $region106: #{tpu_custom_call.1} parent=1 // pred_check
      _
    $region107: #{tpu_custom_call.1} parent=1 // pred_check_branch
      %4606 = sbr.rel (0) target = $region109
    $region108: #{tpu_custom_call.1} parent=1 // pred_region
      %s4608 = ssub.s32 32, 32
      %4609 = vsyncadd [#allocation22], %s4608
      %s4611 = sshll.u32 [#allocation21], 4
      %s4612 = int_to_ptr.vmem [resolvable:$true] %s4611
      %4614 = dma.vmem_to_hbm [thread:$0]  %s4612, 32, %s16, [#allocation22]
    $region109: #{tpu_custom_call.1} parent=1 // pred_fallthru
      _
    // Predicated region
    $region110: #{tpu_custom_call.1} parent=1 // pred_check
      _
    $region111: #{tpu_custom_call.1} parent=1 // pred_check_branch
      %4616 = sbr.rel (0) target = $region113
    $region112: #{tpu_custom_call.1} parent=1 // pred_region
      %4617 = dma.done [#allocation5], 1024
    $region113: #{tpu_custom_call.1} parent=1 // pred_fallthru
      _
    // Predicated region
    $region114: #{tpu_custom_call.1} parent=1 // pred_check
      _
    $region115: #{tpu_custom_call.1} parent=1 // pred_check_branch
      %4619 = sbr.rel (0) target = $region117
    $region116: #{tpu_custom_call.1} parent=1 // pred_region
      %4620 = dma.done [#allocation22], 32
    $region117: #{tpu_custom_call.1} parent=1 // pred_fallthru
      _
    %4621 = vsyncpa [#allocation4], 1
    %4622 = vsyncpa [#allocation7], 1
    %4623 = vsyncpa [#allocation10], 1
    %4624 = vsyncpa [#allocation13], 1
    %4625 = vsyncpa [#allocation16], 1
    %4626 = vsyncpa [#allocation19], 1
    %4627 = vsyncpa [#allocation5], 1
    %4628 = vsyncpa [#allocation22], 1

</llo_original>
